<compile_context>
chip_gen: v7x
topology: tpu7x:2x2x1
jax: 0.10.0
libtpu: 0.0.40
codegen_flags: <defaults>
</compile_context>

<pallas_src>
import numpy as np

import jax
import jax.numpy as jnp
from jax.experimental import pallas as pl
from jax.experimental.pallas import tpu as pltpu


# ------------------------------ Pallas kernel --------------------------------

def _lenet_fused_kernel(x_ref, m1_ref, b1_ref, g_ref, h_ref, b2_ref,
                        l_ref, w3_ref, b3_ref, w4_ref, b4_ref, o_ref):
    nb = o_ref.shape[0]              # images per batch tile
    rows = x_ref.shape[0]            # nb * 32  (padded-image rows per tile)
    nb10 = l_ref.shape[1]            # nb * 10  (conv2 output rows per tile)
    c1w = h_ref.shape[0] // 5        # 28 * 6   (conv1 output lane width)
    c2w = w3_ref.shape[0] // 5       # 10 * 16  (conv2 output lane width)

    # conv1 (k=5, pad=2) + bias + SiLU.
    # x rows = (n, hh) of the zero-padded 32x32 image, lanes = w (32).
    # The 5 kernel-height taps are row-shifted views of the slab (the shift
    # spill past the tile end only lands in per-image junk rows hh >= 28);
    # kernel-width taps + output channels live in the band matrix M1.
    x = x_ref[...]
    xz = jnp.concatenate(
        [x, jnp.zeros((8, x.shape[1]), jnp.float32)], axis=0)     # (rows+8, 32)
    y1 = b1_ref[...]
    for kh in range(5):
        y1 = y1 + jnp.dot(xz[kh:kh + rows, :],
                          m1_ref[kh * 32:(kh + 1) * 32, :],
                          preferred_element_type=jnp.float32)
    a1 = y1 * jax.nn.sigmoid(y1)                    # (nb*32, 168); hh>=28 junk

    # pool1 (2x2 avg) folded into conv2 (k=5):  Y2 = sum_kh  G_kh @ A1 @ H_kh
    ga = jnp.dot(g_ref[...], a1, preferred_element_type=jnp.float32)
    y2 = b2_ref[...]
    for kh in range(5):
        y2 = y2 + jnp.dot(ga[kh * nb10:(kh + 1) * nb10, :],
                          h_ref[kh * c1w:(kh + 1) * c1w, :],
                          preferred_element_type=jnp.float32)
    a2 = y2 * jax.nn.sigmoid(y2)                               # (nb*10, 160)

    # pool2 (2x2 avg) folded into fc1:  z3 = b3 + sum_i (L_i @ A2) @ W3f_i
    la = jnp.dot(l_ref[...], a2, preferred_element_type=jnp.float32)
    z3 = b3_ref[...]
    for i in range(5):
        z3 = z3 + jnp.dot(la[i * nb:(i + 1) * nb, :],
                          w3_ref[i * c2w:(i + 1) * c2w, :],
                          preferred_element_type=jnp.float32)
    h3 = z3 * jax.nn.sigmoid(z3)                               # (nb, 64)

    # fc2 + squeeze(-1) + 0.5 * x**2 energy head
    z4 = jnp.dot(h3, w4_ref[...],
                 preferred_element_type=jnp.float32) + b4_ref[...]
    o_ref[...] = 0.5 * z4 * z4                                 # (nb, out_dim)


# ------------------------- host-side constant folding ------------------------

def _build_constants(raw, block_n):
    """Fold conv taps, both avg-pools and the flatten permutation into dense
    matrices so the kernel body is pure 2-D matmuls on (w, c)-column slabs."""
    W1 = np.asarray(raw["W1"], np.float32)   # (6, 1, 5, 5)
    b1 = np.asarray(raw["b1"], np.float32)   # (6,)
    W2 = np.asarray(raw["W2"], np.float32)   # (16, 6, 5, 5)
    b2 = np.asarray(raw["b2"], np.float32)   # (16,)
    W3 = np.asarray(raw["W3"], np.float32)   # (64, 400)  torch (c,h,w) flatten
    b3 = np.asarray(raw["b3"], np.float32)   # (64,)
    W4 = np.asarray(raw["W4"], np.float32)   # (out_dim, 64)
    b4 = np.asarray(raw["b4"], np.float32)   # (out_dim,)
    NB = block_n
    C1, C2 = 6, 16
    out_dim = W4.shape[0]

    # conv1 band matrices, one 32-row block per kernel-height tap kh:
    # M1[kh*32 + v, w*6 + co] = W1[co, 0, kh, v - w]  for 0 <= v - w < 5.
    # In-kernel, tap kh multiplies the input slab shifted up by kh rows.
    M1 = np.zeros((5 * 32, 28 * C1), np.float32)
    for kh in range(5):
        for w in range(28):
            for kw in range(5):
                M1[kh * 32 + w + kw, w * C1:(w + 1) * C1] = W1[:, 0, kh, kw]
    b1row = np.tile(b1, 28).reshape(1, 28 * C1)

    # pool1 + conv2 folded:  Y2 = sum_kh G_kh @ A1 @ H_kh
    #   A1 rows = (n, hh) with hh = 0..31 (rows >= 28 are junk, never selected)
    #   G_kh (rows (n,h'), cols (n,hh)): 0.5 * [hh in {2(h'+kh), 2(h'+kh)+1}]
    #   H_kh[v*6+ci, w'*16+co] = 0.5 * W2[co, ci, kh, v//2 - w'] (if valid)
    G = np.zeros((5, NB * 10, NB * 32), np.float32)
    for kh in range(5):
        for n in range(NB):
            for hp in range(10):
                for a in range(2):
                    G[kh, n * 10 + hp, n * 32 + 2 * (hp + kh) + a] = 0.5
    H = np.zeros((5, 28 * C1, 10 * C2), np.float32)
    for kh in range(5):
        for v in range(28):
            for wp in range(10):
                kw = v // 2 - wp
                if 0 <= kw <= 4:
                    H[kh, v * C1:(v + 1) * C1, wp * C2:(wp + 1) * C2] = \
                        0.5 * W2[:, :, kh, kw].T
    Gs = G.reshape(5 * NB * 10, NB * 32)
    Hs = H.reshape(5 * 28 * C1, 10 * C2)
    b2row = np.tile(b2, 10).reshape(1, 10 * C2)

    # pool2 + fc1 folded:  z3 = b3 + sum_i (L_i @ A2) @ W3f_i
    #   L_i[n, (n,h)] = 0.5 * [h in {2i, 2i+1}]
    #   W3f_i[w'*16+co, o] = 0.5 * W3[o, co*25 + i*5 + w'//2]   (torch flatten)
    L = np.zeros((5, NB, NB * 10), np.float32)
    for i in range(5):
        for n in range(NB):
            for a in range(2):
                L[i, n, n * 10 + 2 * i + a] = 0.5
    W3f = np.zeros((5, 10 * C2, 64), np.float32)
    for i in range(5):
        for wp in range(10):
            for co in range(C2):
                W3f[i, wp * C2 + co, :] = 0.5 * W3[:, co * 25 + i * 5 + wp // 2]
    Ls = L.reshape(5 * NB, NB * 10)
    W3fs = W3f.reshape(5 * 10 * C2, 64)
    b3row = b3.reshape(1, 64)
    W4m = W4.T.copy()                              # (64, out_dim)
    b4row = b4.reshape(1, out_dim)

    keys = dict(M1=M1, b1row=b1row, Gs=Gs, Hs=Hs, b2row=b2row,
                Ls=Ls, W3fs=W3fs, b3row=b3row, W4m=W4m, b4row=b4row)
    return {k: jnp.asarray(v, jnp.float32) for k, v in keys.items()}


def init_params(key, out_dim=1, block_n=8):
    """Matches the torch init: kaiming_normal_ conv weights / zero conv bias,
    Linear weight & bias ~ N(0, 0.01)."""
    ks = jax.random.split(key, 6)
    W1 = jax.random.normal(ks[0], (6, 1, 5, 5), jnp.float32) * np.sqrt(2.0 / 25)
    b1 = jnp.zeros((6,), jnp.float32)
    W2 = jax.random.normal(ks[1], (16, 6, 5, 5), jnp.float32) * np.sqrt(2.0 / 150)
    b2 = jnp.zeros((16,), jnp.float32)
    W3 = jax.random.normal(ks[2], (64, 400), jnp.float32) * 0.01
    b3 = jax.random.normal(ks[3], (64,), jnp.float32) * 0.01
    W4 = jax.random.normal(ks[4], (out_dim, 64), jnp.float32) * 0.01
    b4 = jax.random.normal(ks[5], (out_dim,), jnp.float32) * 0.01
    raw = dict(W1=W1, b1=b1, W2=W2, b2=b2, W3=W3, b3=b3, W4=W4, b4=b4)
    return _build_constants(raw, block_n), raw


# ------------------------------ wrapper ---------------------------------------

def lenet_forward(consts, x):
    # x: (N, 1, 28, 28) float32  ->  (N,) float32 energies
    N = x.shape[0]
    NB = consts["Ls"].shape[0] // 5              # images per grid step
    out_dim = consts["W4m"].shape[1]
    Np = ((N + NB - 1) // NB) * NB

    # Host prep is now only a zero-pad to 32x32 (+ batch pad); the conv1
    # kernel-height im2col happens inside the kernel via row-shifted views,
    # so the kernel streams just ~4 KB/image instead of ~18 KB/image.
    xp = jnp.pad(x[:, 0], ((0, Np - N), (2, 2), (2, 2)))             # (Np,32,32)
    x1 = xp.reshape(Np * 32, 32)                                     # (Np*32,32)

    const_names = ("M1", "b1row", "Gs", "Hs", "b2row",
                   "Ls", "W3fs", "b3row", "W4m", "b4row")
    const_args = [consts[k] for k in const_names]
    const_specs = [pl.BlockSpec(a.shape, lambda i: (0, 0)) for a in const_args]

    out = pl.pallas_call(
        _lenet_fused_kernel,
        out_shape=jax.ShapeDtypeStruct((Np, out_dim), jnp.float32),
        grid=(Np // NB,),
        in_specs=[pl.BlockSpec((NB * 32, 32), lambda i: (i, 0))] + const_specs,
        out_specs=pl.BlockSpec((NB, out_dim), lambda i: (i, 0)),
        compiler_params=pltpu.CompilerParams(
            dimension_semantics=("parallel",)),      # megacore-friendly on v7x
    )(x1, *const_args)
    return out[:N, 0]


# -------------------------- pure-JAX reference (check) ------------------------

def lenet_reference(raw, x):
    def silu(v):
        return v * jax.nn.sigmoid(v)

    def conv(inp, W, b):                          # inp (N,C,H,W), valid conv
        Co, Ci, K, _ = W.shape
        Ho, Wo = inp.shape[2] - K + 1, inp.shape[3] - K + 1
        cols = jnp.stack([inp[:, c, kh:kh + Ho, kw:kw + Wo]
                          for c in range(Ci) for kh in range(K) for kw in range(K)],
                         axis=-1)
        y = jnp.einsum("nhwk,ok->nohw", cols, W.reshape(Co, Ci * K * K))
        return y + b[None, :, None, None]

    def pool(v):
        return 0.25 * (v[:, :, 0::2, 0::2] + v[:, :, 0::2, 1::2] +
                       v[:, :, 1::2, 0::2] + v[:, :, 1::2, 1::2])

    xp = jnp.pad(x, ((0, 0), (0, 0), (2, 2), (2, 2)))
    h = pool(silu(conv(xp, raw["W1"], raw["b1"])))
    h = pool(silu(conv(h, raw["W2"], raw["b2"])))
    flat = h.reshape(x.shape[0], 400)
    z3 = silu(flat @ raw["W3"].T + raw["b3"])
    z4 = z3 @ raw["W4"].T + raw["b4"]
    return 0.5 * z4[:, 0] ** 2


# ------------------------------------ main -------------------------------------

if __name__ == "__main__":
    key = jax.random.PRNGKey(0)
    kx, kp = jax.random.split(key)
    # Input spatial size is fixed at 28x28 (1 channel) by Linear(5*5*16, 64).
    x = jax.random.normal(kx, (2, 1, 28, 28), jnp.float32)
    consts, raw = init_params(kp, out_dim=1, block_n=8)

    out = jax.jit(lenet_forward)(consts, x)
    jax.block_until_ready(out)

    assert out.shape == (2,)
    assert bool(jnp.all(jnp.isfinite(out)))

    # Numerical check against a plain-JAX reference (both use default TPU
    # matmul precision, hence the loose normalized tolerance).
    ref = lenet_reference(raw, x)
    scale = float(jnp.max(jnp.abs(ref))) + 1e-9
    rel = float(jnp.max(jnp.abs(out - ref))) / scale
    assert rel < 0.15, f"kernel/reference mismatch: rel={rel}"

    print("KERNEL_OK")
</pallas_src>

<mosaic_0001>
module attributes {stable_mosaic.version = 11 : i64} {
  func.func @_lenet_fused_kernel(%arg0: i32, %arg1: memref<256x32xf32, #tpu.memory_space<vmem>>, %arg2: memref<160x168xf32, #tpu.memory_space<vmem>>, %arg3: memref<1x168xf32, #tpu.memory_space<vmem>>, %arg4: memref<400x256xf32, #tpu.memory_space<vmem>>, %arg5: memref<840x160xf32, #tpu.memory_space<vmem>>, %arg6: memref<1x160xf32, #tpu.memory_space<vmem>>, %arg7: memref<40x80xf32, #tpu.memory_space<vmem>>, %arg8: memref<800x64xf32, #tpu.memory_space<vmem>>, %arg9: memref<1x64xf32, #tpu.memory_space<vmem>>, %arg10: memref<64x1xf32, #tpu.memory_space<vmem>>, %arg11: memref<1x1xf32, #tpu.memory_space<vmem>>, %arg12: memref<8x1xf32, #tpu.memory_space<vmem>>) attributes {dimension_semantics = [#tpu.dimension_semantics<parallel>], iteration_bounds = array<i64: 1>, scalar_prefetch = 0 : i64, scratch_operands = 0 : i64, tpu.core_type = #tpu.core_type<tc>, window_params = [{transform_indices = @transform_0, window_bounds = array<i64: 256, 32>}, {pipeline_mode = #tpu.pipeline_mode<synchronous>, transform_indices = @transform_1, window_bounds = array<i64: 160, 168>}, {pipeline_mode = #tpu.pipeline_mode<synchronous>, transform_indices = @transform_2, window_bounds = array<i64: 1, 168>}, {pipeline_mode = #tpu.pipeline_mode<synchronous>, transform_indices = @transform_3, window_bounds = array<i64: 400, 256>}, {pipeline_mode = #tpu.pipeline_mode<synchronous>, transform_indices = @transform_4, window_bounds = array<i64: 840, 160>}, {pipeline_mode = #tpu.pipeline_mode<synchronous>, transform_indices = @transform_5, window_bounds = array<i64: 1, 160>}, {pipeline_mode = #tpu.pipeline_mode<synchronous>, transform_indices = @transform_6, window_bounds = array<i64: 40, 80>}, {pipeline_mode = #tpu.pipeline_mode<synchronous>, transform_indices = @transform_7, window_bounds = array<i64: 800, 64>}, {pipeline_mode = #tpu.pipeline_mode<synchronous>, transform_indices = @transform_8, window_bounds = array<i64: 1, 64>}, {pipeline_mode = #tpu.pipeline_mode<synchronous>, transform_indices = @transform_9, window_bounds = array<i64: 64, 1>}, {pipeline_mode = #tpu.pipeline_mode<synchronous>, transform_indices = @transform_10, window_bounds = array<i64: 1, 1>}, {transform_indices = @transform_11, window_bounds = array<i64: 8, 1>}]} {
    %c0 = arith.constant 0 : index
    %c0_0 = arith.constant 0 : index
    %0 = vector.load %arg1[%c0, %c0_0] : memref<256x32xf32, #tpu.memory_space<vmem>>, vector<256x32xf32>
    %cst = arith.constant 0.000000e+00 : f32
    %1 = vector.broadcast %cst : f32 to vector<8x32xf32>
    %2 = tpu.concatenate %0, %1 in 0 : vector<256x32xf32>, vector<8x32xf32> -> vector<264x32xf32>
    %c0_1 = arith.constant 0 : index
    %c0_2 = arith.constant 0 : index
    %3 = vector.load %arg3[%c0_1, %c0_2] : memref<1x168xf32, #tpu.memory_space<vmem>>, vector<1x168xf32>
    %4 = vector.extract_strided_slice %2 {offsets = [0, 0], sizes = [256, 32], strides = [1, 1]} : vector<264x32xf32> to vector<256x32xf32>
    %c0_3 = arith.constant 0 : index
    %c0_4 = arith.constant 0 : index
    %5 = vector.load %arg2[%c0_3, %c0_4] : memref<160x168xf32, #tpu.memory_space<vmem>>, vector<32x168xf32>
    %cst_5 = arith.constant dense<0.000000e+00> : vector<256x168xf32>
    %6 = tpu.matmul %4, %5, %cst_5 {dimension_numbers = #tpu.dot_dimension_numbers<[1], [0], [0], [1], [0, 0, 1, 1], [], []>} : vector<256x32xf32>, vector<32x168xf32>, vector<256x168xf32> -> vector<256x168xf32>
    %7 = vector.broadcast %3 : vector<1x168xf32> to vector<256x168xf32>
    %8 = arith.addf %7, %6 : vector<256x168xf32>
    %9 = vector.extract_strided_slice %2 {offsets = [1, 0], sizes = [256, 32], strides = [1, 1]} : vector<264x32xf32> to vector<256x32xf32>
    %c32 = arith.constant 32 : index
    %c0_6 = arith.constant 0 : index
    %10 = vector.load %arg2[%c32, %c0_6] : memref<160x168xf32, #tpu.memory_space<vmem>>, vector<32x168xf32>
    %cst_7 = arith.constant dense<0.000000e+00> : vector<256x168xf32>
    %11 = tpu.matmul %9, %10, %cst_7 {dimension_numbers = #tpu.dot_dimension_numbers<[1], [0], [0], [1], [0, 0, 1, 1], [], []>} : vector<256x32xf32>, vector<32x168xf32>, vector<256x168xf32> -> vector<256x168xf32>
    %12 = arith.addf %8, %11 : vector<256x168xf32>
    %13 = vector.extract_strided_slice %2 {offsets = [2, 0], sizes = [256, 32], strides = [1, 1]} : vector<264x32xf32> to vector<256x32xf32>
    %c64 = arith.constant 64 : index
    %c0_8 = arith.constant 0 : index
    %14 = vector.load %arg2[%c64, %c0_8] : memref<160x168xf32, #tpu.memory_space<vmem>>, vector<32x168xf32>
    %cst_9 = arith.constant dense<0.000000e+00> : vector<256x168xf32>
    %15 = tpu.matmul %13, %14, %cst_9 {dimension_numbers = #tpu.dot_dimension_numbers<[1], [0], [0], [1], [0, 0, 1, 1], [], []>} : vector<256x32xf32>, vector<32x168xf32>, vector<256x168xf32> -> vector<256x168xf32>
    %16 = arith.addf %12, %15 : vector<256x168xf32>
    %17 = vector.extract_strided_slice %2 {offsets = [3, 0], sizes = [256, 32], strides = [1, 1]} : vector<264x32xf32> to vector<256x32xf32>
    %c96 = arith.constant 96 : index
    %c0_10 = arith.constant 0 : index
    %18 = vector.load %arg2[%c96, %c0_10] : memref<160x168xf32, #tpu.memory_space<vmem>>, vector<32x168xf32>
    %cst_11 = arith.constant dense<0.000000e+00> : vector<256x168xf32>
    %19 = tpu.matmul %17, %18, %cst_11 {dimension_numbers = #tpu.dot_dimension_numbers<[1], [0], [0], [1], [0, 0, 1, 1], [], []>} : vector<256x32xf32>, vector<32x168xf32>, vector<256x168xf32> -> vector<256x168xf32>
    %20 = arith.addf %16, %19 : vector<256x168xf32>
    %21 = vector.extract_strided_slice %2 {offsets = [4, 0], sizes = [256, 32], strides = [1, 1]} : vector<264x32xf32> to vector<256x32xf32>
    %c128 = arith.constant 128 : index
    %c0_12 = arith.constant 0 : index
    %22 = vector.load %arg2[%c128, %c0_12] : memref<160x168xf32, #tpu.memory_space<vmem>>, vector<32x168xf32>
    %cst_13 = arith.constant dense<0.000000e+00> : vector<256x168xf32>
    %23 = tpu.matmul %21, %22, %cst_13 {dimension_numbers = #tpu.dot_dimension_numbers<[1], [0], [0], [1], [0, 0, 1, 1], [], []>} : vector<256x32xf32>, vector<32x168xf32>, vector<256x168xf32> -> vector<256x168xf32>
    %24 = arith.addf %20, %23 : vector<256x168xf32>
    %25 = arith.negf %24 : vector<256x168xf32>
    %26 = math.exp %25 : vector<256x168xf32>
    %cst_14 = arith.constant 1.000000e+00 : f32
    %27 = vector.broadcast %cst_14 : f32 to vector<256x168xf32>
    %28 = arith.addf %27, %26 : vector<256x168xf32>
    %29 = arith.divf %27, %28 : vector<256x168xf32>
    %30 = arith.mulf %24, %29 : vector<256x168xf32>
    %c0_15 = arith.constant 0 : index
    %c0_16 = arith.constant 0 : index
    %31 = vector.load %arg4[%c0_15, %c0_16] : memref<400x256xf32, #tpu.memory_space<vmem>>, vector<400x256xf32>
    %cst_17 = arith.constant dense<0.000000e+00> : vector<400x168xf32>
    %32 = tpu.matmul %31, %30, %cst_17 {dimension_numbers = #tpu.dot_dimension_numbers<[1], [0], [0], [1], [0, 0, 1, 1], [], []>} : vector<400x256xf32>, vector<256x168xf32>, vector<400x168xf32> -> vector<400x168xf32>
    %c0_18 = arith.constant 0 : index
    %c0_19 = arith.constant 0 : index
    %33 = vector.load %arg6[%c0_18, %c0_19] : memref<1x160xf32, #tpu.memory_space<vmem>>, vector<1x160xf32>
    %34 = vector.extract_strided_slice %32 {offsets = [0, 0], sizes = [80, 168], strides = [1, 1]} : vector<400x168xf32> to vector<80x168xf32>
    %c0_20 = arith.constant 0 : index
    %c0_21 = arith.constant 0 : index
    %35 = vector.load %arg5[%c0_20, %c0_21] : memref<840x160xf32, #tpu.memory_space<vmem>>, vector<168x160xf32>
    %cst_22 = arith.constant dense<0.000000e+00> : vector<80x160xf32>
    %36 = tpu.matmul %34, %35, %cst_22 {dimension_numbers = #tpu.dot_dimension_numbers<[1], [0], [0], [1], [0, 0, 1, 1], [], []>} : vector<80x168xf32>, vector<168x160xf32>, vector<80x160xf32> -> vector<80x160xf32>
    %37 = vector.broadcast %33 : vector<1x160xf32> to vector<80x160xf32>
    %38 = arith.addf %37, %36 : vector<80x160xf32>
    %39 = vector.extract_strided_slice %32 {offsets = [80, 0], sizes = [80, 168], strides = [1, 1]} : vector<400x168xf32> to vector<80x168xf32>
    %c168 = arith.constant 168 : index
    %c0_23 = arith.constant 0 : index
    %40 = vector.load %arg5[%c168, %c0_23] : memref<840x160xf32, #tpu.memory_space<vmem>>, vector<168x160xf32>
    %cst_24 = arith.constant dense<0.000000e+00> : vector<80x160xf32>
    %41 = tpu.matmul %39, %40, %cst_24 {dimension_numbers = #tpu.dot_dimension_numbers<[1], [0], [0], [1], [0, 0, 1, 1], [], []>} : vector<80x168xf32>, vector<168x160xf32>, vector<80x160xf32> -> vector<80x160xf32>
    %42 = arith.addf %38, %41 : vector<80x160xf32>
    %43 = vector.extract_strided_slice %32 {offsets = [160, 0], sizes = [80, 168], strides = [1, 1]} : vector<400x168xf32> to vector<80x168xf32>
    %c336 = arith.constant 336 : index
    %c0_25 = arith.constant 0 : index
    %44 = vector.load %arg5[%c336, %c0_25] : memref<840x160xf32, #tpu.memory_space<vmem>>, vector<168x160xf32>
    %cst_26 = arith.constant dense<0.000000e+00> : vector<80x160xf32>
    %45 = tpu.matmul %43, %44, %cst_26 {dimension_numbers = #tpu.dot_dimension_numbers<[1], [0], [0], [1], [0, 0, 1, 1], [], []>} : vector<80x168xf32>, vector<168x160xf32>, vector<80x160xf32> -> vector<80x160xf32>
    %46 = arith.addf %42, %45 : vector<80x160xf32>
    %47 = vector.extract_strided_slice %32 {offsets = [240, 0], sizes = [80, 168], strides = [1, 1]} : vector<400x168xf32> to vector<80x168xf32>
    %c504 = arith.constant 504 : index
    %c0_27 = arith.constant 0 : index
    %48 = vector.load %arg5[%c504, %c0_27] : memref<840x160xf32, #tpu.memory_space<vmem>>, vector<168x160xf32>
    %cst_28 = arith.constant dense<0.000000e+00> : vector<80x160xf32>
    %49 = tpu.matmul %47, %48, %cst_28 {dimension_numbers = #tpu.dot_dimension_numbers<[1], [0], [0], [1], [0, 0, 1, 1], [], []>} : vector<80x168xf32>, vector<168x160xf32>, vector<80x160xf32> -> vector<80x160xf32>
    %50 = arith.addf %46, %49 : vector<80x160xf32>
    %51 = vector.extract_strided_slice %32 {offsets = [320, 0], sizes = [80, 168], strides = [1, 1]} : vector<400x168xf32> to vector<80x168xf32>
    %c672 = arith.constant 672 : index
    %c0_29 = arith.constant 0 : index
    %52 = vector.load %arg5[%c672, %c0_29] : memref<840x160xf32, #tpu.memory_space<vmem>>, vector<168x160xf32>
    %cst_30 = arith.constant dense<0.000000e+00> : vector<80x160xf32>
    %53 = tpu.matmul %51, %52, %cst_30 {dimension_numbers = #tpu.dot_dimension_numbers<[1], [0], [0], [1], [0, 0, 1, 1], [], []>} : vector<80x168xf32>, vector<168x160xf32>, vector<80x160xf32> -> vector<80x160xf32>
    %54 = arith.addf %50, %53 : vector<80x160xf32>
    %55 = arith.negf %54 : vector<80x160xf32>
    %56 = math.exp %55 : vector<80x160xf32>
    %cst_31 = arith.constant 1.000000e+00 : f32
    %57 = vector.broadcast %cst_31 : f32 to vector<80x160xf32>
    %58 = arith.addf %57, %56 : vector<80x160xf32>
    %59 = arith.divf %57, %58 : vector<80x160xf32>
    %60 = arith.mulf %54, %59 : vector<80x160xf32>
    %c0_32 = arith.constant 0 : index
    %c0_33 = arith.constant 0 : index
    %61 = vector.load %arg7[%c0_32, %c0_33] : memref<40x80xf32, #tpu.memory_space<vmem>>, vector<40x80xf32>
    %cst_34 = arith.constant dense<0.000000e+00> : vector<40x160xf32>
    %62 = tpu.matmul %61, %60, %cst_34 {dimension_numbers = #tpu.dot_dimension_numbers<[1], [0], [0], [1], [0, 0, 1, 1], [], []>} : vector<40x80xf32>, vector<80x160xf32>, vector<40x160xf32> -> vector<40x160xf32>
    %c0_35 = arith.constant 0 : index
    %c0_36 = arith.constant 0 : index
    %63 = vector.load %arg9[%c0_35, %c0_36] : memref<1x64xf32, #tpu.memory_space<vmem>>, vector<1x64xf32>
    %64 = vector.extract_strided_slice %62 {offsets = [0, 0], sizes = [8, 160], strides = [1, 1]} : vector<40x160xf32> to vector<8x160xf32>
    %c0_37 = arith.constant 0 : index
    %c0_38 = arith.constant 0 : index
    %65 = vector.load %arg8[%c0_37, %c0_38] : memref<800x64xf32, #tpu.memory_space<vmem>>, vector<160x64xf32>
    %cst_39 = arith.constant dense<0.000000e+00> : vector<8x64xf32>
    %66 = tpu.matmul %64, %65, %cst_39 {dimension_numbers = #tpu.dot_dimension_numbers<[1], [0], [0], [1], [0, 0, 1, 1], [], []>} : vector<8x160xf32>, vector<160x64xf32>, vector<8x64xf32> -> vector<8x64xf32>
    %67 = vector.broadcast %63 : vector<1x64xf32> to vector<8x64xf32>
    %68 = arith.addf %67, %66 : vector<8x64xf32>
    %69 = vector.extract_strided_slice %62 {offsets = [8, 0], sizes = [8, 160], strides = [1, 1]} : vector<40x160xf32> to vector<8x160xf32>
    %c160 = arith.constant 160 : index
    %c0_40 = arith.constant 0 : index
    %70 = vector.load %arg8[%c160, %c0_40] : memref<800x64xf32, #tpu.memory_space<vmem>>, vector<160x64xf32>
    %cst_41 = arith.constant dense<0.000000e+00> : vector<8x64xf32>
    %71 = tpu.matmul %69, %70, %cst_41 {dimension_numbers = #tpu.dot_dimension_numbers<[1], [0], [0], [1], [0, 0, 1, 1], [], []>} : vector<8x160xf32>, vector<160x64xf32>, vector<8x64xf32> -> vector<8x64xf32>
    %72 = arith.addf %68, %71 : vector<8x64xf32>
    %73 = vector.extract_strided_slice %62 {offsets = [16, 0], sizes = [8, 160], strides = [1, 1]} : vector<40x160xf32> to vector<8x160xf32>
    %c320 = arith.constant 320 : index
    %c0_42 = arith.constant 0 : index
    %74 = vector.load %arg8[%c320, %c0_42] : memref<800x64xf32, #tpu.memory_space<vmem>>, vector<160x64xf32>
    %cst_43 = arith.constant dense<0.000000e+00> : vector<8x64xf32>
    %75 = tpu.matmul %73, %74, %cst_43 {dimension_numbers = #tpu.dot_dimension_numbers<[1], [0], [0], [1], [0, 0, 1, 1], [], []>} : vector<8x160xf32>, vector<160x64xf32>, vector<8x64xf32> -> vector<8x64xf32>
    %76 = arith.addf %72, %75 : vector<8x64xf32>
    %77 = vector.extract_strided_slice %62 {offsets = [24, 0], sizes = [8, 160], strides = [1, 1]} : vector<40x160xf32> to vector<8x160xf32>
    %c480 = arith.constant 480 : index
    %c0_44 = arith.constant 0 : index
    %78 = vector.load %arg8[%c480, %c0_44] : memref<800x64xf32, #tpu.memory_space<vmem>>, vector<160x64xf32>
    %cst_45 = arith.constant dense<0.000000e+00> : vector<8x64xf32>
    %79 = tpu.matmul %77, %78, %cst_45 {dimension_numbers = #tpu.dot_dimension_numbers<[1], [0], [0], [1], [0, 0, 1, 1], [], []>} : vector<8x160xf32>, vector<160x64xf32>, vector<8x64xf32> -> vector<8x64xf32>
    %80 = arith.addf %76, %79 : vector<8x64xf32>
    %81 = vector.extract_strided_slice %62 {offsets = [32, 0], sizes = [8, 160], strides = [1, 1]} : vector<40x160xf32> to vector<8x160xf32>
    %c640 = arith.constant 640 : index
    %c0_46 = arith.constant 0 : index
    %82 = vector.load %arg8[%c640, %c0_46] : memref<800x64xf32, #tpu.memory_space<vmem>>, vector<160x64xf32>
    %cst_47 = arith.constant dense<0.000000e+00> : vector<8x64xf32>
    %83 = tpu.matmul %81, %82, %cst_47 {dimension_numbers = #tpu.dot_dimension_numbers<[1], [0], [0], [1], [0, 0, 1, 1], [], []>} : vector<8x160xf32>, vector<160x64xf32>, vector<8x64xf32> -> vector<8x64xf32>
    %84 = arith.addf %80, %83 : vector<8x64xf32>
    %85 = arith.negf %84 : vector<8x64xf32>
    %86 = math.exp %85 : vector<8x64xf32>
    %cst_48 = arith.constant 1.000000e+00 : f32
    %87 = vector.broadcast %cst_48 : f32 to vector<8x64xf32>
    %88 = arith.addf %87, %86 : vector<8x64xf32>
    %89 = arith.divf %87, %88 : vector<8x64xf32>
    %90 = arith.mulf %84, %89 : vector<8x64xf32>
    %c0_49 = arith.constant 0 : index
    %c0_50 = arith.constant 0 : index
    %91 = vector.load %arg10[%c0_49, %c0_50] : memref<64x1xf32, #tpu.memory_space<vmem>>, vector<64x1xf32>
    %cst_51 = arith.constant dense<0.000000e+00> : vector<8x1xf32>
    %92 = tpu.matmul %90, %91, %cst_51 {dimension_numbers = #tpu.dot_dimension_numbers<[1], [0], [0], [1], [0, 0, 1, 1], [], []>} : vector<8x64xf32>, vector<64x1xf32>, vector<8x1xf32> -> vector<8x1xf32>
    %c0_52 = arith.constant 0 : index
    %c0_53 = arith.constant 0 : index
    %93 = vector.load %arg11[%c0_52, %c0_53] : memref<1x1xf32, #tpu.memory_space<vmem>>, vector<1x1xf32>
    %94 = vector.broadcast %93 : vector<1x1xf32> to vector<8x1xf32>
    %95 = arith.addf %92, %94 : vector<8x1xf32>
    %cst_54 = arith.constant 5.000000e-01 : f32
    %96 = vector.broadcast %cst_54 : f32 to vector<8x1xf32>
    %97 = arith.mulf %96, %95 : vector<8x1xf32>
    %98 = arith.mulf %97, %95 : vector<8x1xf32>
    %c0_55 = arith.constant 0 : index
    %c0_56 = arith.constant 0 : index
    %99 = vector.load %arg12[%c0_55, %c0_56] : memref<8x1xf32, #tpu.memory_space<vmem>>, vector<8x1xf32>
    tpu.vector_store %arg12[%c0_55, %c0_56], %98 {strides = array<i32>} : memref<8x1xf32, #tpu.memory_space<vmem>>, vector<8x1xf32>,
    return
  }
  func.func @transform_0(%arg0: i32) -> (i32, i32) {
    %c0_i32 = arith.constant 0 : i32
    %c0_i32_0 = arith.constant 0 : i32
    return %arg0, %c0_i32 : i32, i32
  }
  func.func @transform_1(%arg0: i32) -> (i32, i32) {
    %c0_i32 = arith.constant 0 : i32
    %c0_i32_0 = arith.constant 0 : i32
    %c0_i32_1 = arith.constant 0 : i32
    return %c0_i32, %c0_i32_0 : i32, i32
  }
  func.func @transform_2(%arg0: i32) -> (i32, i32) {
    %c0_i32 = arith.constant 0 : i32
    %c0_i32_0 = arith.constant 0 : i32
    %c0_i32_1 = arith.constant 0 : i32
    return %c0_i32, %c0_i32_0 : i32, i32
  }
  func.func @transform_3(%arg0: i32) -> (i32, i32) {
    %c0_i32 = arith.constant 0 : i32
    %c0_i32_0 = arith.constant 0 : i32
    %c0_i32_1 = arith.constant 0 : i32
    return %c0_i32, %c0_i32_0 : i32, i32
  }
  func.func @transform_4(%arg0: i32) -> (i32, i32) {
    %c0_i32 = arith.constant 0 : i32
    %c0_i32_0 = arith.constant 0 : i32
    %c0_i32_1 = arith.constant 0 : i32
    return %c0_i32, %c0_i32_0 : i32, i32
  }
  func.func @transform_5(%arg0: i32) -> (i32, i32) {
    %c0_i32 = arith.constant 0 : i32
    %c0_i32_0 = arith.constant 0 : i32
    %c0_i32_1 = arith.constant 0 : i32
    return %c0_i32, %c0_i32_0 : i32, i32
  }
  func.func @transform_6(%arg0: i32) -> (i32, i32) {
    %c0_i32 = arith.constant 0 : i32
    %c0_i32_0 = arith.constant 0 : i32
    %c0_i32_1 = arith.constant 0 : i32
    return %c0_i32, %c0_i32_0 : i32, i32
  }
  func.func @transform_7(%arg0: i32) -> (i32, i32) {
    %c0_i32 = arith.constant 0 : i32
    %c0_i32_0 = arith.constant 0 : i32
    %c0_i32_1 = arith.constant 0 : i32
    return %c0_i32, %c0_i32_0 : i32, i32
  }
  func.func @transform_8(%arg0: i32) -> (i32, i32) {
    %c0_i32 = arith.constant 0 : i32
    %c0_i32_0 = arith.constant 0 : i32
    %c0_i32_1 = arith.constant 0 : i32
    return %c0_i32, %c0_i32_0 : i32, i32
  }
  func.func @transform_9(%arg0: i32) -> (i32, i32) {
    %c0_i32 = arith.constant 0 : i32
    %c0_i32_0 = arith.constant 0 : i32
    %c0_i32_1 = arith.constant 0 : i32
    return %c0_i32, %c0_i32_0 : i32, i32
  }
  func.func @transform_10(%arg0: i32) -> (i32, i32) {
    %c0_i32 = arith.constant 0 : i32
    %c0_i32_0 = arith.constant 0 : i32
    %c0_i32_1 = arith.constant 0 : i32
    return %c0_i32, %c0_i32_0 : i32, i32
  }
  func.func @transform_11(%arg0: i32) -> (i32, i32) {
    %c0_i32 = arith.constant 0 : i32
    %c0_i32_0 = arith.constant 0 : i32
    return %arg0, %c0_i32 : i32, i32
  }
}

</mosaic_0001>

<llo_original>
// kernel: lenet_forward.1
$region0: #{lenet_forward.1}
  #allocation0 [shape = 'u32[]', space=smem, size = 0x4, offset = 0x4, fixed_abs, tag = 'smem constant byte address 0x4 - core index']
  #allocation1 [shape = 'u32[144,128]{1,0:T(1,128)}', space=vmem, size = 0x12000, scoped, tag = 'internal scratch']
  #allocation2 [shape = 'f32[1,1]{1,0:T(1,128)S(1)}', space=vmem, size = 0x200, scoped, tag = 'scoped memory for lenet_forward.1']
  %s0 = inlined_call_operand.vmem [shape: f32[256,32], index: 0, kind: input, shape index: {}]
  %s1 = inlined_call_operand.vmem [shape: f32[160,168], index: 1, kind: input, shape index: {}]
  %s2 = inlined_call_operand.vmem [shape: f32[1,168], index: 2, kind: input, shape index: {}]
  %s3 = inlined_call_operand.vmem [shape: f32[400,256], index: 3, kind: input, shape index: {}]
  %s4 = inlined_call_operand.vmem [shape: f32[840,160], index: 4, kind: input, shape index: {}]
  %s5 = inlined_call_operand.vmem [shape: f32[1,160], index: 5, kind: input, shape index: {}]
  %s6 = inlined_call_operand.vmem [shape: f32[40,80], index: 6, kind: input, shape index: {}]
  %s7 = inlined_call_operand.vmem [shape: f32[800,64], index: 7, kind: input, shape index: {}]
  %s8 = inlined_call_operand.vmem [shape: f32[1,64], index: 8, kind: input, shape index: {}]
  %s9 = inlined_call_operand.vmem [shape: f32[64,1], index: 9, kind: input, shape index: {}]
  %s10 = inlined_call_operand.<no memory space> [shape: f32[1,1], index: 10, kind: input, shape index: {}]
  %s11 = inlined_call_operand.vmem [shape: f32[8,1], index: 11, kind: output, shape index: {}]
  %s12 = sld [smem:[#allocation0]]
  $region54: #{lenet_forward.1} parent=0
    _
  %s14 = ssub.s32 1, %s12
  %s15 = scalar_select 0, %s14, %s12
  %v16 = vstv %s10
  %17 = vst [vmem:[#allocation2] sm:$0x1] %v16
  // Predicated region
  $region2: #{lenet_forward.1} parent=0 // pred_check
    _
  $region3: #{lenet_forward.1} parent=0 // pred_check_branch
    %19 = sbr.rel (0) target = $region5
  $region4: #{lenet_forward.1} parent=0 // pred_region
    _
  $region5: #{lenet_forward.1} parent=0 // pred_fallthru
    _
  // Predicated region
  $region6: #{lenet_forward.1} parent=0 // pred_check
    _
  $region7: #{lenet_forward.1} parent=0 // pred_check_branch
    %21 = sbr.rel (0) target = $region9
  $region8: #{lenet_forward.1} parent=0 // pred_region
    _
  $region9: #{lenet_forward.1} parent=0 // pred_fallthru
    _
  // Predicated region
  $region10: #{lenet_forward.1} parent=0 // pred_check
    _
  $region11: #{lenet_forward.1} parent=0 // pred_check_branch
    %23 = sbr.rel (0) target = $region13
  $region12: #{lenet_forward.1} parent=0 // pred_region
    _
  $region13: #{lenet_forward.1} parent=0 // pred_fallthru
    _
  // Predicated region
  $region14: #{lenet_forward.1} parent=0 // pred_check
    _
  $region15: #{lenet_forward.1} parent=0 // pred_check_branch
    %25 = sbr.rel (0) target = $region17
  $region16: #{lenet_forward.1} parent=0 // pred_region
    _
  $region17: #{lenet_forward.1} parent=0 // pred_fallthru
    _
  // Predicated region
  $region18: #{lenet_forward.1} parent=0 // pred_check
    _
  $region19: #{lenet_forward.1} parent=0 // pred_check_branch
    %27 = sbr.rel (0) target = $region21
  $region20: #{lenet_forward.1} parent=0 // pred_region
    _
  $region21: #{lenet_forward.1} parent=0 // pred_fallthru
    _
  // Predicated region
  $region22: #{lenet_forward.1} parent=0 // pred_check
    _
  $region23: #{lenet_forward.1} parent=0 // pred_check_branch
    %29 = sbr.rel (0) target = $region25
  $region24: #{lenet_forward.1} parent=0 // pred_region
    _
  $region25: #{lenet_forward.1} parent=0 // pred_fallthru
    _
  // Predicated region
  $region26: #{lenet_forward.1} parent=0 // pred_check
    _
  $region27: #{lenet_forward.1} parent=0 // pred_check_branch
    %31 = sbr.rel (0) target = $region29
  $region28: #{lenet_forward.1} parent=0 // pred_region
    _
  $region29: #{lenet_forward.1} parent=0 // pred_fallthru
    _
  // Predicated region
  $region30: #{lenet_forward.1} parent=0 // pred_check
    _
  $region31: #{lenet_forward.1} parent=0 // pred_check_branch
    %33 = sbr.rel (0) target = $region33
  $region32: #{lenet_forward.1} parent=0 // pred_region
    _
  $region33: #{lenet_forward.1} parent=0 // pred_fallthru
    _
  // Predicated region
  $region34: #{lenet_forward.1} parent=0 // pred_check
    _
  $region35: #{lenet_forward.1} parent=0 // pred_check_branch
    %35 = sbr.rel (0) target = $region37
  $region36: #{lenet_forward.1} parent=0 // pred_region
    _
  $region37: #{lenet_forward.1} parent=0 // pred_fallthru
    _
  // Predicated region
  $region38: #{lenet_forward.1} parent=0 // pred_check
    _
  $region39: #{lenet_forward.1} parent=0 // pred_check_branch
    %37 = sbr.rel (0) target = $region41
  $region40: #{lenet_forward.1} parent=0 // pred_region
    _
  $region41: #{lenet_forward.1} parent=0 // pred_fallthru
    _
  // Predicated region
  $region42: #{lenet_forward.1} parent=0 // pred_check
    _
  $region43: #{lenet_forward.1} parent=0 // pred_check_branch
    %39 = sbr.rel (0) target = $region45
  $region44: #{lenet_forward.1} parent=0 // pred_region
    _
  $region45: #{lenet_forward.1} parent=0 // pred_fallthru
    _
  %v40 = vld [vmem:[%s0] sm:$0xff]
  %v41 = vld [vmem:[%s0 + $0x8] sm:$0xff]
  %v42 = vld [vmem:[%s0 + $0x10] sm:$0xff]
  %v43 = vld [vmem:[%s0 + $0x18] sm:$0xff]
  %v44 = vld [vmem:[%s0 + $0x20] sm:$0xff]
  %v45 = vld [vmem:[%s0 + $0x28] sm:$0xff]
  %v46 = vld [vmem:[%s0 + $0x30] sm:$0xff]
  %v47 = vld [vmem:[%s0 + $0x38] sm:$0xff]
  %v48 = vld [vmem:[%s0 + $0x40] sm:$0xff]
  %v49 = vld [vmem:[%s0 + $0x48] sm:$0xff]
  %v50 = vld [vmem:[%s0 + $0x50] sm:$0xff]
  %v51 = vld [vmem:[%s0 + $0x58] sm:$0xff]
  %v52 = vld [vmem:[%s0 + $0x60] sm:$0xff]
  %v53 = vld [vmem:[%s0 + $0x68] sm:$0xff]
  %v54 = vld [vmem:[%s0 + $0x70] sm:$0xff]
  %v55 = vld [vmem:[%s0 + $0x78] sm:$0xff]
  %v56 = vld [vmem:[%s0 + $0x80] sm:$0xff]
  %v57 = vld [vmem:[%s0 + $0x88] sm:$0xff]
  %v58 = vld [vmem:[%s0 + $0x90] sm:$0xff]
  %v59 = vld [vmem:[%s0 + $0x98] sm:$0xff]
  %v60 = vld [vmem:[%s0 + $0xa0] sm:$0xff]
  %v61 = vld [vmem:[%s0 + $0xa8] sm:$0xff]
  %v62 = vld [vmem:[%s0 + $0xb0] sm:$0xff]
  %v63 = vld [vmem:[%s0 + $0xb8] sm:$0xff]
  %v64 = vld [vmem:[%s0 + $0xc0] sm:$0xff]
  %v65 = vld [vmem:[%s0 + $0xc8] sm:$0xff]
  %v66 = vld [vmem:[%s0 + $0xd0] sm:$0xff]
  %v67 = vld [vmem:[%s0 + $0xd8] sm:$0xff]
  %v68 = vld [vmem:[%s0 + $0xe0] sm:$0xff]
  %v69 = vld [vmem:[%s0 + $0xe8] sm:$0xff]
  %v70 = vld [vmem:[%s0 + $0xf0] sm:$0xff]
  %v71 = vld [vmem:[%s0 + $0xf8] sm:$0xff]
  %v72 = vld [vmem:[%s2] sm:$0x3]
  %v73 = vld [vmem:[%s1] sm:$0xff]
  %v74 = vld [vmem:[%s1 + $0x8] sm:$0xff]
  %v75 = vld [vmem:[%s1 + $0x10] sm:$0xff]
  %v76 = vld [vmem:[%s1 + $0x18] sm:$0xff]
  %v77 = vld [vmem:[%s1 + $0x20] sm:$0xff]
  %v78 = vld [vmem:[%s1 + $0x28] sm:$0xff]
  %v79 = vld [vmem:[%s1 + $0x30] sm:$0xff]
  %v80 = vld [vmem:[%s1 + $0x38] sm:$0xff]
  %vm81 = vcmask 261120
  %v83 = vsel %vm81, %v40, 0
  %v86 = vsel %vm81, %v41, 0
  %v89 = vsel %vm81, %v42, 0
  %v92 = vsel %vm81, %v43, 0
  %v95 = vsel %vm81, %v44, 0
  %v98 = vsel %vm81, %v45, 0
  %v101 = vsel %vm81, %v46, 0
  %v104 = vsel %vm81, %v47, 0
  %v107 = vsel %vm81, %v48, 0
  %v110 = vsel %vm81, %v49, 0
  %v113 = vsel %vm81, %v50, 0
  %v116 = vsel %vm81, %v51, 0
  %v119 = vsel %vm81, %v52, 0
  %v122 = vsel %vm81, %v53, 0
  %v125 = vsel %vm81, %v54, 0
  %v128 = vsel %vm81, %v55, 0
  %v131 = vsel %vm81, %v56, 0
  %v134 = vsel %vm81, %v57, 0
  %v137 = vsel %vm81, %v58, 0
  %v140 = vsel %vm81, %v59, 0
  %v143 = vsel %vm81, %v60, 0
  %v146 = vsel %vm81, %v61, 0
  %v149 = vsel %vm81, %v62, 0
  %v152 = vsel %vm81, %v63, 0
  %v155 = vsel %vm81, %v64, 0
  %v158 = vsel %vm81, %v65, 0
  %v161 = vsel %vm81, %v66, 0
  %v164 = vsel %vm81, %v67, 0
  %v167 = vsel %vm81, %v68, 0
  %v170 = vsel %vm81, %v69, 0
  %v173 = vsel %vm81, %v70, 0
  %v176 = vsel %vm81, %v71, 0
  %178 = vmatprep.subr.mxu0 %v74
  %179 = vmatpush1.msra.mxu0 %v73
  %180 = vmatprep.subr.mxu0 %v76
  %181 = vmatpush1.msra.mxu0 %v75
  %182 = vmatprep.subr.mxu0 %v78
  %183 = vmatpush1.msra.mxu0 %v77
  %184 = vmatprep.subr.mxu0 %v80
  %185 = vmatpush1.msra.mxu0 %v79
  %186 = vmatprep.subr.mxu0 0.0
  %187 = vmatpush1.msra.mxu0 0.0
  %188 = vmatprep.subr.mxu0 0.0
  %189 = vmatpush1.msra.mxu0 0.0
  %190 = vmatprep.subr.mxu0 0.0
  %191 = vmatpush1.msra.mxu0 0.0
  %192 = vmatprep.subr.mxu0 0.0
  %193 = vmatpush1.msra.mxu0 0.0
  %194 = vmatprep.subr.mxu0 0.0
  %195 = vmatpush1.msra.mxu0 0.0
  %196 = vmatprep.subr.mxu0 0.0
  %197 = vmatpush1.msra.mxu0 0.0
  %198 = vmatprep.subr.mxu0 0.0
  %199 = vmatpush1.msra.mxu0 0.0
  %200 = vmatprep.subr.mxu0 0.0
  %201 = vmatpush1.msra.mxu0 0.0
  %202 = vmatprep.subr.mxu0 0.0
  %203 = vmatpush1.msra.mxu0 0.0
  %204 = vmatprep.subr.mxu0 0.0
  %205 = vmatpush1.msra.mxu0 0.0
  %206 = vmatprep.subr.mxu0 0.0
  %207 = vmatpush1.msra.mxu0 0.0
  %208 = vmatprep.subr.mxu0 0.0
  %209 = vmatpush1.msra.mxu0 0.0
  %210 = vmatprep.subr.mxu0 0.0
  %211 = vmatpush1.msra.mxu0 0.0
  %212 = vmatprep.subr.mxu0 0.0
  %213 = vmatpush1.msra.mxu0 0.0
  %214 = vmatprep.subr.mxu0 0.0
  %215 = vmatpush1.msra.mxu0 0.0
  %216 = vmatprep.subr.mxu0 0.0
  %217 = vmatpush1.msra.mxu0 0.0
  %218 = vmatprep.subr.mxu0 0.0
  %219 = vmatpush1.msra.mxu0 0.0
  %220 = vmatprep.subr.mxu0 0.0
  %221 = vmatpush1.msra.mxu0 0.0
  %222 = vmatprep.subr.mxu0 0.0
  %223 = vmatpush1.msra.mxu0 0.0
  %224 = vmatprep.subr.mxu0 0.0
  %225 = vmatpush1.msra.mxu0 0.0
  %226 = vmatprep.subr.mxu0 0.0
  %227 = vmatpush1.msra.mxu0 0.0
  %228 = vmatprep.subr.mxu0 0.0
  %229 = vmatpush1.msra.mxu0 0.0
  %230 = vmatprep.subr.mxu0 0.0
  %231 = vmatpush1.msra.mxu0 0.0
  %232 = vmatprep.subr.mxu0 0.0
  %233 = vmatpush1.msra.mxu0 0.0
  %234 = vmatprep.subr.mxu0 0.0
  %235 = vmatpush1.msra.mxu0 0.0
  %236 = vmatprep.subr.mxu0 0.0
  %237 = vmatpush1.msra.mxu0 0.0
  %238 = vmatprep.subr.mxu0 0.0
  %239 = vmatpush1.msra.mxu0 0.0
  %240 = vmatprep.subr.mxu0 0.0
  %241 = vmatpush1.msra.mxu0 0.0
  %242 = vmatprep.mubr.f32.mxu0 0.0
  %243 = vmatmul.mubr.f32.gmra.mrb[0].mxu0 %v83
  %v244 = vpop.f32.mrb[0].mxu0
  %v245 = vadd.f32 0.0, %v244
  %v246 = vpop.f32.mrb[0].mxu0
  %v247 = vadd.f32 0.0, %v246
  %248 = vmatprep.mubr.f32.mxu0 0.0
  %249 = vmatmul.mubr.f32.gmra.mrb[0].mxu0 %v86
  %v250 = vpop.f32.mrb[0].mxu0
  %v251 = vadd.f32 0.0, %v250
  %v252 = vpop.f32.mrb[0].mxu0
  %v253 = vadd.f32 0.0, %v252
  %254 = vmatprep.mubr.f32.mxu0 0.0
  %255 = vmatmul.mubr.f32.gmra.mrb[0].mxu0 %v89
  %v256 = vpop.f32.mrb[0].mxu0
  %v257 = vadd.f32 0.0, %v256
  %v258 = vpop.f32.mrb[0].mxu0
  %v259 = vadd.f32 0.0, %v258
  %260 = vmatprep.mubr.f32.mxu0 0.0
  %261 = vmatmul.mubr.f32.gmra.mrb[0].mxu0 %v92
  %v262 = vpop.f32.mrb[0].mxu0
  %v263 = vadd.f32 0.0, %v262
  %v264 = vpop.f32.mrb[0].mxu0
  %v265 = vadd.f32 0.0, %v264
  %266 = vmatprep.mubr.f32.mxu0 0.0
  %267 = vmatmul.mubr.f32.gmra.mrb[0].mxu0 %v95
  %v268 = vpop.f32.mrb[0].mxu0
  %v269 = vadd.f32 0.0, %v268
  %v270 = vpop.f32.mrb[0].mxu0
  %v271 = vadd.f32 0.0, %v270
  %272 = vmatprep.mubr.f32.mxu0 0.0
  %273 = vmatmul.mubr.f32.gmra.mrb[0].mxu0 %v98
  %v274 = vpop.f32.mrb[0].mxu0
  %v275 = vadd.f32 0.0, %v274
  %v276 = vpop.f32.mrb[0].mxu0
  %v277 = vadd.f32 0.0, %v276
  %278 = vmatprep.mubr.f32.mxu0 0.0
  %279 = vmatmul.mubr.f32.gmra.mrb[0].mxu0 %v101
  %v280 = vpop.f32.mrb[0].mxu0
  %v281 = vadd.f32 0.0, %v280
  %v282 = vpop.f32.mrb[0].mxu0
  %v283 = vadd.f32 0.0, %v282
  %284 = vmatprep.mubr.f32.mxu0 0.0
  %285 = vmatmul.mubr.f32.gmra.mrb[0].mxu0 %v104
  %v286 = vpop.f32.mrb[0].mxu0
  %v287 = vadd.f32 0.0, %v286
  %v288 = vpop.f32.mrb[0].mxu0
  %v289 = vadd.f32 0.0, %v288
  %290 = vmatprep.mubr.f32.mxu0 0.0
  %291 = vmatmul.mubr.f32.gmra.mrb[0].mxu0 %v107
  %v292 = vpop.f32.mrb[0].mxu0
  %v293 = vadd.f32 0.0, %v292
  %v294 = vpop.f32.mrb[0].mxu0
  %v295 = vadd.f32 0.0, %v294
  %296 = vmatprep.mubr.f32.mxu0 0.0
  %297 = vmatmul.mubr.f32.gmra.mrb[0].mxu0 %v110
  %v298 = vpop.f32.mrb[0].mxu0
  %v299 = vadd.f32 0.0, %v298
  %v300 = vpop.f32.mrb[0].mxu0
  %v301 = vadd.f32 0.0, %v300
  %302 = vmatprep.mubr.f32.mxu0 0.0
  %303 = vmatmul.mubr.f32.gmra.mrb[0].mxu0 %v113
  %v304 = vpop.f32.mrb[0].mxu0
  %v305 = vadd.f32 0.0, %v304
  %v306 = vpop.f32.mrb[0].mxu0
  %v307 = vadd.f32 0.0, %v306
  %308 = vmatprep.mubr.f32.mxu0 0.0
  %309 = vmatmul.mubr.f32.gmra.mrb[0].mxu0 %v116
  %v310 = vpop.f32.mrb[0].mxu0
  %v311 = vadd.f32 0.0, %v310
  %v312 = vpop.f32.mrb[0].mxu0
  %v313 = vadd.f32 0.0, %v312
  %314 = vmatprep.mubr.f32.mxu0 0.0
  %315 = vmatmul.mubr.f32.gmra.mrb[0].mxu0 %v119
  %v316 = vpop.f32.mrb[0].mxu0
  %v317 = vadd.f32 0.0, %v316
  %v318 = vpop.f32.mrb[0].mxu0
  %v319 = vadd.f32 0.0, %v318
  %320 = vmatprep.mubr.f32.mxu0 0.0
  %321 = vmatmul.mubr.f32.gmra.mrb[0].mxu0 %v122
  %v322 = vpop.f32.mrb[0].mxu0
  %v323 = vadd.f32 0.0, %v322
  %v324 = vpop.f32.mrb[0].mxu0
  %v325 = vadd.f32 0.0, %v324
  %326 = vmatprep.mubr.f32.mxu0 0.0
  %327 = vmatmul.mubr.f32.gmra.mrb[0].mxu0 %v125
  %v328 = vpop.f32.mrb[0].mxu0
  %v329 = vadd.f32 0.0, %v328
  %v330 = vpop.f32.mrb[0].mxu0
  %v331 = vadd.f32 0.0, %v330
  %332 = vmatprep.mubr.f32.mxu0 0.0
  %333 = vmatmul.mubr.f32.gmra.mrb[0].mxu0 %v128
  %v334 = vpop.f32.mrb[0].mxu0
  %v335 = vadd.f32 0.0, %v334
  %v336 = vpop.f32.mrb[0].mxu0
  %v337 = vadd.f32 0.0, %v336
  %338 = vmatprep.mubr.f32.mxu0 0.0
  %339 = vmatmul.mubr.f32.gmra.mrb[0].mxu0 %v131
  %v340 = vpop.f32.mrb[0].mxu0
  %v341 = vadd.f32 0.0, %v340
  %v342 = vpop.f32.mrb[0].mxu0
  %v343 = vadd.f32 0.0, %v342
  %344 = vmatprep.mubr.f32.mxu0 0.0
  %345 = vmatmul.mubr.f32.gmra.mrb[0].mxu0 %v134
  %v346 = vpop.f32.mrb[0].mxu0
  %v347 = vadd.f32 0.0, %v346
  %v348 = vpop.f32.mrb[0].mxu0
  %v349 = vadd.f32 0.0, %v348
  %350 = vmatprep.mubr.f32.mxu0 0.0
  %351 = vmatmul.mubr.f32.gmra.mrb[0].mxu0 %v137
  %v352 = vpop.f32.mrb[0].mxu0
  %v353 = vadd.f32 0.0, %v352
  %v354 = vpop.f32.mrb[0].mxu0
  %v355 = vadd.f32 0.0, %v354
  %356 = vmatprep.mubr.f32.mxu0 0.0
  %357 = vmatmul.mubr.f32.gmra.mrb[0].mxu0 %v140
  %v358 = vpop.f32.mrb[0].mxu0
  %v359 = vadd.f32 0.0, %v358
  %v360 = vpop.f32.mrb[0].mxu0
  %v361 = vadd.f32 0.0, %v360
  %362 = vmatprep.mubr.f32.mxu0 0.0
  %363 = vmatmul.mubr.f32.gmra.mrb[0].mxu0 %v143
  %v364 = vpop.f32.mrb[0].mxu0
  %v365 = vadd.f32 0.0, %v364
  %v366 = vpop.f32.mrb[0].mxu0
  %v367 = vadd.f32 0.0, %v366
  %368 = vmatprep.mubr.f32.mxu0 0.0
  %369 = vmatmul.mubr.f32.gmra.mrb[0].mxu0 %v146
  %v370 = vpop.f32.mrb[0].mxu0
  %v371 = vadd.f32 0.0, %v370
  %v372 = vpop.f32.mrb[0].mxu0
  %v373 = vadd.f32 0.0, %v372
  %374 = vmatprep.mubr.f32.mxu0 0.0
  %375 = vmatmul.mubr.f32.gmra.mrb[0].mxu0 %v149
  %v376 = vpop.f32.mrb[0].mxu0
  %v377 = vadd.f32 0.0, %v376
  %v378 = vpop.f32.mrb[0].mxu0
  %v379 = vadd.f32 0.0, %v378
  %380 = vmatprep.mubr.f32.mxu0 0.0
  %381 = vmatmul.mubr.f32.gmra.mrb[0].mxu0 %v152
  %v382 = vpop.f32.mrb[0].mxu0
  %v383 = vadd.f32 0.0, %v382
  %v384 = vpop.f32.mrb[0].mxu0
  %v385 = vadd.f32 0.0, %v384
  %386 = vmatprep.mubr.f32.mxu0 0.0
  %387 = vmatmul.mubr.f32.gmra.mrb[0].mxu0 %v155
  %v388 = vpop.f32.mrb[0].mxu0
  %v389 = vadd.f32 0.0, %v388
  %v390 = vpop.f32.mrb[0].mxu0
  %v391 = vadd.f32 0.0, %v390
  %392 = vmatprep.mubr.f32.mxu0 0.0
  %393 = vmatmul.mubr.f32.gmra.mrb[0].mxu0 %v158
  %v394 = vpop.f32.mrb[0].mxu0
  %v395 = vadd.f32 0.0, %v394
  %v396 = vpop.f32.mrb[0].mxu0
  %v397 = vadd.f32 0.0, %v396
  %398 = vmatprep.mubr.f32.mxu0 0.0
  %399 = vmatmul.mubr.f32.gmra.mrb[0].mxu0 %v161
  %v400 = vpop.f32.mrb[0].mxu0
  %v401 = vadd.f32 0.0, %v400
  %v402 = vpop.f32.mrb[0].mxu0
  %v403 = vadd.f32 0.0, %v402
  %404 = vmatprep.mubr.f32.mxu0 0.0
  %405 = vmatmul.mubr.f32.gmra.mrb[0].mxu0 %v164
  %v406 = vpop.f32.mrb[0].mxu0
  %v407 = vadd.f32 0.0, %v406
  %v408 = vpop.f32.mrb[0].mxu0
  %v409 = vadd.f32 0.0, %v408
  %410 = vmatprep.mubr.f32.mxu0 0.0
  %411 = vmatmul.mubr.f32.gmra.mrb[0].mxu0 %v167
  %v412 = vpop.f32.mrb[0].mxu0
  %v413 = vadd.f32 0.0, %v412
  %v414 = vpop.f32.mrb[0].mxu0
  %v415 = vadd.f32 0.0, %v414
  %416 = vmatprep.mubr.f32.mxu0 0.0
  %417 = vmatmul.mubr.f32.gmra.mrb[0].mxu0 %v170
  %v418 = vpop.f32.mrb[0].mxu0
  %v419 = vadd.f32 0.0, %v418
  %v420 = vpop.f32.mrb[0].mxu0
  %v421 = vadd.f32 0.0, %v420
  %422 = vmatprep.mubr.f32.mxu0 0.0
  %423 = vmatmul.mubr.f32.gmra.mrb[0].mxu0 %v173
  %v424 = vpop.f32.mrb[0].mxu0
  %v425 = vadd.f32 0.0, %v424
  %v426 = vpop.f32.mrb[0].mxu0
  %v427 = vadd.f32 0.0, %v426
  %428 = vmatprep.mubr.f32.mxu0 0.0
  %429 = vmatmul.mubr.f32.gmra.mrb[0].mxu0 %v176
  %v430 = vpop.f32.mrb[0].mxu0
  %v431 = vadd.f32 0.0, %v430
  %v432 = vpop.f32.mrb[0].mxu0
  %v433 = vadd.f32 0.0, %v432
  %434 = vdwg.mxu0
  %v436 = vlaneseq
  %v437 = vshrl.u32 %v436, 7
  %v438 = vsub.s32 0, %v437
  %v439 = vrot.slane %v72, %v438
  %v440 = vlaneseq
  %v441 = vshrl.u32 %v440, 7
  %v442 = vsub.s32 1, %v441
  %v443 = vrot.slane %v72, %v442
  %v446 = vadd.f32 %v439, %v245
  %v447 = vadd.f32 %v443, %v247
  %v448 = vadd.f32 %v439, %v251
  %v449 = vadd.f32 %v443, %v253
  %v450 = vadd.f32 %v439, %v257
  %v451 = vadd.f32 %v443, %v259
  %v452 = vadd.f32 %v439, %v263
  %v453 = vadd.f32 %v443, %v265
  %v454 = vadd.f32 %v439, %v269
  %v455 = vadd.f32 %v443, %v271
  %v456 = vadd.f32 %v439, %v275
  %v457 = vadd.f32 %v443, %v277
  %v458 = vadd.f32 %v439, %v281
  %v459 = vadd.f32 %v443, %v283
  %v460 = vadd.f32 %v439, %v287
  %v461 = vadd.f32 %v443, %v289
  %v462 = vadd.f32 %v439, %v293
  %v463 = vadd.f32 %v443, %v295
  %v464 = vadd.f32 %v439, %v299
  %v465 = vadd.f32 %v443, %v301
  %v466 = vadd.f32 %v439, %v305
  %v467 = vadd.f32 %v443, %v307
  %v468 = vadd.f32 %v439, %v311
  %v469 = vadd.f32 %v443, %v313
  %v470 = vadd.f32 %v439, %v317
  %v471 = vadd.f32 %v443, %v319
  %v472 = vadd.f32 %v439, %v323
  %v473 = vadd.f32 %v443, %v325
  %v474 = vadd.f32 %v439, %v329
  %v475 = vadd.f32 %v443, %v331
  %v476 = vadd.f32 %v439, %v335
  %v477 = vadd.f32 %v443, %v337
  %v478 = vadd.f32 %v439, %v341
  %v479 = vadd.f32 %v443, %v343
  %v480 = vadd.f32 %v439, %v347
  %v481 = vadd.f32 %v443, %v349
  %v482 = vadd.f32 %v439, %v353
  %v483 = vadd.f32 %v443, %v355
  %v484 = vadd.f32 %v439, %v359
  %v485 = vadd.f32 %v443, %v361
  %v486 = vadd.f32 %v439, %v365
  %v487 = vadd.f32 %v443, %v367
  %v488 = vadd.f32 %v439, %v371
  %v489 = vadd.f32 %v443, %v373
  %v490 = vadd.f32 %v439, %v377
  %v491 = vadd.f32 %v443, %v379
  %v492 = vadd.f32 %v439, %v383
  %v493 = vadd.f32 %v443, %v385
  %v494 = vadd.f32 %v439, %v389
  %v495 = vadd.f32 %v443, %v391
  %v496 = vadd.f32 %v439, %v395
  %v497 = vadd.f32 %v443, %v397
  %v498 = vadd.f32 %v439, %v401
  %v499 = vadd.f32 %v443, %v403
  %v500 = vadd.f32 %v439, %v407
  %v501 = vadd.f32 %v443, %v409
  %v502 = vadd.f32 %v439, %v413
  %v503 = vadd.f32 %v443, %v415
  %v504 = vadd.f32 %v439, %v419
  %v505 = vadd.f32 %v443, %v421
  %v506 = vadd.f32 %v439, %v425
  %v507 = vadd.f32 %v443, %v427
  %v508 = vadd.f32 %v439, %v431
  %v509 = vadd.f32 %v443, %v433
  %v510 = vld [vmem:[%s1 + $0x40] sm:$0xff]
  %v511 = vld [vmem:[%s1 + $0x48] sm:$0xff]
  %v512 = vld [vmem:[%s1 + $0x50] sm:$0xff]
  %v513 = vld [vmem:[%s1 + $0x58] sm:$0xff]
  %v514 = vld [vmem:[%s1 + $0x60] sm:$0xff]
  %v515 = vld [vmem:[%s1 + $0x68] sm:$0xff]
  %v516 = vld [vmem:[%s1 + $0x70] sm:$0xff]
  %v517 = vld [vmem:[%s1 + $0x78] sm:$0xff]
  %vm519 = vcmask 1046528
  %v520 = vrot.slane %v40, 1
  %v521 = vrot.slane %v41, 1
  %v522 = vsel %vm519, %v520, %v521
  %v523 = vrot.slane %v42, 1
  %v524 = vsel %vm519, %v521, %v523
  %v525 = vrot.slane %v43, 1
  %v526 = vsel %vm519, %v523, %v525
  %v527 = vrot.slane %v44, 1
  %v528 = vsel %vm519, %v525, %v527
  %v529 = vrot.slane %v45, 1
  %v530 = vsel %vm519, %v527, %v529
  %v531 = vrot.slane %v46, 1
  %v532 = vsel %vm519, %v529, %v531
  %v533 = vrot.slane %v47, 1
  %v534 = vsel %vm519, %v531, %v533
  %v535 = vrot.slane %v48, 1
  %v536 = vsel %vm519, %v533, %v535
  %v537 = vrot.slane %v49, 1
  %v538 = vsel %vm519, %v535, %v537
  %v539 = vrot.slane %v50, 1
  %v540 = vsel %vm519, %v537, %v539
  %v541 = vrot.slane %v51, 1
  %v542 = vsel %vm519, %v539, %v541
  %v543 = vrot.slane %v52, 1
  %v544 = vsel %vm519, %v541, %v543
  %v545 = vrot.slane %v53, 1
  %v546 = vsel %vm519, %v543, %v545
  %v547 = vrot.slane %v54, 1
  %v548 = vsel %vm519, %v545, %v547
  %v549 = vrot.slane %v55, 1
  %v550 = vsel %vm519, %v547, %v549
  %v551 = vrot.slane %v56, 1
  %v552 = vsel %vm519, %v549, %v551
  %v553 = vrot.slane %v57, 1
  %v554 = vsel %vm519, %v551, %v553
  %v555 = vrot.slane %v58, 1
  %v556 = vsel %vm519, %v553, %v555
  %v557 = vrot.slane %v59, 1
  %v558 = vsel %vm519, %v555, %v557
  %v559 = vrot.slane %v60, 1
  %v560 = vsel %vm519, %v557, %v559
  %v561 = vrot.slane %v61, 1
  %v562 = vsel %vm519, %v559, %v561
  %v563 = vrot.slane %v62, 1
  %v564 = vsel %vm519, %v561, %v563
  %v565 = vrot.slane %v63, 1
  %v566 = vsel %vm519, %v563, %v565
  %v567 = vrot.slane %v64, 1
  %v568 = vsel %vm519, %v565, %v567
  %v569 = vrot.slane %v65, 1
  %v570 = vsel %vm519, %v567, %v569
  %v571 = vrot.slane %v66, 1
  %v572 = vsel %vm519, %v569, %v571
  %v573 = vrot.slane %v67, 1
  %v574 = vsel %vm519, %v571, %v573
  %v575 = vrot.slane %v68, 1
  %v576 = vsel %vm519, %v573, %v575
  %v577 = vrot.slane %v69, 1
  %v578 = vsel %vm519, %v575, %v577
  %v579 = vrot.slane %v70, 1
  %v580 = vsel %vm519, %v577, %v579
  %v581 = vrot.slane %v71, 1
  %v582 = vsel %vm519, %v579, %v581
  %v583 = vrot.slane 0.0, 1
  %v584 = vsel %vm519, %v581, %v583
  %v585 = vsel %vm81, %v522, 0
  %v587 = vsel %vm81, %v524, 0
  %v589 = vsel %vm81, %v526, 0
  %v591 = vsel %vm81, %v528, 0
  %v593 = vsel %vm81, %v530, 0
  %v595 = vsel %vm81, %v532, 0
  %v597 = vsel %vm81, %v534, 0
  %v599 = vsel %vm81, %v536, 0
  %v601 = vsel %vm81, %v538, 0
  %v603 = vsel %vm81, %v540, 0
  %v605 = vsel %vm81, %v542, 0
  %v607 = vsel %vm81, %v544, 0
  %v609 = vsel %vm81, %v546, 0
  %v611 = vsel %vm81, %v548, 0
  %v613 = vsel %vm81, %v550, 0
  %v615 = vsel %vm81, %v552, 0
  %v617 = vsel %vm81, %v554, 0
  %v619 = vsel %vm81, %v556, 0
  %v621 = vsel %vm81, %v558, 0
  %v623 = vsel %vm81, %v560, 0
  %v625 = vsel %vm81, %v562, 0
  %v627 = vsel %vm81, %v564, 0
  %v629 = vsel %vm81, %v566, 0
  %v631 = vsel %vm81, %v568, 0
  %v633 = vsel %vm81, %v570, 0
  %v635 = vsel %vm81, %v572, 0
  %v637 = vsel %vm81, %v574, 0
  %v639 = vsel %vm81, %v576, 0
  %v641 = vsel %vm81, %v578, 0
  %v643 = vsel %vm81, %v580, 0
  %v645 = vsel %vm81, %v582, 0
  %v647 = vsel %vm81, %v584, 0
  %649 = vmatprep.subr.mxu0 %v511
  %650 = vmatpush1.msra.mxu0 %v510
  %651 = vmatprep.subr.mxu0 %v513
  %652 = vmatpush1.msra.mxu0 %v512
  %653 = vmatprep.subr.mxu0 %v515
  %654 = vmatpush1.msra.mxu0 %v514
  %655 = vmatprep.subr.mxu0 %v517
  %656 = vmatpush1.msra.mxu0 %v516
  %657 = vmatprep.subr.mxu0 0.0
  %658 = vmatpush1.msra.mxu0 0.0
  %659 = vmatprep.subr.mxu0 0.0
  %660 = vmatpush1.msra.mxu0 0.0
  %661 = vmatprep.subr.mxu0 0.0
  %662 = vmatpush1.msra.mxu0 0.0
  %663 = vmatprep.subr.mxu0 0.0
  %664 = vmatpush1.msra.mxu0 0.0
  %665 = vmatprep.subr.mxu0 0.0
  %666 = vmatpush1.msra.mxu0 0.0
  %667 = vmatprep.subr.mxu0 0.0
  %668 = vmatpush1.msra.mxu0 0.0
  %669 = vmatprep.subr.mxu0 0.0
  %670 = vmatpush1.msra.mxu0 0.0
  %671 = vmatprep.subr.mxu0 0.0
  %672 = vmatpush1.msra.mxu0 0.0
  %673 = vmatprep.subr.mxu0 0.0
  %674 = vmatpush1.msra.mxu0 0.0
  %675 = vmatprep.subr.mxu0 0.0
  %676 = vmatpush1.msra.mxu0 0.0
  %677 = vmatprep.subr.mxu0 0.0
  %678 = vmatpush1.msra.mxu0 0.0
  %679 = vmatprep.subr.mxu0 0.0
  %680 = vmatpush1.msra.mxu0 0.0
  %681 = vmatprep.subr.mxu0 0.0
  %682 = vmatpush1.msra.mxu0 0.0
  %683 = vmatprep.subr.mxu0 0.0
  %684 = vmatpush1.msra.mxu0 0.0
  %685 = vmatprep.subr.mxu0 0.0
  %686 = vmatpush1.msra.mxu0 0.0
  %687 = vmatprep.subr.mxu0 0.0
  %688 = vmatpush1.msra.mxu0 0.0
  %689 = vmatprep.subr.mxu0 0.0
  %690 = vmatpush1.msra.mxu0 0.0
  %691 = vmatprep.subr.mxu0 0.0
  %692 = vmatpush1.msra.mxu0 0.0
  %693 = vmatprep.subr.mxu0 0.0
  %694 = vmatpush1.msra.mxu0 0.0
  %695 = vmatprep.subr.mxu0 0.0
  %696 = vmatpush1.msra.mxu0 0.0
  %697 = vmatprep.subr.mxu0 0.0
  %698 = vmatpush1.msra.mxu0 0.0
  %699 = vmatprep.subr.mxu0 0.0
  %700 = vmatpush1.msra.mxu0 0.0
  %701 = vmatprep.subr.mxu0 0.0
  %702 = vmatpush1.msra.mxu0 0.0
  %703 = vmatprep.subr.mxu0 0.0
  %704 = vmatpush1.msra.mxu0 0.0
  %705 = vmatprep.subr.mxu0 0.0
  %706 = vmatpush1.msra.mxu0 0.0
  %707 = vmatprep.subr.mxu0 0.0
  %708 = vmatpush1.msra.mxu0 0.0
  %709 = vmatprep.subr.mxu0 0.0
  %710 = vmatpush1.msra.mxu0 0.0
  %711 = vmatprep.subr.mxu0 0.0
  %712 = vmatpush1.msra.mxu0 0.0
  %713 = vmatprep.mubr.f32.mxu0 0.0
  %714 = vmatmul.mubr.f32.gmra.mrb[0].mxu0 %v585
  %v715 = vpop.f32.mrb[0].mxu0
  %v716 = vadd.f32 0.0, %v715
  %v717 = vpop.f32.mrb[0].mxu0
  %v718 = vadd.f32 0.0, %v717
  %719 = vmatprep.mubr.f32.mxu0 0.0
  %720 = vmatmul.mubr.f32.gmra.mrb[0].mxu0 %v587
  %v721 = vpop.f32.mrb[0].mxu0
  %v722 = vadd.f32 0.0, %v721
  %v723 = vpop.f32.mrb[0].mxu0
  %v724 = vadd.f32 0.0, %v723
  %725 = vmatprep.mubr.f32.mxu0 0.0
  %726 = vmatmul.mubr.f32.gmra.mrb[0].mxu0 %v589
  %v727 = vpop.f32.mrb[0].mxu0
  %v728 = vadd.f32 0.0, %v727
  %v729 = vpop.f32.mrb[0].mxu0
  %v730 = vadd.f32 0.0, %v729
  %731 = vmatprep.mubr.f32.mxu0 0.0
  %732 = vmatmul.mubr.f32.gmra.mrb[0].mxu0 %v591
  %v733 = vpop.f32.mrb[0].mxu0
  %v734 = vadd.f32 0.0, %v733
  %v735 = vpop.f32.mrb[0].mxu0
  %v736 = vadd.f32 0.0, %v735
  %737 = vmatprep.mubr.f32.mxu0 0.0
  %738 = vmatmul.mubr.f32.gmra.mrb[0].mxu0 %v593
  %v739 = vpop.f32.mrb[0].mxu0
  %v740 = vadd.f32 0.0, %v739
  %v741 = vpop.f32.mrb[0].mxu0
  %v742 = vadd.f32 0.0, %v741
  %743 = vmatprep.mubr.f32.mxu0 0.0
  %744 = vmatmul.mubr.f32.gmra.mrb[0].mxu0 %v595
  %v745 = vpop.f32.mrb[0].mxu0
  %v746 = vadd.f32 0.0, %v745
  %v747 = vpop.f32.mrb[0].mxu0
  %v748 = vadd.f32 0.0, %v747
  %749 = vmatprep.mubr.f32.mxu0 0.0
  %750 = vmatmul.mubr.f32.gmra.mrb[0].mxu0 %v597
  %v751 = vpop.f32.mrb[0].mxu0
  %v752 = vadd.f32 0.0, %v751
  %v753 = vpop.f32.mrb[0].mxu0
  %v754 = vadd.f32 0.0, %v753
  %755 = vmatprep.mubr.f32.mxu0 0.0
  %756 = vmatmul.mubr.f32.gmra.mrb[0].mxu0 %v599
  %v757 = vpop.f32.mrb[0].mxu0
  %v758 = vadd.f32 0.0, %v757
  %v759 = vpop.f32.mrb[0].mxu0
  %v760 = vadd.f32 0.0, %v759
  %761 = vmatprep.mubr.f32.mxu0 0.0
  %762 = vmatmul.mubr.f32.gmra.mrb[0].mxu0 %v601
  %v763 = vpop.f32.mrb[0].mxu0
  %v764 = vadd.f32 0.0, %v763
  %v765 = vpop.f32.mrb[0].mxu0
  %v766 = vadd.f32 0.0, %v765
  %767 = vmatprep.mubr.f32.mxu0 0.0
  %768 = vmatmul.mubr.f32.gmra.mrb[0].mxu0 %v603
  %v769 = vpop.f32.mrb[0].mxu0
  %v770 = vadd.f32 0.0, %v769
  %v771 = vpop.f32.mrb[0].mxu0
  %v772 = vadd.f32 0.0, %v771
  %773 = vmatprep.mubr.f32.mxu0 0.0
  %774 = vmatmul.mubr.f32.gmra.mrb[0].mxu0 %v605
  %v775 = vpop.f32.mrb[0].mxu0
  %v776 = vadd.f32 0.0, %v775
  %v777 = vpop.f32.mrb[0].mxu0
  %v778 = vadd.f32 0.0, %v777
  %779 = vmatprep.mubr.f32.mxu0 0.0
  %780 = vmatmul.mubr.f32.gmra.mrb[0].mxu0 %v607
  %v781 = vpop.f32.mrb[0].mxu0
  %v782 = vadd.f32 0.0, %v781
  %v783 = vpop.f32.mrb[0].mxu0
  %v784 = vadd.f32 0.0, %v783
  %785 = vmatprep.mubr.f32.mxu0 0.0
  %786 = vmatmul.mubr.f32.gmra.mrb[0].mxu0 %v609
  %v787 = vpop.f32.mrb[0].mxu0
  %v788 = vadd.f32 0.0, %v787
  %v789 = vpop.f32.mrb[0].mxu0
  %v790 = vadd.f32 0.0, %v789
  %791 = vmatprep.mubr.f32.mxu0 0.0
  %792 = vmatmul.mubr.f32.gmra.mrb[0].mxu0 %v611
  %v793 = vpop.f32.mrb[0].mxu0
  %v794 = vadd.f32 0.0, %v793
  %v795 = vpop.f32.mrb[0].mxu0
  %v796 = vadd.f32 0.0, %v795
  %797 = vmatprep.mubr.f32.mxu0 0.0
  %798 = vmatmul.mubr.f32.gmra.mrb[0].mxu0 %v613
  %v799 = vpop.f32.mrb[0].mxu0
  %v800 = vadd.f32 0.0, %v799
  %v801 = vpop.f32.mrb[0].mxu0
  %v802 = vadd.f32 0.0, %v801
  %803 = vmatprep.mubr.f32.mxu0 0.0
  %804 = vmatmul.mubr.f32.gmra.mrb[0].mxu0 %v615
  %v805 = vpop.f32.mrb[0].mxu0
  %v806 = vadd.f32 0.0, %v805
  %v807 = vpop.f32.mrb[0].mxu0
  %v808 = vadd.f32 0.0, %v807
  %809 = vmatprep.mubr.f32.mxu0 0.0
  %810 = vmatmul.mubr.f32.gmra.mrb[0].mxu0 %v617
  %v811 = vpop.f32.mrb[0].mxu0
  %v812 = vadd.f32 0.0, %v811
  %v813 = vpop.f32.mrb[0].mxu0
  %v814 = vadd.f32 0.0, %v813
  %815 = vmatprep.mubr.f32.mxu0 0.0
  %816 = vmatmul.mubr.f32.gmra.mrb[0].mxu0 %v619
  %v817 = vpop.f32.mrb[0].mxu0
  %v818 = vadd.f32 0.0, %v817
  %v819 = vpop.f32.mrb[0].mxu0
  %v820 = vadd.f32 0.0, %v819
  %821 = vmatprep.mubr.f32.mxu0 0.0
  %822 = vmatmul.mubr.f32.gmra.mrb[0].mxu0 %v621
  %v823 = vpop.f32.mrb[0].mxu0
  %v824 = vadd.f32 0.0, %v823
  %v825 = vpop.f32.mrb[0].mxu0
  %v826 = vadd.f32 0.0, %v825
  %827 = vmatprep.mubr.f32.mxu0 0.0
  %828 = vmatmul.mubr.f32.gmra.mrb[0].mxu0 %v623
  %v829 = vpop.f32.mrb[0].mxu0
  %v830 = vadd.f32 0.0, %v829
  %v831 = vpop.f32.mrb[0].mxu0
  %v832 = vadd.f32 0.0, %v831
  %833 = vmatprep.mubr.f32.mxu0 0.0
  %834 = vmatmul.mubr.f32.gmra.mrb[0].mxu0 %v625
  %v835 = vpop.f32.mrb[0].mxu0
  %v836 = vadd.f32 0.0, %v835
  %v837 = vpop.f32.mrb[0].mxu0
  %v838 = vadd.f32 0.0, %v837
  %839 = vmatprep.mubr.f32.mxu0 0.0
  %840 = vmatmul.mubr.f32.gmra.mrb[0].mxu0 %v627
  %v841 = vpop.f32.mrb[0].mxu0
  %v842 = vadd.f32 0.0, %v841
  %v843 = vpop.f32.mrb[0].mxu0
  %v844 = vadd.f32 0.0, %v843
  %845 = vmatprep.mubr.f32.mxu0 0.0
  %846 = vmatmul.mubr.f32.gmra.mrb[0].mxu0 %v629
  %v847 = vpop.f32.mrb[0].mxu0
  %v848 = vadd.f32 0.0, %v847
  %v849 = vpop.f32.mrb[0].mxu0
  %v850 = vadd.f32 0.0, %v849
  %851 = vmatprep.mubr.f32.mxu0 0.0
  %852 = vmatmul.mubr.f32.gmra.mrb[0].mxu0 %v631
  %v853 = vpop.f32.mrb[0].mxu0
  %v854 = vadd.f32 0.0, %v853
  %v855 = vpop.f32.mrb[0].mxu0
  %v856 = vadd.f32 0.0, %v855
  %857 = vmatprep.mubr.f32.mxu0 0.0
  %858 = vmatmul.mubr.f32.gmra.mrb[0].mxu0 %v633
  %v859 = vpop.f32.mrb[0].mxu0
  %v860 = vadd.f32 0.0, %v859
  %v861 = vpop.f32.mrb[0].mxu0
  %v862 = vadd.f32 0.0, %v861
  %863 = vmatprep.mubr.f32.mxu0 0.0
  %864 = vmatmul.mubr.f32.gmra.mrb[0].mxu0 %v635
  %v865 = vpop.f32.mrb[0].mxu0
  %v866 = vadd.f32 0.0, %v865
  %v867 = vpop.f32.mrb[0].mxu0
  %v868 = vadd.f32 0.0, %v867
  %869 = vmatprep.mubr.f32.mxu0 0.0
  %870 = vmatmul.mubr.f32.gmra.mrb[0].mxu0 %v637
  %v871 = vpop.f32.mrb[0].mxu0
  %v872 = vadd.f32 0.0, %v871
  %v873 = vpop.f32.mrb[0].mxu0
  %v874 = vadd.f32 0.0, %v873
  %875 = vmatprep.mubr.f32.mxu0 0.0
  %876 = vmatmul.mubr.f32.gmra.mrb[0].mxu0 %v639
  %v877 = vpop.f32.mrb[0].mxu0
  %v878 = vadd.f32 0.0, %v877
  %v879 = vpop.f32.mrb[0].mxu0
  %v880 = vadd.f32 0.0, %v879
  %881 = vmatprep.mubr.f32.mxu0 0.0
  %882 = vmatmul.mubr.f32.gmra.mrb[0].mxu0 %v641
  %v883 = vpop.f32.mrb[0].mxu0
  %v884 = vadd.f32 0.0, %v883
  %v885 = vpop.f32.mrb[0].mxu0
  %v886 = vadd.f32 0.0, %v885
  %887 = vmatprep.mubr.f32.mxu0 0.0
  %888 = vmatmul.mubr.f32.gmra.mrb[0].mxu0 %v643
  %v889 = vpop.f32.mrb[0].mxu0
  %v890 = vadd.f32 0.0, %v889
  %v891 = vpop.f32.mrb[0].mxu0
  %v892 = vadd.f32 0.0, %v891
  %893 = vmatprep.mubr.f32.mxu0 0.0
  %894 = vmatmul.mubr.f32.gmra.mrb[0].mxu0 %v645
  %v895 = vpop.f32.mrb[0].mxu0
  %v896 = vadd.f32 0.0, %v895
  %v897 = vpop.f32.mrb[0].mxu0
  %v898 = vadd.f32 0.0, %v897
  %899 = vmatprep.mubr.f32.mxu0 0.0
  %900 = vmatmul.mubr.f32.gmra.mrb[0].mxu0 %v647
  %v901 = vpop.f32.mrb[0].mxu0
  %v902 = vadd.f32 0.0, %v901
  %v903 = vpop.f32.mrb[0].mxu0
  %v904 = vadd.f32 0.0, %v903
  %905 = vdwg.mxu0
  %v906 = vadd.f32 %v446, %v716
  %v907 = vadd.f32 %v447, %v718
  %v908 = vadd.f32 %v448, %v722
  %v909 = vadd.f32 %v449, %v724
  %v910 = vadd.f32 %v450, %v728
  %v911 = vadd.f32 %v451, %v730
  %v912 = vadd.f32 %v452, %v734
  %v913 = vadd.f32 %v453, %v736
  %v914 = vadd.f32 %v454, %v740
  %v915 = vadd.f32 %v455, %v742
  %v916 = vadd.f32 %v456, %v746
  %v917 = vadd.f32 %v457, %v748
  %v918 = vadd.f32 %v458, %v752
  %v919 = vadd.f32 %v459, %v754
  %v920 = vadd.f32 %v460, %v758
  %v921 = vadd.f32 %v461, %v760
  %v922 = vadd.f32 %v462, %v764
  %v923 = vadd.f32 %v463, %v766
  %v924 = vadd.f32 %v464, %v770
  %v925 = vadd.f32 %v465, %v772
  %v926 = vadd.f32 %v466, %v776
  %v927 = vadd.f32 %v467, %v778
  %v928 = vadd.f32 %v468, %v782
  %v929 = vadd.f32 %v469, %v784
  %v930 = vadd.f32 %v470, %v788
  %v931 = vadd.f32 %v471, %v790
  %v932 = vadd.f32 %v472, %v794
  %v933 = vadd.f32 %v473, %v796
  %v934 = vadd.f32 %v474, %v800
  %v935 = vadd.f32 %v475, %v802
  %v936 = vadd.f32 %v476, %v806
  %v937 = vadd.f32 %v477, %v808
  %v938 = vadd.f32 %v478, %v812
  %v939 = vadd.f32 %v479, %v814
  %v940 = vadd.f32 %v480, %v818
  %v941 = vadd.f32 %v481, %v820
  %v942 = vadd.f32 %v482, %v824
  %v943 = vadd.f32 %v483, %v826
  %v944 = vadd.f32 %v484, %v830
  %v945 = vadd.f32 %v485, %v832
  %v946 = vadd.f32 %v486, %v836
  %v947 = vadd.f32 %v487, %v838
  %v948 = vadd.f32 %v488, %v842
  %v949 = vadd.f32 %v489, %v844
  %v950 = vadd.f32 %v490, %v848
  %v951 = vadd.f32 %v491, %v850
  %v952 = vadd.f32 %v492, %v854
  %v953 = vadd.f32 %v493, %v856
  %v954 = vadd.f32 %v494, %v860
  %v955 = vadd.f32 %v495, %v862
  %v956 = vadd.f32 %v496, %v866
  %v957 = vadd.f32 %v497, %v868
  %v958 = vadd.f32 %v498, %v872
  %v959 = vadd.f32 %v499, %v874
  %v960 = vadd.f32 %v500, %v878
  %v961 = vadd.f32 %v501, %v880
  %v962 = vadd.f32 %v502, %v884
  %v963 = vadd.f32 %v503, %v886
  %v964 = vadd.f32 %v504, %v890
  %v965 = vadd.f32 %v505, %v892
  %v966 = vadd.f32 %v506, %v896
  %v967 = vadd.f32 %v507, %v898
  %v968 = vadd.f32 %v508, %v902
  %v969 = vadd.f32 %v509, %v904
  %v970 = vld [vmem:[%s1 + $0x80] sm:$0xff]
  %v971 = vld [vmem:[%s1 + $0x88] sm:$0xff]
  %v972 = vld [vmem:[%s1 + $0x90] sm:$0xff]
  %v973 = vld [vmem:[%s1 + $0x98] sm:$0xff]
  %v974 = vld [vmem:[%s1 + $0xa0] sm:$0xff]
  %v975 = vld [vmem:[%s1 + $0xa8] sm:$0xff]
  %v976 = vld [vmem:[%s1 + $0xb0] sm:$0xff]
  %v977 = vld [vmem:[%s1 + $0xb8] sm:$0xff]
  %vm978 = vcmask 1045504
  %v979 = vrot.slane %v40, 2
  %v980 = vrot.slane %v41, 2
  %v981 = vsel %vm978, %v979, %v980
  %v982 = vrot.slane %v42, 2
  %v983 = vsel %vm978, %v980, %v982
  %v984 = vrot.slane %v43, 2
  %v985 = vsel %vm978, %v982, %v984
  %v986 = vrot.slane %v44, 2
  %v987 = vsel %vm978, %v984, %v986
  %v988 = vrot.slane %v45, 2
  %v989 = vsel %vm978, %v986, %v988
  %v990 = vrot.slane %v46, 2
  %v991 = vsel %vm978, %v988, %v990
  %v992 = vrot.slane %v47, 2
  %v993 = vsel %vm978, %v990, %v992
  %v994 = vrot.slane %v48, 2
  %v995 = vsel %vm978, %v992, %v994
  %v996 = vrot.slane %v49, 2
  %v997 = vsel %vm978, %v994, %v996
  %v998 = vrot.slane %v50, 2
  %v999 = vsel %vm978, %v996, %v998
  %v1000 = vrot.slane %v51, 2
  %v1001 = vsel %vm978, %v998, %v1000
  %v1002 = vrot.slane %v52, 2
  %v1003 = vsel %vm978, %v1000, %v1002
  %v1004 = vrot.slane %v53, 2
  %v1005 = vsel %vm978, %v1002, %v1004
  %v1006 = vrot.slane %v54, 2
  %v1007 = vsel %vm978, %v1004, %v1006
  %v1008 = vrot.slane %v55, 2
  %v1009 = vsel %vm978, %v1006, %v1008
  %v1010 = vrot.slane %v56, 2
  %v1011 = vsel %vm978, %v1008, %v1010
  %v1012 = vrot.slane %v57, 2
  %v1013 = vsel %vm978, %v1010, %v1012
  %v1014 = vrot.slane %v58, 2
  %v1015 = vsel %vm978, %v1012, %v1014
  %v1016 = vrot.slane %v59, 2
  %v1017 = vsel %vm978, %v1014, %v1016
  %v1018 = vrot.slane %v60, 2
  %v1019 = vsel %vm978, %v1016, %v1018
  %v1020 = vrot.slane %v61, 2
  %v1021 = vsel %vm978, %v1018, %v1020
  %v1022 = vrot.slane %v62, 2
  %v1023 = vsel %vm978, %v1020, %v1022
  %v1024 = vrot.slane %v63, 2
  %v1025 = vsel %vm978, %v1022, %v1024
  %v1026 = vrot.slane %v64, 2
  %v1027 = vsel %vm978, %v1024, %v1026
  %v1028 = vrot.slane %v65, 2
  %v1029 = vsel %vm978, %v1026, %v1028
  %v1030 = vrot.slane %v66, 2
  %v1031 = vsel %vm978, %v1028, %v1030
  %v1032 = vrot.slane %v67, 2
  %v1033 = vsel %vm978, %v1030, %v1032
  %v1034 = vrot.slane %v68, 2
  %v1035 = vsel %vm978, %v1032, %v1034
  %v1036 = vrot.slane %v69, 2
  %v1037 = vsel %vm978, %v1034, %v1036
  %v1038 = vrot.slane %v70, 2
  %v1039 = vsel %vm978, %v1036, %v1038
  %v1040 = vrot.slane %v71, 2
  %v1041 = vsel %vm978, %v1038, %v1040
  %v1042 = vrot.slane 0.0, 2
  %v1043 = vsel %vm978, %v1040, %v1042
  %v1044 = vsel %vm81, %v981, 0
  %v1046 = vsel %vm81, %v983, 0
  %v1048 = vsel %vm81, %v985, 0
  %v1050 = vsel %vm81, %v987, 0
  %v1052 = vsel %vm81, %v989, 0
  %v1054 = vsel %vm81, %v991, 0
  %v1056 = vsel %vm81, %v993, 0
  %v1058 = vsel %vm81, %v995, 0
  %v1060 = vsel %vm81, %v997, 0
  %v1062 = vsel %vm81, %v999, 0
  %v1064 = vsel %vm81, %v1001, 0
  %v1066 = vsel %vm81, %v1003, 0
  %v1068 = vsel %vm81, %v1005, 0
  %v1070 = vsel %vm81, %v1007, 0
  %v1072 = vsel %vm81, %v1009, 0
  %v1074 = vsel %vm81, %v1011, 0
  %v1076 = vsel %vm81, %v1013, 0
  %v1078 = vsel %vm81, %v1015, 0
  %v1080 = vsel %vm81, %v1017, 0
  %v1082 = vsel %vm81, %v1019, 0
  %v1084 = vsel %vm81, %v1021, 0
  %v1086 = vsel %vm81, %v1023, 0
  %v1088 = vsel %vm81, %v1025, 0
  %v1090 = vsel %vm81, %v1027, 0
  %v1092 = vsel %vm81, %v1029, 0
  %v1094 = vsel %vm81, %v1031, 0
  %v1096 = vsel %vm81, %v1033, 0
  %v1098 = vsel %vm81, %v1035, 0
  %v1100 = vsel %vm81, %v1037, 0
  %v1102 = vsel %vm81, %v1039, 0
  %v1104 = vsel %vm81, %v1041, 0
  %v1106 = vsel %vm81, %v1043, 0
  %1108 = vmatprep.subr.mxu0 %v971
  %1109 = vmatpush1.msra.mxu0 %v970
  %1110 = vmatprep.subr.mxu0 %v973
  %1111 = vmatpush1.msra.mxu0 %v972
  %1112 = vmatprep.subr.mxu0 %v975
  %1113 = vmatpush1.msra.mxu0 %v974
  %1114 = vmatprep.subr.mxu0 %v977
  %1115 = vmatpush1.msra.mxu0 %v976
  %1116 = vmatprep.subr.mxu0 0.0
  %1117 = vmatpush1.msra.mxu0 0.0
  %1118 = vmatprep.subr.mxu0 0.0
  %1119 = vmatpush1.msra.mxu0 0.0
  %1120 = vmatprep.subr.mxu0 0.0
  %1121 = vmatpush1.msra.mxu0 0.0
  %1122 = vmatprep.subr.mxu0 0.0
  %1123 = vmatpush1.msra.mxu0 0.0
  %1124 = vmatprep.subr.mxu0 0.0
  %1125 = vmatpush1.msra.mxu0 0.0
  %1126 = vmatprep.subr.mxu0 0.0
  %1127 = vmatpush1.msra.mxu0 0.0
  %1128 = vmatprep.subr.mxu0 0.0
  %1129 = vmatpush1.msra.mxu0 0.0
  %1130 = vmatprep.subr.mxu0 0.0
  %1131 = vmatpush1.msra.mxu0 0.0
  %1132 = vmatprep.subr.mxu0 0.0
  %1133 = vmatpush1.msra.mxu0 0.0
  %1134 = vmatprep.subr.mxu0 0.0
  %1135 = vmatpush1.msra.mxu0 0.0
  %1136 = vmatprep.subr.mxu0 0.0
  %1137 = vmatpush1.msra.mxu0 0.0
  %1138 = vmatprep.subr.mxu0 0.0
  %1139 = vmatpush1.msra.mxu0 0.0
  %1140 = vmatprep.subr.mxu0 0.0
  %1141 = vmatpush1.msra.mxu0 0.0
  %1142 = vmatprep.subr.mxu0 0.0
  %1143 = vmatpush1.msra.mxu0 0.0
  %1144 = vmatprep.subr.mxu0 0.0
  %1145 = vmatpush1.msra.mxu0 0.0
  %1146 = vmatprep.subr.mxu0 0.0
  %1147 = vmatpush1.msra.mxu0 0.0
  %1148 = vmatprep.subr.mxu0 0.0
  %1149 = vmatpush1.msra.mxu0 0.0
  %1150 = vmatprep.subr.mxu0 0.0
  %1151 = vmatpush1.msra.mxu0 0.0
  %1152 = vmatprep.subr.mxu0 0.0
  %1153 = vmatpush1.msra.mxu0 0.0
  %1154 = vmatprep.subr.mxu0 0.0
  %1155 = vmatpush1.msra.mxu0 0.0
  %1156 = vmatprep.subr.mxu0 0.0
  %1157 = vmatpush1.msra.mxu0 0.0
  %1158 = vmatprep.subr.mxu0 0.0
  %1159 = vmatpush1.msra.mxu0 0.0
  %1160 = vmatprep.subr.mxu0 0.0
  %1161 = vmatpush1.msra.mxu0 0.0
  %1162 = vmatprep.subr.mxu0 0.0
  %1163 = vmatpush1.msra.mxu0 0.0
  %1164 = vmatprep.subr.mxu0 0.0
  %1165 = vmatpush1.msra.mxu0 0.0
  %1166 = vmatprep.subr.mxu0 0.0
  %1167 = vmatpush1.msra.mxu0 0.0
  %1168 = vmatprep.subr.mxu0 0.0
  %1169 = vmatpush1.msra.mxu0 0.0
  %1170 = vmatprep.subr.mxu0 0.0
  %1171 = vmatpush1.msra.mxu0 0.0
  %1172 = vmatprep.mubr.f32.mxu0 0.0
  %1173 = vmatmul.mubr.f32.gmra.mrb[0].mxu0 %v1044
  %v1174 = vpop.f32.mrb[0].mxu0
  %v1175 = vadd.f32 0.0, %v1174
  %v1176 = vpop.f32.mrb[0].mxu0
  %v1177 = vadd.f32 0.0, %v1176
  %1178 = vmatprep.mubr.f32.mxu0 0.0
  %1179 = vmatmul.mubr.f32.gmra.mrb[0].mxu0 %v1046
  %v1180 = vpop.f32.mrb[0].mxu0
  %v1181 = vadd.f32 0.0, %v1180
  %v1182 = vpop.f32.mrb[0].mxu0
  %v1183 = vadd.f32 0.0, %v1182
  %1184 = vmatprep.mubr.f32.mxu0 0.0
  %1185 = vmatmul.mubr.f32.gmra.mrb[0].mxu0 %v1048
  %v1186 = vpop.f32.mrb[0].mxu0
  %v1187 = vadd.f32 0.0, %v1186
  %v1188 = vpop.f32.mrb[0].mxu0
  %v1189 = vadd.f32 0.0, %v1188
  %1190 = vmatprep.mubr.f32.mxu0 0.0
  %1191 = vmatmul.mubr.f32.gmra.mrb[0].mxu0 %v1050
  %v1192 = vpop.f32.mrb[0].mxu0
  %v1193 = vadd.f32 0.0, %v1192
  %v1194 = vpop.f32.mrb[0].mxu0
  %v1195 = vadd.f32 0.0, %v1194
  %1196 = vmatprep.mubr.f32.mxu0 0.0
  %1197 = vmatmul.mubr.f32.gmra.mrb[0].mxu0 %v1052
  %v1198 = vpop.f32.mrb[0].mxu0
  %v1199 = vadd.f32 0.0, %v1198
  %v1200 = vpop.f32.mrb[0].mxu0
  %v1201 = vadd.f32 0.0, %v1200
  %1202 = vmatprep.mubr.f32.mxu0 0.0
  %1203 = vmatmul.mubr.f32.gmra.mrb[0].mxu0 %v1054
  %v1204 = vpop.f32.mrb[0].mxu0
  %v1205 = vadd.f32 0.0, %v1204
  %v1206 = vpop.f32.mrb[0].mxu0
  %v1207 = vadd.f32 0.0, %v1206
  %1208 = vmatprep.mubr.f32.mxu0 0.0
  %1209 = vmatmul.mubr.f32.gmra.mrb[0].mxu0 %v1056
  %v1210 = vpop.f32.mrb[0].mxu0
  %v1211 = vadd.f32 0.0, %v1210
  %v1212 = vpop.f32.mrb[0].mxu0
  %v1213 = vadd.f32 0.0, %v1212
  %1214 = vmatprep.mubr.f32.mxu0 0.0
  %1215 = vmatmul.mubr.f32.gmra.mrb[0].mxu0 %v1058
  %v1216 = vpop.f32.mrb[0].mxu0
  %v1217 = vadd.f32 0.0, %v1216
  %v1218 = vpop.f32.mrb[0].mxu0
  %v1219 = vadd.f32 0.0, %v1218
  %1220 = vmatprep.mubr.f32.mxu0 0.0
  %1221 = vmatmul.mubr.f32.gmra.mrb[0].mxu0 %v1060
  %v1222 = vpop.f32.mrb[0].mxu0
  %v1223 = vadd.f32 0.0, %v1222
  %v1224 = vpop.f32.mrb[0].mxu0
  %v1225 = vadd.f32 0.0, %v1224
  %1226 = vmatprep.mubr.f32.mxu0 0.0
  %1227 = vmatmul.mubr.f32.gmra.mrb[0].mxu0 %v1062
  %v1228 = vpop.f32.mrb[0].mxu0
  %v1229 = vadd.f32 0.0, %v1228
  %v1230 = vpop.f32.mrb[0].mxu0
  %v1231 = vadd.f32 0.0, %v1230
  %1232 = vmatprep.mubr.f32.mxu0 0.0
  %1233 = vmatmul.mubr.f32.gmra.mrb[0].mxu0 %v1064
  %v1234 = vpop.f32.mrb[0].mxu0
  %v1235 = vadd.f32 0.0, %v1234
  %v1236 = vpop.f32.mrb[0].mxu0
  %v1237 = vadd.f32 0.0, %v1236
  %1238 = vmatprep.mubr.f32.mxu0 0.0
  %1239 = vmatmul.mubr.f32.gmra.mrb[0].mxu0 %v1066
  %v1240 = vpop.f32.mrb[0].mxu0
  %v1241 = vadd.f32 0.0, %v1240
  %v1242 = vpop.f32.mrb[0].mxu0
  %v1243 = vadd.f32 0.0, %v1242
  %1244 = vmatprep.mubr.f32.mxu0 0.0
  %1245 = vmatmul.mubr.f32.gmra.mrb[0].mxu0 %v1068
  %v1246 = vpop.f32.mrb[0].mxu0
  %v1247 = vadd.f32 0.0, %v1246
  %v1248 = vpop.f32.mrb[0].mxu0
  %v1249 = vadd.f32 0.0, %v1248
  %1250 = vmatprep.mubr.f32.mxu0 0.0
  %1251 = vmatmul.mubr.f32.gmra.mrb[0].mxu0 %v1070
  %v1252 = vpop.f32.mrb[0].mxu0
  %v1253 = vadd.f32 0.0, %v1252
  %v1254 = vpop.f32.mrb[0].mxu0
  %v1255 = vadd.f32 0.0, %v1254
  %1256 = vmatprep.mubr.f32.mxu0 0.0
  %1257 = vmatmul.mubr.f32.gmra.mrb[0].mxu0 %v1072
  %v1258 = vpop.f32.mrb[0].mxu0
  %v1259 = vadd.f32 0.0, %v1258
  %v1260 = vpop.f32.mrb[0].mxu0
  %v1261 = vadd.f32 0.0, %v1260
  %1262 = vmatprep.mubr.f32.mxu0 0.0
  %1263 = vmatmul.mubr.f32.gmra.mrb[0].mxu0 %v1074
  %v1264 = vpop.f32.mrb[0].mxu0
  %v1265 = vadd.f32 0.0, %v1264
  %v1266 = vpop.f32.mrb[0].mxu0
  %v1267 = vadd.f32 0.0, %v1266
  %1268 = vmatprep.mubr.f32.mxu0 0.0
  %1269 = vmatmul.mubr.f32.gmra.mrb[0].mxu0 %v1076
  %v1270 = vpop.f32.mrb[0].mxu0
  %v1271 = vadd.f32 0.0, %v1270
  %v1272 = vpop.f32.mrb[0].mxu0
  %v1273 = vadd.f32 0.0, %v1272
  %1274 = vmatprep.mubr.f32.mxu0 0.0
  %1275 = vmatmul.mubr.f32.gmra.mrb[0].mxu0 %v1078
  %v1276 = vpop.f32.mrb[0].mxu0
  %v1277 = vadd.f32 0.0, %v1276
  %v1278 = vpop.f32.mrb[0].mxu0
  %v1279 = vadd.f32 0.0, %v1278
  %1280 = vmatprep.mubr.f32.mxu0 0.0
  %1281 = vmatmul.mubr.f32.gmra.mrb[0].mxu0 %v1080
  %v1282 = vpop.f32.mrb[0].mxu0
  %v1283 = vadd.f32 0.0, %v1282
  %v1284 = vpop.f32.mrb[0].mxu0
  %v1285 = vadd.f32 0.0, %v1284
  %1286 = vmatprep.mubr.f32.mxu0 0.0
  %1287 = vmatmul.mubr.f32.gmra.mrb[0].mxu0 %v1082
  %v1288 = vpop.f32.mrb[0].mxu0
  %v1289 = vadd.f32 0.0, %v1288
  %v1290 = vpop.f32.mrb[0].mxu0
  %v1291 = vadd.f32 0.0, %v1290
  %1292 = vmatprep.mubr.f32.mxu0 0.0
  %1293 = vmatmul.mubr.f32.gmra.mrb[0].mxu0 %v1084
  %v1294 = vpop.f32.mrb[0].mxu0
  %v1295 = vadd.f32 0.0, %v1294
  %v1296 = vpop.f32.mrb[0].mxu0
  %v1297 = vadd.f32 0.0, %v1296
  %1298 = vmatprep.mubr.f32.mxu0 0.0
  %1299 = vmatmul.mubr.f32.gmra.mrb[0].mxu0 %v1086
  %v1300 = vpop.f32.mrb[0].mxu0
  %v1301 = vadd.f32 0.0, %v1300
  %v1302 = vpop.f32.mrb[0].mxu0
  %v1303 = vadd.f32 0.0, %v1302
  %1304 = vmatprep.mubr.f32.mxu0 0.0
  %1305 = vmatmul.mubr.f32.gmra.mrb[0].mxu0 %v1088
  %v1306 = vpop.f32.mrb[0].mxu0
  %v1307 = vadd.f32 0.0, %v1306
  %v1308 = vpop.f32.mrb[0].mxu0
  %v1309 = vadd.f32 0.0, %v1308
  %1310 = vmatprep.mubr.f32.mxu0 0.0
  %1311 = vmatmul.mubr.f32.gmra.mrb[0].mxu0 %v1090
  %v1312 = vpop.f32.mrb[0].mxu0
  %v1313 = vadd.f32 0.0, %v1312
  %v1314 = vpop.f32.mrb[0].mxu0
  %v1315 = vadd.f32 0.0, %v1314
  %1316 = vmatprep.mubr.f32.mxu0 0.0
  %1317 = vmatmul.mubr.f32.gmra.mrb[0].mxu0 %v1092
  %v1318 = vpop.f32.mrb[0].mxu0
  %v1319 = vadd.f32 0.0, %v1318
  %v1320 = vpop.f32.mrb[0].mxu0
  %v1321 = vadd.f32 0.0, %v1320
  %1322 = vmatprep.mubr.f32.mxu0 0.0
  %1323 = vmatmul.mubr.f32.gmra.mrb[0].mxu0 %v1094
  %v1324 = vpop.f32.mrb[0].mxu0
  %v1325 = vadd.f32 0.0, %v1324
  %v1326 = vpop.f32.mrb[0].mxu0
  %v1327 = vadd.f32 0.0, %v1326
  %1328 = vmatprep.mubr.f32.mxu0 0.0
  %1329 = vmatmul.mubr.f32.gmra.mrb[0].mxu0 %v1096
  %v1330 = vpop.f32.mrb[0].mxu0
  %v1331 = vadd.f32 0.0, %v1330
  %v1332 = vpop.f32.mrb[0].mxu0
  %v1333 = vadd.f32 0.0, %v1332
  %1334 = vmatprep.mubr.f32.mxu0 0.0
  %1335 = vmatmul.mubr.f32.gmra.mrb[0].mxu0 %v1098
  %v1336 = vpop.f32.mrb[0].mxu0
  %v1337 = vadd.f32 0.0, %v1336
  %v1338 = vpop.f32.mrb[0].mxu0
  %v1339 = vadd.f32 0.0, %v1338
  %1340 = vmatprep.mubr.f32.mxu0 0.0
  %1341 = vmatmul.mubr.f32.gmra.mrb[0].mxu0 %v1100
  %v1342 = vpop.f32.mrb[0].mxu0
  %v1343 = vadd.f32 0.0, %v1342
  %v1344 = vpop.f32.mrb[0].mxu0
  %v1345 = vadd.f32 0.0, %v1344
  %1346 = vmatprep.mubr.f32.mxu0 0.0
  %1347 = vmatmul.mubr.f32.gmra.mrb[0].mxu0 %v1102
  %v1348 = vpop.f32.mrb[0].mxu0
  %v1349 = vadd.f32 0.0, %v1348
  %v1350 = vpop.f32.mrb[0].mxu0
  %v1351 = vadd.f32 0.0, %v1350
  %1352 = vmatprep.mubr.f32.mxu0 0.0
  %1353 = vmatmul.mubr.f32.gmra.mrb[0].mxu0 %v1104
  %v1354 = vpop.f32.mrb[0].mxu0
  %v1355 = vadd.f32 0.0, %v1354
  %v1356 = vpop.f32.mrb[0].mxu0
  %v1357 = vadd.f32 0.0, %v1356
  %1358 = vmatprep.mubr.f32.mxu0 0.0
  %1359 = vmatmul.mubr.f32.gmra.mrb[0].mxu0 %v1106
  %v1360 = vpop.f32.mrb[0].mxu0
  %v1361 = vadd.f32 0.0, %v1360
  %v1362 = vpop.f32.mrb[0].mxu0
  %v1363 = vadd.f32 0.0, %v1362
  %1364 = vdwg.mxu0
  %v1365 = vadd.f32 %v906, %v1175
  %v1366 = vadd.f32 %v907, %v1177
  %v1367 = vadd.f32 %v908, %v1181
  %v1368 = vadd.f32 %v909, %v1183
  %v1369 = vadd.f32 %v910, %v1187
  %v1370 = vadd.f32 %v911, %v1189
  %v1371 = vadd.f32 %v912, %v1193
  %v1372 = vadd.f32 %v913, %v1195
  %v1373 = vadd.f32 %v914, %v1199
  %v1374 = vadd.f32 %v915, %v1201
  %v1375 = vadd.f32 %v916, %v1205
  %v1376 = vadd.f32 %v917, %v1207
  %v1377 = vadd.f32 %v918, %v1211
  %v1378 = vadd.f32 %v919, %v1213
  %v1379 = vadd.f32 %v920, %v1217
  %v1380 = vadd.f32 %v921, %v1219
  %v1381 = vadd.f32 %v922, %v1223
  %v1382 = vadd.f32 %v923, %v1225
  %v1383 = vadd.f32 %v924, %v1229
  %v1384 = vadd.f32 %v925, %v1231
  %v1385 = vadd.f32 %v926, %v1235
  %v1386 = vadd.f32 %v927, %v1237
  %v1387 = vadd.f32 %v928, %v1241
  %v1388 = vadd.f32 %v929, %v1243
  %v1389 = vadd.f32 %v930, %v1247
  %v1390 = vadd.f32 %v931, %v1249
  %v1391 = vadd.f32 %v932, %v1253
  %v1392 = vadd.f32 %v933, %v1255
  %v1393 = vadd.f32 %v934, %v1259
  %v1394 = vadd.f32 %v935, %v1261
  %v1395 = vadd.f32 %v936, %v1265
  %v1396 = vadd.f32 %v937, %v1267
  %v1397 = vadd.f32 %v938, %v1271
  %v1398 = vadd.f32 %v939, %v1273
  %v1399 = vadd.f32 %v940, %v1277
  %v1400 = vadd.f32 %v941, %v1279
  %v1401 = vadd.f32 %v942, %v1283
  %v1402 = vadd.f32 %v943, %v1285
  %v1403 = vadd.f32 %v944, %v1289
  %v1404 = vadd.f32 %v945, %v1291
  %v1405 = vadd.f32 %v946, %v1295
  %v1406 = vadd.f32 %v947, %v1297
  %v1407 = vadd.f32 %v948, %v1301
  %v1408 = vadd.f32 %v949, %v1303
  %v1409 = vadd.f32 %v950, %v1307
  %v1410 = vadd.f32 %v951, %v1309
  %v1411 = vadd.f32 %v952, %v1313
  %v1412 = vadd.f32 %v953, %v1315
  %v1413 = vadd.f32 %v954, %v1319
  %v1414 = vadd.f32 %v955, %v1321
  %v1415 = vadd.f32 %v956, %v1325
  %v1416 = vadd.f32 %v957, %v1327
  %v1417 = vadd.f32 %v958, %v1331
  %v1418 = vadd.f32 %v959, %v1333
  %v1419 = vadd.f32 %v960, %v1337
  %v1420 = vadd.f32 %v961, %v1339
  %v1421 = vadd.f32 %v962, %v1343
  %v1422 = vadd.f32 %v963, %v1345
  %v1423 = vadd.f32 %v964, %v1349
  %v1424 = vadd.f32 %v965, %v1351
  %v1425 = vadd.f32 %v966, %v1355
  %v1426 = vadd.f32 %v967, %v1357
  %v1427 = vadd.f32 %v968, %v1361
  %v1428 = vadd.f32 %v969, %v1363
  %v1429 = vld [vmem:[%s1 + $0xc0] sm:$0xff]
  %v1430 = vld [vmem:[%s1 + $0xc8] sm:$0xff]
  %v1431 = vld [vmem:[%s1 + $0xd0] sm:$0xff]
  %v1432 = vld [vmem:[%s1 + $0xd8] sm:$0xff]
  %v1433 = vld [vmem:[%s1 + $0xe0] sm:$0xff]
  %v1434 = vld [vmem:[%s1 + $0xe8] sm:$0xff]
  %v1435 = vld [vmem:[%s1 + $0xf0] sm:$0xff]
  %v1436 = vld [vmem:[%s1 + $0xf8] sm:$0xff]
  %vm1437 = vcmask 1044480
  %v1438 = vrot.slane %v40, 3
  %v1439 = vrot.slane %v41, 3
  %v1440 = vsel %vm1437, %v1438, %v1439
  %v1441 = vrot.slane %v42, 3
  %v1442 = vsel %vm1437, %v1439, %v1441
  %v1443 = vrot.slane %v43, 3
  %v1444 = vsel %vm1437, %v1441, %v1443
  %v1445 = vrot.slane %v44, 3
  %v1446 = vsel %vm1437, %v1443, %v1445
  %v1447 = vrot.slane %v45, 3
  %v1448 = vsel %vm1437, %v1445, %v1447
  %v1449 = vrot.slane %v46, 3
  %v1450 = vsel %vm1437, %v1447, %v1449
  %v1451 = vrot.slane %v47, 3
  %v1452 = vsel %vm1437, %v1449, %v1451
  %v1453 = vrot.slane %v48, 3
  %v1454 = vsel %vm1437, %v1451, %v1453
  %v1455 = vrot.slane %v49, 3
  %v1456 = vsel %vm1437, %v1453, %v1455
  %v1457 = vrot.slane %v50, 3
  %v1458 = vsel %vm1437, %v1455, %v1457
  %v1459 = vrot.slane %v51, 3
  %v1460 = vsel %vm1437, %v1457, %v1459
  %v1461 = vrot.slane %v52, 3
  %v1462 = vsel %vm1437, %v1459, %v1461
  %v1463 = vrot.slane %v53, 3
  %v1464 = vsel %vm1437, %v1461, %v1463
  %v1465 = vrot.slane %v54, 3
  %v1466 = vsel %vm1437, %v1463, %v1465
  %v1467 = vrot.slane %v55, 3
  %v1468 = vsel %vm1437, %v1465, %v1467
  %v1469 = vrot.slane %v56, 3
  %v1470 = vsel %vm1437, %v1467, %v1469
  %v1471 = vrot.slane %v57, 3
  %v1472 = vsel %vm1437, %v1469, %v1471
  %v1473 = vrot.slane %v58, 3
  %v1474 = vsel %vm1437, %v1471, %v1473
  %v1475 = vrot.slane %v59, 3
  %v1476 = vsel %vm1437, %v1473, %v1475
  %v1477 = vrot.slane %v60, 3
  %v1478 = vsel %vm1437, %v1475, %v1477
  %v1479 = vrot.slane %v61, 3
  %v1480 = vsel %vm1437, %v1477, %v1479
  %v1481 = vrot.slane %v62, 3
  %v1482 = vsel %vm1437, %v1479, %v1481
  %v1483 = vrot.slane %v63, 3
  %v1484 = vsel %vm1437, %v1481, %v1483
  %v1485 = vrot.slane %v64, 3
  %v1486 = vsel %vm1437, %v1483, %v1485
  %v1487 = vrot.slane %v65, 3
  %v1488 = vsel %vm1437, %v1485, %v1487
  %v1489 = vrot.slane %v66, 3
  %v1490 = vsel %vm1437, %v1487, %v1489
  %v1491 = vrot.slane %v67, 3
  %v1492 = vsel %vm1437, %v1489, %v1491
  %v1493 = vrot.slane %v68, 3
  %v1494 = vsel %vm1437, %v1491, %v1493
  %v1495 = vrot.slane %v69, 3
  %v1496 = vsel %vm1437, %v1493, %v1495
  %v1497 = vrot.slane %v70, 3
  %v1498 = vsel %vm1437, %v1495, %v1497
  %v1499 = vrot.slane %v71, 3
  %v1500 = vsel %vm1437, %v1497, %v1499
  %v1501 = vrot.slane 0.0, 3
  %v1502 = vsel %vm1437, %v1499, %v1501
  %v1503 = vsel %vm81, %v1440, 0
  %v1505 = vsel %vm81, %v1442, 0
  %v1507 = vsel %vm81, %v1444, 0
  %v1509 = vsel %vm81, %v1446, 0
  %v1511 = vsel %vm81, %v1448, 0
  %v1513 = vsel %vm81, %v1450, 0
  %v1515 = vsel %vm81, %v1452, 0
  %v1517 = vsel %vm81, %v1454, 0
  %v1519 = vsel %vm81, %v1456, 0
  %v1521 = vsel %vm81, %v1458, 0
  %v1523 = vsel %vm81, %v1460, 0
  %v1525 = vsel %vm81, %v1462, 0
  %v1527 = vsel %vm81, %v1464, 0
  %v1529 = vsel %vm81, %v1466, 0
  %v1531 = vsel %vm81, %v1468, 0
  %v1533 = vsel %vm81, %v1470, 0
  %v1535 = vsel %vm81, %v1472, 0
  %v1537 = vsel %vm81, %v1474, 0
  %v1539 = vsel %vm81, %v1476, 0
  %v1541 = vsel %vm81, %v1478, 0
  %v1543 = vsel %vm81, %v1480, 0
  %v1545 = vsel %vm81, %v1482, 0
  %v1547 = vsel %vm81, %v1484, 0
  %v1549 = vsel %vm81, %v1486, 0
  %v1551 = vsel %vm81, %v1488, 0
  %v1553 = vsel %vm81, %v1490, 0
  %v1555 = vsel %vm81, %v1492, 0
  %v1557 = vsel %vm81, %v1494, 0
  %v1559 = vsel %vm81, %v1496, 0
  %v1561 = vsel %vm81, %v1498, 0
  %v1563 = vsel %vm81, %v1500, 0
  %v1565 = vsel %vm81, %v1502, 0
  %1567 = vmatprep.subr.mxu0 %v1430
  %1568 = vmatpush1.msra.mxu0 %v1429
  %1569 = vmatprep.subr.mxu0 %v1432
  %1570 = vmatpush1.msra.mxu0 %v1431
  %1571 = vmatprep.subr.mxu0 %v1434
  %1572 = vmatpush1.msra.mxu0 %v1433
  %1573 = vmatprep.subr.mxu0 %v1436
  %1574 = vmatpush1.msra.mxu0 %v1435
  %1575 = vmatprep.subr.mxu0 0.0
  %1576 = vmatpush1.msra.mxu0 0.0
  %1577 = vmatprep.subr.mxu0 0.0
  %1578 = vmatpush1.msra.mxu0 0.0
  %1579 = vmatprep.subr.mxu0 0.0
  %1580 = vmatpush1.msra.mxu0 0.0
  %1581 = vmatprep.subr.mxu0 0.0
  %1582 = vmatpush1.msra.mxu0 0.0
  %1583 = vmatprep.subr.mxu0 0.0
  %1584 = vmatpush1.msra.mxu0 0.0
  %1585 = vmatprep.subr.mxu0 0.0
  %1586 = vmatpush1.msra.mxu0 0.0
  %1587 = vmatprep.subr.mxu0 0.0
  %1588 = vmatpush1.msra.mxu0 0.0
  %1589 = vmatprep.subr.mxu0 0.0
  %1590 = vmatpush1.msra.mxu0 0.0
  %1591 = vmatprep.subr.mxu0 0.0
  %1592 = vmatpush1.msra.mxu0 0.0
  %1593 = vmatprep.subr.mxu0 0.0
  %1594 = vmatpush1.msra.mxu0 0.0
  %1595 = vmatprep.subr.mxu0 0.0
  %1596 = vmatpush1.msra.mxu0 0.0
  %1597 = vmatprep.subr.mxu0 0.0
  %1598 = vmatpush1.msra.mxu0 0.0
  %1599 = vmatprep.subr.mxu0 0.0
  %1600 = vmatpush1.msra.mxu0 0.0
  %1601 = vmatprep.subr.mxu0 0.0
  %1602 = vmatpush1.msra.mxu0 0.0
  %1603 = vmatprep.subr.mxu0 0.0
  %1604 = vmatpush1.msra.mxu0 0.0
  %1605 = vmatprep.subr.mxu0 0.0
  %1606 = vmatpush1.msra.mxu0 0.0
  %1607 = vmatprep.subr.mxu0 0.0
  %1608 = vmatpush1.msra.mxu0 0.0
  %1609 = vmatprep.subr.mxu0 0.0
  %1610 = vmatpush1.msra.mxu0 0.0
  %1611 = vmatprep.subr.mxu0 0.0
  %1612 = vmatpush1.msra.mxu0 0.0
  %1613 = vmatprep.subr.mxu0 0.0
  %1614 = vmatpush1.msra.mxu0 0.0
  %1615 = vmatprep.subr.mxu0 0.0
  %1616 = vmatpush1.msra.mxu0 0.0
  %1617 = vmatprep.subr.mxu0 0.0
  %1618 = vmatpush1.msra.mxu0 0.0
  %1619 = vmatprep.subr.mxu0 0.0
  %1620 = vmatpush1.msra.mxu0 0.0
  %1621 = vmatprep.subr.mxu0 0.0
  %1622 = vmatpush1.msra.mxu0 0.0
  %1623 = vmatprep.subr.mxu0 0.0
  %1624 = vmatpush1.msra.mxu0 0.0
  %1625 = vmatprep.subr.mxu0 0.0
  %1626 = vmatpush1.msra.mxu0 0.0
  %1627 = vmatprep.subr.mxu0 0.0
  %1628 = vmatpush1.msra.mxu0 0.0
  %1629 = vmatprep.subr.mxu0 0.0
  %1630 = vmatpush1.msra.mxu0 0.0
  %1631 = vmatprep.mubr.f32.mxu0 0.0
  %1632 = vmatmul.mubr.f32.gmra.mrb[0].mxu0 %v1503
  %v1633 = vpop.f32.mrb[0].mxu0
  %v1634 = vadd.f32 0.0, %v1633
  %v1635 = vpop.f32.mrb[0].mxu0
  %v1636 = vadd.f32 0.0, %v1635
  %1637 = vmatprep.mubr.f32.mxu0 0.0
  %1638 = vmatmul.mubr.f32.gmra.mrb[0].mxu0 %v1505
  %v1639 = vpop.f32.mrb[0].mxu0
  %v1640 = vadd.f32 0.0, %v1639
  %v1641 = vpop.f32.mrb[0].mxu0
  %v1642 = vadd.f32 0.0, %v1641
  %1643 = vmatprep.mubr.f32.mxu0 0.0
  %1644 = vmatmul.mubr.f32.gmra.mrb[0].mxu0 %v1507
  %v1645 = vpop.f32.mrb[0].mxu0
  %v1646 = vadd.f32 0.0, %v1645
  %v1647 = vpop.f32.mrb[0].mxu0
  %v1648 = vadd.f32 0.0, %v1647
  %1649 = vmatprep.mubr.f32.mxu0 0.0
  %1650 = vmatmul.mubr.f32.gmra.mrb[0].mxu0 %v1509
  %v1651 = vpop.f32.mrb[0].mxu0
  %v1652 = vadd.f32 0.0, %v1651
  %v1653 = vpop.f32.mrb[0].mxu0
  %v1654 = vadd.f32 0.0, %v1653
  %1655 = vmatprep.mubr.f32.mxu0 0.0
  %1656 = vmatmul.mubr.f32.gmra.mrb[0].mxu0 %v1511
  %v1657 = vpop.f32.mrb[0].mxu0
  %v1658 = vadd.f32 0.0, %v1657
  %v1659 = vpop.f32.mrb[0].mxu0
  %v1660 = vadd.f32 0.0, %v1659
  %1661 = vmatprep.mubr.f32.mxu0 0.0
  %1662 = vmatmul.mubr.f32.gmra.mrb[0].mxu0 %v1513
  %v1663 = vpop.f32.mrb[0].mxu0
  %v1664 = vadd.f32 0.0, %v1663
  %v1665 = vpop.f32.mrb[0].mxu0
  %v1666 = vadd.f32 0.0, %v1665
  %1667 = vmatprep.mubr.f32.mxu0 0.0
  %1668 = vmatmul.mubr.f32.gmra.mrb[0].mxu0 %v1515
  %v1669 = vpop.f32.mrb[0].mxu0
  %v1670 = vadd.f32 0.0, %v1669
  %v1671 = vpop.f32.mrb[0].mxu0
  %v1672 = vadd.f32 0.0, %v1671
  %1673 = vmatprep.mubr.f32.mxu0 0.0
  %1674 = vmatmul.mubr.f32.gmra.mrb[0].mxu0 %v1517
  %v1675 = vpop.f32.mrb[0].mxu0
  %v1676 = vadd.f32 0.0, %v1675
  %v1677 = vpop.f32.mrb[0].mxu0
  %v1678 = vadd.f32 0.0, %v1677
  %1679 = vmatprep.mubr.f32.mxu0 0.0
  %1680 = vmatmul.mubr.f32.gmra.mrb[0].mxu0 %v1519
  %v1681 = vpop.f32.mrb[0].mxu0
  %v1682 = vadd.f32 0.0, %v1681
  %v1683 = vpop.f32.mrb[0].mxu0
  %v1684 = vadd.f32 0.0, %v1683
  %1685 = vmatprep.mubr.f32.mxu0 0.0
  %1686 = vmatmul.mubr.f32.gmra.mrb[0].mxu0 %v1521
  %v1687 = vpop.f32.mrb[0].mxu0
  %v1688 = vadd.f32 0.0, %v1687
  %v1689 = vpop.f32.mrb[0].mxu0
  %v1690 = vadd.f32 0.0, %v1689
  %1691 = vmatprep.mubr.f32.mxu0 0.0
  %1692 = vmatmul.mubr.f32.gmra.mrb[0].mxu0 %v1523
  %v1693 = vpop.f32.mrb[0].mxu0
  %v1694 = vadd.f32 0.0, %v1693
  %v1695 = vpop.f32.mrb[0].mxu0
  %v1696 = vadd.f32 0.0, %v1695
  %1697 = vmatprep.mubr.f32.mxu0 0.0
  %1698 = vmatmul.mubr.f32.gmra.mrb[0].mxu0 %v1525
  %v1699 = vpop.f32.mrb[0].mxu0
  %v1700 = vadd.f32 0.0, %v1699
  %v1701 = vpop.f32.mrb[0].mxu0
  %v1702 = vadd.f32 0.0, %v1701
  %1703 = vmatprep.mubr.f32.mxu0 0.0
  %1704 = vmatmul.mubr.f32.gmra.mrb[0].mxu0 %v1527
  %v1705 = vpop.f32.mrb[0].mxu0
  %v1706 = vadd.f32 0.0, %v1705
  %v1707 = vpop.f32.mrb[0].mxu0
  %v1708 = vadd.f32 0.0, %v1707
  %1709 = vmatprep.mubr.f32.mxu0 0.0
  %1710 = vmatmul.mubr.f32.gmra.mrb[0].mxu0 %v1529
  %v1711 = vpop.f32.mrb[0].mxu0
  %v1712 = vadd.f32 0.0, %v1711
  %v1713 = vpop.f32.mrb[0].mxu0
  %v1714 = vadd.f32 0.0, %v1713
  %1715 = vmatprep.mubr.f32.mxu0 0.0
  %1716 = vmatmul.mubr.f32.gmra.mrb[0].mxu0 %v1531
  %v1717 = vpop.f32.mrb[0].mxu0
  %v1718 = vadd.f32 0.0, %v1717
  %v1719 = vpop.f32.mrb[0].mxu0
  %v1720 = vadd.f32 0.0, %v1719
  %1721 = vmatprep.mubr.f32.mxu0 0.0
  %1722 = vmatmul.mubr.f32.gmra.mrb[0].mxu0 %v1533
  %v1723 = vpop.f32.mrb[0].mxu0
  %v1724 = vadd.f32 0.0, %v1723
  %v1725 = vpop.f32.mrb[0].mxu0
  %v1726 = vadd.f32 0.0, %v1725
  %1727 = vmatprep.mubr.f32.mxu0 0.0
  %1728 = vmatmul.mubr.f32.gmra.mrb[0].mxu0 %v1535
  %v1729 = vpop.f32.mrb[0].mxu0
  %v1730 = vadd.f32 0.0, %v1729
  %v1731 = vpop.f32.mrb[0].mxu0
  %v1732 = vadd.f32 0.0, %v1731
  %1733 = vmatprep.mubr.f32.mxu0 0.0
  %1734 = vmatmul.mubr.f32.gmra.mrb[0].mxu0 %v1537
  %v1735 = vpop.f32.mrb[0].mxu0
  %v1736 = vadd.f32 0.0, %v1735
  %v1737 = vpop.f32.mrb[0].mxu0
  %v1738 = vadd.f32 0.0, %v1737
  %1739 = vmatprep.mubr.f32.mxu0 0.0
  %1740 = vmatmul.mubr.f32.gmra.mrb[0].mxu0 %v1539
  %v1741 = vpop.f32.mrb[0].mxu0
  %v1742 = vadd.f32 0.0, %v1741
  %v1743 = vpop.f32.mrb[0].mxu0
  %v1744 = vadd.f32 0.0, %v1743
  %1745 = vmatprep.mubr.f32.mxu0 0.0
  %1746 = vmatmul.mubr.f32.gmra.mrb[0].mxu0 %v1541
  %v1747 = vpop.f32.mrb[0].mxu0
  %v1748 = vadd.f32 0.0, %v1747
  %v1749 = vpop.f32.mrb[0].mxu0
  %v1750 = vadd.f32 0.0, %v1749
  %1751 = vmatprep.mubr.f32.mxu0 0.0
  %1752 = vmatmul.mubr.f32.gmra.mrb[0].mxu0 %v1543
  %v1753 = vpop.f32.mrb[0].mxu0
  %v1754 = vadd.f32 0.0, %v1753
  %v1755 = vpop.f32.mrb[0].mxu0
  %v1756 = vadd.f32 0.0, %v1755
  %1757 = vmatprep.mubr.f32.mxu0 0.0
  %1758 = vmatmul.mubr.f32.gmra.mrb[0].mxu0 %v1545
  %v1759 = vpop.f32.mrb[0].mxu0
  %v1760 = vadd.f32 0.0, %v1759
  %v1761 = vpop.f32.mrb[0].mxu0
  %v1762 = vadd.f32 0.0, %v1761
  %1763 = vmatprep.mubr.f32.mxu0 0.0
  %1764 = vmatmul.mubr.f32.gmra.mrb[0].mxu0 %v1547
  %v1765 = vpop.f32.mrb[0].mxu0
  %v1766 = vadd.f32 0.0, %v1765
  %v1767 = vpop.f32.mrb[0].mxu0
  %v1768 = vadd.f32 0.0, %v1767
  %1769 = vmatprep.mubr.f32.mxu0 0.0
  %1770 = vmatmul.mubr.f32.gmra.mrb[0].mxu0 %v1549
  %v1771 = vpop.f32.mrb[0].mxu0
  %v1772 = vadd.f32 0.0, %v1771
  %v1773 = vpop.f32.mrb[0].mxu0
  %v1774 = vadd.f32 0.0, %v1773
  %1775 = vmatprep.mubr.f32.mxu0 0.0
  %1776 = vmatmul.mubr.f32.gmra.mrb[0].mxu0 %v1551
  %v1777 = vpop.f32.mrb[0].mxu0
  %v1778 = vadd.f32 0.0, %v1777
  %v1779 = vpop.f32.mrb[0].mxu0
  %v1780 = vadd.f32 0.0, %v1779
  %1781 = vmatprep.mubr.f32.mxu0 0.0
  %1782 = vmatmul.mubr.f32.gmra.mrb[0].mxu0 %v1553
  %v1783 = vpop.f32.mrb[0].mxu0
  %v1784 = vadd.f32 0.0, %v1783
  %v1785 = vpop.f32.mrb[0].mxu0
  %v1786 = vadd.f32 0.0, %v1785
  %1787 = vmatprep.mubr.f32.mxu0 0.0
  %1788 = vmatmul.mubr.f32.gmra.mrb[0].mxu0 %v1555
  %v1789 = vpop.f32.mrb[0].mxu0
  %v1790 = vadd.f32 0.0, %v1789
  %v1791 = vpop.f32.mrb[0].mxu0
  %v1792 = vadd.f32 0.0, %v1791
  %1793 = vmatprep.mubr.f32.mxu0 0.0
  %1794 = vmatmul.mubr.f32.gmra.mrb[0].mxu0 %v1557
  %v1795 = vpop.f32.mrb[0].mxu0
  %v1796 = vadd.f32 0.0, %v1795
  %v1797 = vpop.f32.mrb[0].mxu0
  %v1798 = vadd.f32 0.0, %v1797
  %1799 = vmatprep.mubr.f32.mxu0 0.0
  %1800 = vmatmul.mubr.f32.gmra.mrb[0].mxu0 %v1559
  %v1801 = vpop.f32.mrb[0].mxu0
  %v1802 = vadd.f32 0.0, %v1801
  %v1803 = vpop.f32.mrb[0].mxu0
  %v1804 = vadd.f32 0.0, %v1803
  %1805 = vmatprep.mubr.f32.mxu0 0.0
  %1806 = vmatmul.mubr.f32.gmra.mrb[0].mxu0 %v1561
  %v1807 = vpop.f32.mrb[0].mxu0
  %v1808 = vadd.f32 0.0, %v1807
  %v1809 = vpop.f32.mrb[0].mxu0
  %v1810 = vadd.f32 0.0, %v1809
  %1811 = vmatprep.mubr.f32.mxu0 0.0
  %1812 = vmatmul.mubr.f32.gmra.mrb[0].mxu0 %v1563
  %v1813 = vpop.f32.mrb[0].mxu0
  %v1814 = vadd.f32 0.0, %v1813
  %v1815 = vpop.f32.mrb[0].mxu0
  %v1816 = vadd.f32 0.0, %v1815
  %1817 = vmatprep.mubr.f32.mxu0 0.0
  %1818 = vmatmul.mubr.f32.gmra.mrb[0].mxu0 %v1565
  %v1819 = vpop.f32.mrb[0].mxu0
  %v1820 = vadd.f32 0.0, %v1819
  %v1821 = vpop.f32.mrb[0].mxu0
  %v1822 = vadd.f32 0.0, %v1821
  %1823 = vdwg.mxu0
  %v1824 = vadd.f32 %v1365, %v1634
  %v1825 = vadd.f32 %v1366, %v1636
  %v1826 = vadd.f32 %v1367, %v1640
  %v1827 = vadd.f32 %v1368, %v1642
  %v1828 = vadd.f32 %v1369, %v1646
  %v1829 = vadd.f32 %v1370, %v1648
  %v1830 = vadd.f32 %v1371, %v1652
  %v1831 = vadd.f32 %v1372, %v1654
  %v1832 = vadd.f32 %v1373, %v1658
  %v1833 = vadd.f32 %v1374, %v1660
  %v1834 = vadd.f32 %v1375, %v1664
  %v1835 = vadd.f32 %v1376, %v1666
  %v1836 = vadd.f32 %v1377, %v1670
  %v1837 = vadd.f32 %v1378, %v1672
  %v1838 = vadd.f32 %v1379, %v1676
  %v1839 = vadd.f32 %v1380, %v1678
  %v1840 = vadd.f32 %v1381, %v1682
  %v1841 = vadd.f32 %v1382, %v1684
  %v1842 = vadd.f32 %v1383, %v1688
  %v1843 = vadd.f32 %v1384, %v1690
  %v1844 = vadd.f32 %v1385, %v1694
  %v1845 = vadd.f32 %v1386, %v1696
  %v1846 = vadd.f32 %v1387, %v1700
  %v1847 = vadd.f32 %v1388, %v1702
  %v1848 = vadd.f32 %v1389, %v1706
  %v1849 = vadd.f32 %v1390, %v1708
  %v1850 = vadd.f32 %v1391, %v1712
  %v1851 = vadd.f32 %v1392, %v1714
  %v1852 = vadd.f32 %v1393, %v1718
  %v1853 = vadd.f32 %v1394, %v1720
  %v1854 = vadd.f32 %v1395, %v1724
  %v1855 = vadd.f32 %v1396, %v1726
  %v1856 = vadd.f32 %v1397, %v1730
  %v1857 = vadd.f32 %v1398, %v1732
  %v1858 = vadd.f32 %v1399, %v1736
  %v1859 = vadd.f32 %v1400, %v1738
  %v1860 = vadd.f32 %v1401, %v1742
  %v1861 = vadd.f32 %v1402, %v1744
  %v1862 = vadd.f32 %v1403, %v1748
  %v1863 = vadd.f32 %v1404, %v1750
  %v1864 = vadd.f32 %v1405, %v1754
  %v1865 = vadd.f32 %v1406, %v1756
  %v1866 = vadd.f32 %v1407, %v1760
  %v1867 = vadd.f32 %v1408, %v1762
  %v1868 = vadd.f32 %v1409, %v1766
  %v1869 = vadd.f32 %v1410, %v1768
  %v1870 = vadd.f32 %v1411, %v1772
  %v1871 = vadd.f32 %v1412, %v1774
  %v1872 = vadd.f32 %v1413, %v1778
  %v1873 = vadd.f32 %v1414, %v1780
  %v1874 = vadd.f32 %v1415, %v1784
  %v1875 = vadd.f32 %v1416, %v1786
  %v1876 = vadd.f32 %v1417, %v1790
  %v1877 = vadd.f32 %v1418, %v1792
  %v1878 = vadd.f32 %v1419, %v1796
  %v1879 = vadd.f32 %v1420, %v1798
  %v1880 = vadd.f32 %v1421, %v1802
  %v1881 = vadd.f32 %v1422, %v1804
  %v1882 = vadd.f32 %v1423, %v1808
  %v1883 = vadd.f32 %v1424, %v1810
  %v1884 = vadd.f32 %v1425, %v1814
  %v1885 = vadd.f32 %v1426, %v1816
  %v1886 = vadd.f32 %v1427, %v1820
  %v1887 = vadd.f32 %v1428, %v1822
  %v1888 = vld [vmem:[%s1 + $0x100] sm:$0xff]
  %v1889 = vld [vmem:[%s1 + $0x108] sm:$0xff]
  %v1890 = vld [vmem:[%s1 + $0x110] sm:$0xff]
  %v1891 = vld [vmem:[%s1 + $0x118] sm:$0xff]
  %v1892 = vld [vmem:[%s1 + $0x120] sm:$0xff]
  %v1893 = vld [vmem:[%s1 + $0x128] sm:$0xff]
  %v1894 = vld [vmem:[%s1 + $0x130] sm:$0xff]
  %v1895 = vld [vmem:[%s1 + $0x138] sm:$0xff]
  %vm1896 = vcmask 1043456
  %v1897 = vrot.slane %v40, 4
  %v1898 = vrot.slane %v41, 4
  %v1899 = vsel %vm1896, %v1897, %v1898
  %v1900 = vrot.slane %v42, 4
  %v1901 = vsel %vm1896, %v1898, %v1900
  %v1902 = vrot.slane %v43, 4
  %v1903 = vsel %vm1896, %v1900, %v1902
  %v1904 = vrot.slane %v44, 4
  %v1905 = vsel %vm1896, %v1902, %v1904
  %v1906 = vrot.slane %v45, 4
  %v1907 = vsel %vm1896, %v1904, %v1906
  %v1908 = vrot.slane %v46, 4
  %v1909 = vsel %vm1896, %v1906, %v1908
  %v1910 = vrot.slane %v47, 4
  %v1911 = vsel %vm1896, %v1908, %v1910
  %v1912 = vrot.slane %v48, 4
  %v1913 = vsel %vm1896, %v1910, %v1912
  %v1914 = vrot.slane %v49, 4
  %v1915 = vsel %vm1896, %v1912, %v1914
  %v1916 = vrot.slane %v50, 4
  %v1917 = vsel %vm1896, %v1914, %v1916
  %v1918 = vrot.slane %v51, 4
  %v1919 = vsel %vm1896, %v1916, %v1918
  %v1920 = vrot.slane %v52, 4
  %v1921 = vsel %vm1896, %v1918, %v1920
  %v1922 = vrot.slane %v53, 4
  %v1923 = vsel %vm1896, %v1920, %v1922
  %v1924 = vrot.slane %v54, 4
  %v1925 = vsel %vm1896, %v1922, %v1924
  %v1926 = vrot.slane %v55, 4
  %v1927 = vsel %vm1896, %v1924, %v1926
  %v1928 = vrot.slane %v56, 4
  %v1929 = vsel %vm1896, %v1926, %v1928
  %v1930 = vrot.slane %v57, 4
  %v1931 = vsel %vm1896, %v1928, %v1930
  %v1932 = vrot.slane %v58, 4
  %v1933 = vsel %vm1896, %v1930, %v1932
  %v1934 = vrot.slane %v59, 4
  %v1935 = vsel %vm1896, %v1932, %v1934
  %v1936 = vrot.slane %v60, 4
  %v1937 = vsel %vm1896, %v1934, %v1936
  %v1938 = vrot.slane %v61, 4
  %v1939 = vsel %vm1896, %v1936, %v1938
  %v1940 = vrot.slane %v62, 4
  %v1941 = vsel %vm1896, %v1938, %v1940
  %v1942 = vrot.slane %v63, 4
  %v1943 = vsel %vm1896, %v1940, %v1942
  %v1944 = vrot.slane %v64, 4
  %v1945 = vsel %vm1896, %v1942, %v1944
  %v1946 = vrot.slane %v65, 4
  %v1947 = vsel %vm1896, %v1944, %v1946
  %v1948 = vrot.slane %v66, 4
  %v1949 = vsel %vm1896, %v1946, %v1948
  %v1950 = vrot.slane %v67, 4
  %v1951 = vsel %vm1896, %v1948, %v1950
  %v1952 = vrot.slane %v68, 4
  %v1953 = vsel %vm1896, %v1950, %v1952
  %v1954 = vrot.slane %v69, 4
  %v1955 = vsel %vm1896, %v1952, %v1954
  %v1956 = vrot.slane %v70, 4
  %v1957 = vsel %vm1896, %v1954, %v1956
  %v1958 = vrot.slane %v71, 4
  %v1959 = vsel %vm1896, %v1956, %v1958
  %v1960 = vrot.slane 0.0, 4
  %v1961 = vsel %vm1896, %v1958, %v1960
  %v1962 = vsel %vm81, %v1899, 0
  %v1964 = vsel %vm81, %v1901, 0
  %v1966 = vsel %vm81, %v1903, 0
  %v1968 = vsel %vm81, %v1905, 0
  %v1970 = vsel %vm81, %v1907, 0
  %v1972 = vsel %vm81, %v1909, 0
  %v1974 = vsel %vm81, %v1911, 0
  %v1976 = vsel %vm81, %v1913, 0
  %v1978 = vsel %vm81, %v1915, 0
  %v1980 = vsel %vm81, %v1917, 0
  %v1982 = vsel %vm81, %v1919, 0
  %v1984 = vsel %vm81, %v1921, 0
  %v1986 = vsel %vm81, %v1923, 0
  %v1988 = vsel %vm81, %v1925, 0
  %v1990 = vsel %vm81, %v1927, 0
  %v1992 = vsel %vm81, %v1929, 0
  %v1994 = vsel %vm81, %v1931, 0
  %v1996 = vsel %vm81, %v1933, 0
  %v1998 = vsel %vm81, %v1935, 0
  %v2000 = vsel %vm81, %v1937, 0
  %v2002 = vsel %vm81, %v1939, 0
  %v2004 = vsel %vm81, %v1941, 0
  %v2006 = vsel %vm81, %v1943, 0
  %v2008 = vsel %vm81, %v1945, 0
  %v2010 = vsel %vm81, %v1947, 0
  %v2012 = vsel %vm81, %v1949, 0
  %v2014 = vsel %vm81, %v1951, 0
  %v2016 = vsel %vm81, %v1953, 0
  %v2018 = vsel %vm81, %v1955, 0
  %v2020 = vsel %vm81, %v1957, 0
  %v2022 = vsel %vm81, %v1959, 0
  %v2024 = vsel %vm81, %v1961, 0
  %2026 = vmatprep.subr.mxu0 %v1889
  %2027 = vmatpush1.msra.mxu0 %v1888
  %2028 = vmatprep.subr.mxu0 %v1891
  %2029 = vmatpush1.msra.mxu0 %v1890
  %2030 = vmatprep.subr.mxu0 %v1893
  %2031 = vmatpush1.msra.mxu0 %v1892
  %2032 = vmatprep.subr.mxu0 %v1895
  %2033 = vmatpush1.msra.mxu0 %v1894
  %2034 = vmatprep.subr.mxu0 0.0
  %2035 = vmatpush1.msra.mxu0 0.0
  %2036 = vmatprep.subr.mxu0 0.0
  %2037 = vmatpush1.msra.mxu0 0.0
  %2038 = vmatprep.subr.mxu0 0.0
  %2039 = vmatpush1.msra.mxu0 0.0
  %2040 = vmatprep.subr.mxu0 0.0
  %2041 = vmatpush1.msra.mxu0 0.0
  %2042 = vmatprep.subr.mxu0 0.0
  %2043 = vmatpush1.msra.mxu0 0.0
  %2044 = vmatprep.subr.mxu0 0.0
  %2045 = vmatpush1.msra.mxu0 0.0
  %2046 = vmatprep.subr.mxu0 0.0
  %2047 = vmatpush1.msra.mxu0 0.0
  %2048 = vmatprep.subr.mxu0 0.0
  %2049 = vmatpush1.msra.mxu0 0.0
  %2050 = vmatprep.subr.mxu0 0.0
  %2051 = vmatpush1.msra.mxu0 0.0
  %2052 = vmatprep.subr.mxu0 0.0
  %2053 = vmatpush1.msra.mxu0 0.0
  %2054 = vmatprep.subr.mxu0 0.0
  %2055 = vmatpush1.msra.mxu0 0.0
  %2056 = vmatprep.subr.mxu0 0.0
  %2057 = vmatpush1.msra.mxu0 0.0
  %2058 = vmatprep.subr.mxu0 0.0
  %2059 = vmatpush1.msra.mxu0 0.0
  %2060 = vmatprep.subr.mxu0 0.0
  %2061 = vmatpush1.msra.mxu0 0.0
  %2062 = vmatprep.subr.mxu0 0.0
  %2063 = vmatpush1.msra.mxu0 0.0
  %2064 = vmatprep.subr.mxu0 0.0
  %2065 = vmatpush1.msra.mxu0 0.0
  %2066 = vmatprep.subr.mxu0 0.0
  %2067 = vmatpush1.msra.mxu0 0.0
  %2068 = vmatprep.subr.mxu0 0.0
  %2069 = vmatpush1.msra.mxu0 0.0
  %2070 = vmatprep.subr.mxu0 0.0
  %2071 = vmatpush1.msra.mxu0 0.0
  %2072 = vmatprep.subr.mxu0 0.0
  %2073 = vmatpush1.msra.mxu0 0.0
  %2074 = vmatprep.subr.mxu0 0.0
  %2075 = vmatpush1.msra.mxu0 0.0
  %2076 = vmatprep.subr.mxu0 0.0
  %2077 = vmatpush1.msra.mxu0 0.0
  %2078 = vmatprep.subr.mxu0 0.0
  %2079 = vmatpush1.msra.mxu0 0.0
  %2080 = vmatprep.subr.mxu0 0.0
  %2081 = vmatpush1.msra.mxu0 0.0
  %2082 = vmatprep.subr.mxu0 0.0
  %2083 = vmatpush1.msra.mxu0 0.0
  %2084 = vmatprep.subr.mxu0 0.0
  %2085 = vmatpush1.msra.mxu0 0.0
  %2086 = vmatprep.subr.mxu0 0.0
  %2087 = vmatpush1.msra.mxu0 0.0
  %2088 = vmatprep.subr.mxu0 0.0
  %2089 = vmatpush1.msra.mxu0 0.0
  %2090 = vmatprep.mubr.f32.mxu0 0.0
  %2091 = vmatmul.mubr.f32.gmra.mrb[0].mxu0 %v1962
  %v2092 = vpop.f32.mrb[0].mxu0
  %v2093 = vadd.f32 0.0, %v2092
  %v2094 = vpop.f32.mrb[0].mxu0
  %v2095 = vadd.f32 0.0, %v2094
  %2096 = vmatprep.mubr.f32.mxu0 0.0
  %2097 = vmatmul.mubr.f32.gmra.mrb[0].mxu0 %v1964
  %v2098 = vpop.f32.mrb[0].mxu0
  %v2099 = vadd.f32 0.0, %v2098
  %v2100 = vpop.f32.mrb[0].mxu0
  %v2101 = vadd.f32 0.0, %v2100
  %2102 = vmatprep.mubr.f32.mxu0 0.0
  %2103 = vmatmul.mubr.f32.gmra.mrb[0].mxu0 %v1966
  %v2104 = vpop.f32.mrb[0].mxu0
  %v2105 = vadd.f32 0.0, %v2104
  %v2106 = vpop.f32.mrb[0].mxu0
  %v2107 = vadd.f32 0.0, %v2106
  %2108 = vmatprep.mubr.f32.mxu0 0.0
  %2109 = vmatmul.mubr.f32.gmra.mrb[0].mxu0 %v1968
  %v2110 = vpop.f32.mrb[0].mxu0
  %v2111 = vadd.f32 0.0, %v2110
  %v2112 = vpop.f32.mrb[0].mxu0
  %v2113 = vadd.f32 0.0, %v2112
  %2114 = vmatprep.mubr.f32.mxu0 0.0
  %2115 = vmatmul.mubr.f32.gmra.mrb[0].mxu0 %v1970
  %v2116 = vpop.f32.mrb[0].mxu0
  %v2117 = vadd.f32 0.0, %v2116
  %v2118 = vpop.f32.mrb[0].mxu0
  %v2119 = vadd.f32 0.0, %v2118
  %2120 = vmatprep.mubr.f32.mxu0 0.0
  %2121 = vmatmul.mubr.f32.gmra.mrb[0].mxu0 %v1972
  %v2122 = vpop.f32.mrb[0].mxu0
  %v2123 = vadd.f32 0.0, %v2122
  %v2124 = vpop.f32.mrb[0].mxu0
  %v2125 = vadd.f32 0.0, %v2124
  %2126 = vmatprep.mubr.f32.mxu0 0.0
  %2127 = vmatmul.mubr.f32.gmra.mrb[0].mxu0 %v1974
  %v2128 = vpop.f32.mrb[0].mxu0
  %v2129 = vadd.f32 0.0, %v2128
  %v2130 = vpop.f32.mrb[0].mxu0
  %v2131 = vadd.f32 0.0, %v2130
  %2132 = vmatprep.mubr.f32.mxu0 0.0
  %2133 = vmatmul.mubr.f32.gmra.mrb[0].mxu0 %v1976
  %v2134 = vpop.f32.mrb[0].mxu0
  %v2135 = vadd.f32 0.0, %v2134
  %v2136 = vpop.f32.mrb[0].mxu0
  %v2137 = vadd.f32 0.0, %v2136
  %2138 = vmatprep.mubr.f32.mxu0 0.0
  %2139 = vmatmul.mubr.f32.gmra.mrb[0].mxu0 %v1978
  %v2140 = vpop.f32.mrb[0].mxu0
  %v2141 = vadd.f32 0.0, %v2140
  %v2142 = vpop.f32.mrb[0].mxu0
  %v2143 = vadd.f32 0.0, %v2142
  %2144 = vmatprep.mubr.f32.mxu0 0.0
  %2145 = vmatmul.mubr.f32.gmra.mrb[0].mxu0 %v1980
  %v2146 = vpop.f32.mrb[0].mxu0
  %v2147 = vadd.f32 0.0, %v2146
  %v2148 = vpop.f32.mrb[0].mxu0
  %v2149 = vadd.f32 0.0, %v2148
  %2150 = vmatprep.mubr.f32.mxu0 0.0
  %2151 = vmatmul.mubr.f32.gmra.mrb[0].mxu0 %v1982
  %v2152 = vpop.f32.mrb[0].mxu0
  %v2153 = vadd.f32 0.0, %v2152
  %v2154 = vpop.f32.mrb[0].mxu0
  %v2155 = vadd.f32 0.0, %v2154
  %2156 = vmatprep.mubr.f32.mxu0 0.0
  %2157 = vmatmul.mubr.f32.gmra.mrb[0].mxu0 %v1984
  %v2158 = vpop.f32.mrb[0].mxu0
  %v2159 = vadd.f32 0.0, %v2158
  %v2160 = vpop.f32.mrb[0].mxu0
  %v2161 = vadd.f32 0.0, %v2160
  %2162 = vmatprep.mubr.f32.mxu0 0.0
  %2163 = vmatmul.mubr.f32.gmra.mrb[0].mxu0 %v1986
  %v2164 = vpop.f32.mrb[0].mxu0
  %v2165 = vadd.f32 0.0, %v2164
  %v2166 = vpop.f32.mrb[0].mxu0
  %v2167 = vadd.f32 0.0, %v2166
  %2168 = vmatprep.mubr.f32.mxu0 0.0
  %2169 = vmatmul.mubr.f32.gmra.mrb[0].mxu0 %v1988
  %v2170 = vpop.f32.mrb[0].mxu0
  %v2171 = vadd.f32 0.0, %v2170
  %v2172 = vpop.f32.mrb[0].mxu0
  %v2173 = vadd.f32 0.0, %v2172
  %2174 = vmatprep.mubr.f32.mxu0 0.0
  %2175 = vmatmul.mubr.f32.gmra.mrb[0].mxu0 %v1990
  %v2176 = vpop.f32.mrb[0].mxu0
  %v2177 = vadd.f32 0.0, %v2176
  %v2178 = vpop.f32.mrb[0].mxu0
  %v2179 = vadd.f32 0.0, %v2178
  %2180 = vmatprep.mubr.f32.mxu0 0.0
  %2181 = vmatmul.mubr.f32.gmra.mrb[0].mxu0 %v1992
  %v2182 = vpop.f32.mrb[0].mxu0
  %v2183 = vadd.f32 0.0, %v2182
  %v2184 = vpop.f32.mrb[0].mxu0
  %v2185 = vadd.f32 0.0, %v2184
  %2186 = vmatprep.mubr.f32.mxu0 0.0
  %2187 = vmatmul.mubr.f32.gmra.mrb[0].mxu0 %v1994
  %v2188 = vpop.f32.mrb[0].mxu0
  %v2189 = vadd.f32 0.0, %v2188
  %v2190 = vpop.f32.mrb[0].mxu0
  %v2191 = vadd.f32 0.0, %v2190
  %2192 = vmatprep.mubr.f32.mxu0 0.0
  %2193 = vmatmul.mubr.f32.gmra.mrb[0].mxu0 %v1996
  %v2194 = vpop.f32.mrb[0].mxu0
  %v2195 = vadd.f32 0.0, %v2194
  %v2196 = vpop.f32.mrb[0].mxu0
  %v2197 = vadd.f32 0.0, %v2196
  %2198 = vmatprep.mubr.f32.mxu0 0.0
  %2199 = vmatmul.mubr.f32.gmra.mrb[0].mxu0 %v1998
  %v2200 = vpop.f32.mrb[0].mxu0
  %v2201 = vadd.f32 0.0, %v2200
  %v2202 = vpop.f32.mrb[0].mxu0
  %v2203 = vadd.f32 0.0, %v2202
  %2204 = vmatprep.mubr.f32.mxu0 0.0
  %2205 = vmatmul.mubr.f32.gmra.mrb[0].mxu0 %v2000
  %v2206 = vpop.f32.mrb[0].mxu0
  %v2207 = vadd.f32 0.0, %v2206
  %v2208 = vpop.f32.mrb[0].mxu0
  %v2209 = vadd.f32 0.0, %v2208
  %2210 = vmatprep.mubr.f32.mxu0 0.0
  %2211 = vmatmul.mubr.f32.gmra.mrb[0].mxu0 %v2002
  %v2212 = vpop.f32.mrb[0].mxu0
  %v2213 = vadd.f32 0.0, %v2212
  %v2214 = vpop.f32.mrb[0].mxu0
  %v2215 = vadd.f32 0.0, %v2214
  %2216 = vmatprep.mubr.f32.mxu0 0.0
  %2217 = vmatmul.mubr.f32.gmra.mrb[0].mxu0 %v2004
  %v2218 = vpop.f32.mrb[0].mxu0
  %v2219 = vadd.f32 0.0, %v2218
  %v2220 = vpop.f32.mrb[0].mxu0
  %v2221 = vadd.f32 0.0, %v2220
  %2222 = vmatprep.mubr.f32.mxu0 0.0
  %2223 = vmatmul.mubr.f32.gmra.mrb[0].mxu0 %v2006
  %v2224 = vpop.f32.mrb[0].mxu0
  %v2225 = vadd.f32 0.0, %v2224
  %v2226 = vpop.f32.mrb[0].mxu0
  %v2227 = vadd.f32 0.0, %v2226
  %2228 = vmatprep.mubr.f32.mxu0 0.0
  %2229 = vmatmul.mubr.f32.gmra.mrb[0].mxu0 %v2008
  %v2230 = vpop.f32.mrb[0].mxu0
  %v2231 = vadd.f32 0.0, %v2230
  %v2232 = vpop.f32.mrb[0].mxu0
  %v2233 = vadd.f32 0.0, %v2232
  %2234 = vmatprep.mubr.f32.mxu0 0.0
  %2235 = vmatmul.mubr.f32.gmra.mrb[0].mxu0 %v2010
  %v2236 = vpop.f32.mrb[0].mxu0
  %v2237 = vadd.f32 0.0, %v2236
  %v2238 = vpop.f32.mrb[0].mxu0
  %v2239 = vadd.f32 0.0, %v2238
  %2240 = vmatprep.mubr.f32.mxu0 0.0
  %2241 = vmatmul.mubr.f32.gmra.mrb[0].mxu0 %v2012
  %v2242 = vpop.f32.mrb[0].mxu0
  %v2243 = vadd.f32 0.0, %v2242
  %v2244 = vpop.f32.mrb[0].mxu0
  %v2245 = vadd.f32 0.0, %v2244
  %2246 = vmatprep.mubr.f32.mxu0 0.0
  %2247 = vmatmul.mubr.f32.gmra.mrb[0].mxu0 %v2014
  %v2248 = vpop.f32.mrb[0].mxu0
  %v2249 = vadd.f32 0.0, %v2248
  %v2250 = vpop.f32.mrb[0].mxu0
  %v2251 = vadd.f32 0.0, %v2250
  %2252 = vmatprep.mubr.f32.mxu0 0.0
  %2253 = vmatmul.mubr.f32.gmra.mrb[0].mxu0 %v2016
  %v2254 = vpop.f32.mrb[0].mxu0
  %v2255 = vadd.f32 0.0, %v2254
  %v2256 = vpop.f32.mrb[0].mxu0
  %v2257 = vadd.f32 0.0, %v2256
  %2258 = vmatprep.mubr.f32.mxu0 0.0
  %2259 = vmatmul.mubr.f32.gmra.mrb[0].mxu0 %v2018
  %v2260 = vpop.f32.mrb[0].mxu0
  %v2261 = vadd.f32 0.0, %v2260
  %v2262 = vpop.f32.mrb[0].mxu0
  %v2263 = vadd.f32 0.0, %v2262
  %2264 = vmatprep.mubr.f32.mxu0 0.0
  %2265 = vmatmul.mubr.f32.gmra.mrb[0].mxu0 %v2020
  %v2266 = vpop.f32.mrb[0].mxu0
  %v2267 = vadd.f32 0.0, %v2266
  %v2268 = vpop.f32.mrb[0].mxu0
  %v2269 = vadd.f32 0.0, %v2268
  %2270 = vmatprep.mubr.f32.mxu0 0.0
  %2271 = vmatmul.mubr.f32.gmra.mrb[0].mxu0 %v2022
  %v2272 = vpop.f32.mrb[0].mxu0
  %v2273 = vadd.f32 0.0, %v2272
  %v2274 = vpop.f32.mrb[0].mxu0
  %v2275 = vadd.f32 0.0, %v2274
  %2276 = vmatprep.mubr.f32.mxu0 0.0
  %2277 = vmatmul.mubr.f32.gmra.mrb[0].mxu0 %v2024
  %v2278 = vpop.f32.mrb[0].mxu0
  %v2279 = vadd.f32 0.0, %v2278
  %v2280 = vpop.f32.mrb[0].mxu0
  %v2281 = vadd.f32 0.0, %v2280
  %2282 = vdwg.mxu0
  %v2283 = vadd.f32 %v1824, %v2093
  %v2284 = vadd.f32 %v1825, %v2095
  %v2285 = vadd.f32 %v1826, %v2099
  %v2286 = vadd.f32 %v1827, %v2101
  %v2287 = vadd.f32 %v1828, %v2105
  %v2288 = vadd.f32 %v1829, %v2107
  %v2289 = vadd.f32 %v1830, %v2111
  %v2290 = vadd.f32 %v1831, %v2113
  %v2291 = vadd.f32 %v1832, %v2117
  %v2292 = vadd.f32 %v1833, %v2119
  %v2293 = vadd.f32 %v1834, %v2123
  %v2294 = vadd.f32 %v1835, %v2125
  %v2295 = vadd.f32 %v1836, %v2129
  %v2296 = vadd.f32 %v1837, %v2131
  %v2297 = vadd.f32 %v1838, %v2135
  %v2298 = vadd.f32 %v1839, %v2137
  %v2299 = vadd.f32 %v1840, %v2141
  %v2300 = vadd.f32 %v1841, %v2143
  %v2301 = vadd.f32 %v1842, %v2147
  %v2302 = vadd.f32 %v1843, %v2149
  %v2303 = vadd.f32 %v1844, %v2153
  %v2304 = vadd.f32 %v1845, %v2155
  %v2305 = vadd.f32 %v1846, %v2159
  %v2306 = vadd.f32 %v1847, %v2161
  %v2307 = vadd.f32 %v1848, %v2165
  %v2308 = vadd.f32 %v1849, %v2167
  %v2309 = vadd.f32 %v1850, %v2171
  %v2310 = vadd.f32 %v1851, %v2173
  %v2311 = vadd.f32 %v1852, %v2177
  %v2312 = vadd.f32 %v1853, %v2179
  %v2313 = vadd.f32 %v1854, %v2183
  %v2314 = vadd.f32 %v1855, %v2185
  %v2315 = vadd.f32 %v1856, %v2189
  %v2316 = vadd.f32 %v1857, %v2191
  %v2317 = vadd.f32 %v1858, %v2195
  %v2318 = vadd.f32 %v1859, %v2197
  %v2319 = vadd.f32 %v1860, %v2201
  %v2320 = vadd.f32 %v1861, %v2203
  %v2321 = vadd.f32 %v1862, %v2207
  %v2322 = vadd.f32 %v1863, %v2209
  %v2323 = vadd.f32 %v1864, %v2213
  %v2324 = vadd.f32 %v1865, %v2215
  %v2325 = vadd.f32 %v1866, %v2219
  %v2326 = vadd.f32 %v1867, %v2221
  %v2327 = vadd.f32 %v1868, %v2225
  %v2328 = vadd.f32 %v1869, %v2227
  %v2329 = vadd.f32 %v1870, %v2231
  %v2330 = vadd.f32 %v1871, %v2233
  %v2331 = vadd.f32 %v1872, %v2237
  %v2332 = vadd.f32 %v1873, %v2239
  %v2333 = vadd.f32 %v1874, %v2243
  %v2334 = vadd.f32 %v1875, %v2245
  %v2335 = vadd.f32 %v1876, %v2249
  %v2336 = vadd.f32 %v1877, %v2251
  %v2337 = vadd.f32 %v1878, %v2255
  %v2338 = vadd.f32 %v1879, %v2257
  %v2339 = vadd.f32 %v1880, %v2261
  %v2340 = vadd.f32 %v1881, %v2263
  %v2341 = vadd.f32 %v1882, %v2267
  %v2342 = vadd.f32 %v1883, %v2269
  %v2343 = vadd.f32 %v1884, %v2273
  %v2344 = vadd.f32 %v1885, %v2275
  %v2345 = vadd.f32 %v1886, %v2279
  %v2346 = vadd.f32 %v1887, %v2281
  %v2347 = vxor.u32 %v2283, 2147483648
  %v2348 = vxor.u32 %v2284, 2147483648
  %v2349 = vxor.u32 %v2285, 2147483648
  %v2350 = vxor.u32 %v2286, 2147483648
  %v2351 = vxor.u32 %v2287, 2147483648
  %v2352 = vxor.u32 %v2288, 2147483648
  %v2353 = vxor.u32 %v2289, 2147483648
  %v2354 = vxor.u32 %v2290, 2147483648
  %v2355 = vxor.u32 %v2291, 2147483648
  %v2356 = vxor.u32 %v2292, 2147483648
  %v2357 = vxor.u32 %v2293, 2147483648
  %v2358 = vxor.u32 %v2294, 2147483648
  %v2359 = vxor.u32 %v2295, 2147483648
  %v2360 = vxor.u32 %v2296, 2147483648
  %v2361 = vxor.u32 %v2297, 2147483648
  %v2362 = vxor.u32 %v2298, 2147483648
  %v2363 = vxor.u32 %v2299, 2147483648
  %v2364 = vxor.u32 %v2300, 2147483648
  %v2365 = vxor.u32 %v2301, 2147483648
  %v2366 = vxor.u32 %v2302, 2147483648
  %v2367 = vxor.u32 %v2303, 2147483648
  %v2368 = vxor.u32 %v2304, 2147483648
  %v2369 = vxor.u32 %v2305, 2147483648
  %v2370 = vxor.u32 %v2306, 2147483648
  %v2371 = vxor.u32 %v2307, 2147483648
  %v2372 = vxor.u32 %v2308, 2147483648
  %v2373 = vxor.u32 %v2309, 2147483648
  %v2374 = vxor.u32 %v2310, 2147483648
  %v2375 = vxor.u32 %v2311, 2147483648
  %v2376 = vxor.u32 %v2312, 2147483648
  %v2377 = vxor.u32 %v2313, 2147483648
  %v2378 = vxor.u32 %v2314, 2147483648
  %v2379 = vxor.u32 %v2315, 2147483648
  %v2380 = vxor.u32 %v2316, 2147483648
  %v2381 = vxor.u32 %v2317, 2147483648
  %v2382 = vxor.u32 %v2318, 2147483648
  %v2383 = vxor.u32 %v2319, 2147483648
  %v2384 = vxor.u32 %v2320, 2147483648
  %v2385 = vxor.u32 %v2321, 2147483648
  %v2386 = vxor.u32 %v2322, 2147483648
  %v2387 = vxor.u32 %v2323, 2147483648
  %v2388 = vxor.u32 %v2324, 2147483648
  %v2389 = vxor.u32 %v2325, 2147483648
  %v2390 = vxor.u32 %v2326, 2147483648
  %v2391 = vxor.u32 %v2327, 2147483648
  %v2392 = vxor.u32 %v2328, 2147483648
  %v2393 = vxor.u32 %v2329, 2147483648
  %v2394 = vxor.u32 %v2330, 2147483648
  %v2395 = vxor.u32 %v2331, 2147483648
  %v2396 = vxor.u32 %v2332, 2147483648
  %v2397 = vxor.u32 %v2333, 2147483648
  %v2398 = vxor.u32 %v2334, 2147483648
  %v2399 = vxor.u32 %v2335, 2147483648
  %v2400 = vxor.u32 %v2336, 2147483648
  %v2401 = vxor.u32 %v2337, 2147483648
  %v2402 = vxor.u32 %v2338, 2147483648
  %v2403 = vxor.u32 %v2339, 2147483648
  %v2404 = vxor.u32 %v2340, 2147483648
  %v2405 = vxor.u32 %v2341, 2147483648
  %v2406 = vxor.u32 %v2342, 2147483648
  %v2407 = vxor.u32 %v2343, 2147483648
  %v2408 = vxor.u32 %v2344, 2147483648
  %v2409 = vxor.u32 %v2345, 2147483648
  %v2410 = vxor.u32 %v2346, 2147483648
  %v2411 = vmul.f32 %v2347, 1.442695
  %v2412 = vpow.pop %v2411
  %v2413 = vmul.f32 %v2348, 1.442695
  %v2414 = vpow.pop %v2413
  %v2415 = vmul.f32 %v2349, 1.442695
  %v2416 = vpow.pop %v2415
  %v2417 = vmul.f32 %v2350, 1.442695
  %v2418 = vpow.pop %v2417
  %v2419 = vmul.f32 %v2351, 1.442695
  %v2420 = vpow.pop %v2419
  %v2421 = vmul.f32 %v2352, 1.442695
  %v2422 = vpow.pop %v2421
  %v2423 = vmul.f32 %v2353, 1.442695
  %v2424 = vpow.pop %v2423
  %v2425 = vmul.f32 %v2354, 1.442695
  %v2426 = vpow.pop %v2425
  %v2427 = vmul.f32 %v2355, 1.442695
  %v2428 = vpow.pop %v2427
  %v2429 = vmul.f32 %v2356, 1.442695
  %v2430 = vpow.pop %v2429
  %v2431 = vmul.f32 %v2357, 1.442695
  %v2432 = vpow.pop %v2431
  %v2433 = vmul.f32 %v2358, 1.442695
  %v2434 = vpow.pop %v2433
  %v2435 = vmul.f32 %v2359, 1.442695
  %v2436 = vpow.pop %v2435
  %v2437 = vmul.f32 %v2360, 1.442695
  %v2438 = vpow.pop %v2437
  %v2439 = vmul.f32 %v2361, 1.442695
  %v2440 = vpow.pop %v2439
  %v2441 = vmul.f32 %v2362, 1.442695
  %v2442 = vpow.pop %v2441
  %v2443 = vmul.f32 %v2363, 1.442695
  %v2444 = vpow.pop %v2443
  %v2445 = vmul.f32 %v2364, 1.442695
  %v2446 = vpow.pop %v2445
  %v2447 = vmul.f32 %v2365, 1.442695
  %v2448 = vpow.pop %v2447
  %v2449 = vmul.f32 %v2366, 1.442695
  %v2450 = vpow.pop %v2449
  %v2451 = vmul.f32 %v2367, 1.442695
  %v2452 = vpow.pop %v2451
  %v2453 = vmul.f32 %v2368, 1.442695
  %v2454 = vpow.pop %v2453
  %v2455 = vmul.f32 %v2369, 1.442695
  %v2456 = vpow.pop %v2455
  %v2457 = vmul.f32 %v2370, 1.442695
  %v2458 = vpow.pop %v2457
  %v2459 = vmul.f32 %v2371, 1.442695
  %v2460 = vpow.pop %v2459
  %v2461 = vmul.f32 %v2372, 1.442695
  %v2462 = vpow.pop %v2461
  %v2463 = vmul.f32 %v2373, 1.442695
  %v2464 = vpow.pop %v2463
  %v2465 = vmul.f32 %v2374, 1.442695
  %v2466 = vpow.pop %v2465
  %v2467 = vmul.f32 %v2375, 1.442695
  %v2468 = vpow.pop %v2467
  %v2469 = vmul.f32 %v2376, 1.442695
  %v2470 = vpow.pop %v2469
  %v2471 = vmul.f32 %v2377, 1.442695
  %v2472 = vpow.pop %v2471
  %v2473 = vmul.f32 %v2378, 1.442695
  %v2474 = vpow.pop %v2473
  %v2475 = vmul.f32 %v2379, 1.442695
  %v2476 = vpow.pop %v2475
  %v2477 = vmul.f32 %v2380, 1.442695
  %v2478 = vpow.pop %v2477
  %v2479 = vmul.f32 %v2381, 1.442695
  %v2480 = vpow.pop %v2479
  %v2481 = vmul.f32 %v2382, 1.442695
  %v2482 = vpow.pop %v2481
  %v2483 = vmul.f32 %v2383, 1.442695
  %v2484 = vpow.pop %v2483
  %v2485 = vmul.f32 %v2384, 1.442695
  %v2486 = vpow.pop %v2485
  %v2487 = vmul.f32 %v2385, 1.442695
  %v2488 = vpow.pop %v2487
  %v2489 = vmul.f32 %v2386, 1.442695
  %v2490 = vpow.pop %v2489
  %v2491 = vmul.f32 %v2387, 1.442695
  %v2492 = vpow.pop %v2491
  %v2493 = vmul.f32 %v2388, 1.442695
  %v2494 = vpow.pop %v2493
  %v2495 = vmul.f32 %v2389, 1.442695
  %v2496 = vpow.pop %v2495
  %v2497 = vmul.f32 %v2390, 1.442695
  %v2498 = vpow.pop %v2497
  %v2499 = vmul.f32 %v2391, 1.442695
  %v2500 = vpow.pop %v2499
  %v2501 = vmul.f32 %v2392, 1.442695
  %v2502 = vpow.pop %v2501
  %v2503 = vmul.f32 %v2393, 1.442695
  %v2504 = vpow.pop %v2503
  %v2505 = vmul.f32 %v2394, 1.442695
  %v2506 = vpow.pop %v2505
  %v2507 = vmul.f32 %v2395, 1.442695
  %v2508 = vpow.pop %v2507
  %v2509 = vmul.f32 %v2396, 1.442695
  %v2510 = vpow.pop %v2509
  %v2511 = vmul.f32 %v2397, 1.442695
  %v2512 = vpow.pop %v2511
  %v2513 = vmul.f32 %v2398, 1.442695
  %v2514 = vpow.pop %v2513
  %v2515 = vmul.f32 %v2399, 1.442695
  %v2516 = vpow.pop %v2515
  %v2517 = vmul.f32 %v2400, 1.442695
  %v2518 = vpow.pop %v2517
  %v2519 = vmul.f32 %v2401, 1.442695
  %v2520 = vpow.pop %v2519
  %v2521 = vmul.f32 %v2402, 1.442695
  %v2522 = vpow.pop %v2521
  %v2523 = vmul.f32 %v2403, 1.442695
  %v2524 = vpow.pop %v2523
  %v2525 = vmul.f32 %v2404, 1.442695
  %v2526 = vpow.pop %v2525
  %v2527 = vmul.f32 %v2405, 1.442695
  %v2528 = vpow.pop %v2527
  %v2529 = vmul.f32 %v2406, 1.442695
  %v2530 = vpow.pop %v2529
  %v2531 = vmul.f32 %v2407, 1.442695
  %v2532 = vpow.pop %v2531
  %v2533 = vmul.f32 %v2408, 1.442695
  %v2534 = vpow.pop %v2533
  %v2535 = vmul.f32 %v2409, 1.442695
  %v2536 = vpow.pop %v2535
  %v2537 = vmul.f32 %v2410, 1.442695
  %v2538 = vpow.pop %v2537
  %v2539 = vadd.f32 %v2412, 1.0
  %v2540 = vadd.f32 %v2414, 1.0
  %v2541 = vadd.f32 %v2416, 1.0
  %v2542 = vadd.f32 %v2418, 1.0
  %v2543 = vadd.f32 %v2420, 1.0
  %v2544 = vadd.f32 %v2422, 1.0
  %v2545 = vadd.f32 %v2424, 1.0
  %v2546 = vadd.f32 %v2426, 1.0
  %v2547 = vadd.f32 %v2428, 1.0
  %v2548 = vadd.f32 %v2430, 1.0
  %v2549 = vadd.f32 %v2432, 1.0
  %v2550 = vadd.f32 %v2434, 1.0
  %v2551 = vadd.f32 %v2436, 1.0
  %v2552 = vadd.f32 %v2438, 1.0
  %v2553 = vadd.f32 %v2440, 1.0
  %v2554 = vadd.f32 %v2442, 1.0
  %v2555 = vadd.f32 %v2444, 1.0
  %v2556 = vadd.f32 %v2446, 1.0
  %v2557 = vadd.f32 %v2448, 1.0
  %v2558 = vadd.f32 %v2450, 1.0
  %v2559 = vadd.f32 %v2452, 1.0
  %v2560 = vadd.f32 %v2454, 1.0
  %v2561 = vadd.f32 %v2456, 1.0
  %v2562 = vadd.f32 %v2458, 1.0
  %v2563 = vadd.f32 %v2460, 1.0
  %v2564 = vadd.f32 %v2462, 1.0
  %v2565 = vadd.f32 %v2464, 1.0
  %v2566 = vadd.f32 %v2466, 1.0
  %v2567 = vadd.f32 %v2468, 1.0
  %v2568 = vadd.f32 %v2470, 1.0
  %v2569 = vadd.f32 %v2472, 1.0
  %v2570 = vadd.f32 %v2474, 1.0
  %v2571 = vadd.f32 %v2476, 1.0
  %v2572 = vadd.f32 %v2478, 1.0
  %v2573 = vadd.f32 %v2480, 1.0
  %v2574 = vadd.f32 %v2482, 1.0
  %v2575 = vadd.f32 %v2484, 1.0
  %v2576 = vadd.f32 %v2486, 1.0
  %v2577 = vadd.f32 %v2488, 1.0
  %v2578 = vadd.f32 %v2490, 1.0
  %v2579 = vadd.f32 %v2492, 1.0
  %v2580 = vadd.f32 %v2494, 1.0
  %v2581 = vadd.f32 %v2496, 1.0
  %v2582 = vadd.f32 %v2498, 1.0
  %v2583 = vadd.f32 %v2500, 1.0
  %v2584 = vadd.f32 %v2502, 1.0
  %v2585 = vadd.f32 %v2504, 1.0
  %v2586 = vadd.f32 %v2506, 1.0
  %v2587 = vadd.f32 %v2508, 1.0
  %v2588 = vadd.f32 %v2510, 1.0
  %v2589 = vadd.f32 %v2512, 1.0
  %v2590 = vadd.f32 %v2514, 1.0
  %v2591 = vadd.f32 %v2516, 1.0
  %v2592 = vadd.f32 %v2518, 1.0
  %v2593 = vadd.f32 %v2520, 1.0
  %v2594 = vadd.f32 %v2522, 1.0
  %v2595 = vadd.f32 %v2524, 1.0
  %v2596 = vadd.f32 %v2526, 1.0
  %v2597 = vadd.f32 %v2528, 1.0
  %v2598 = vadd.f32 %v2530, 1.0
  %v2599 = vadd.f32 %v2532, 1.0
  %v2600 = vadd.f32 %v2534, 1.0
  %v2601 = vadd.f32 %v2536, 1.0
  %v2602 = vadd.f32 %v2538, 1.0
  %v2603 = vrcp.pop %v2539
  %v2604 = vmul.f32 1.0, %v2603
  %v2605 = vrcp.pop %v2540
  %v2606 = vmul.f32 1.0, %v2605
  %v2607 = vrcp.pop %v2541
  %v2608 = vmul.f32 1.0, %v2607
  %v2609 = vrcp.pop %v2542
  %v2610 = vmul.f32 1.0, %v2609
  %v2611 = vrcp.pop %v2543
  %v2612 = vmul.f32 1.0, %v2611
  %v2613 = vrcp.pop %v2544
  %v2614 = vmul.f32 1.0, %v2613
  %v2615 = vrcp.pop %v2545
  %v2616 = vmul.f32 1.0, %v2615
  %v2617 = vrcp.pop %v2546
  %v2618 = vmul.f32 1.0, %v2617
  %v2619 = vrcp.pop %v2547
  %v2620 = vmul.f32 1.0, %v2619
  %v2621 = vrcp.pop %v2548
  %v2622 = vmul.f32 1.0, %v2621
  %v2623 = vrcp.pop %v2549
  %v2624 = vmul.f32 1.0, %v2623
  %v2625 = vrcp.pop %v2550
  %v2626 = vmul.f32 1.0, %v2625
  %v2627 = vrcp.pop %v2551
  %v2628 = vmul.f32 1.0, %v2627
  %v2629 = vrcp.pop %v2552
  %v2630 = vmul.f32 1.0, %v2629
  %v2631 = vrcp.pop %v2553
  %v2632 = vmul.f32 1.0, %v2631
  %v2633 = vrcp.pop %v2554
  %v2634 = vmul.f32 1.0, %v2633
  %v2635 = vrcp.pop %v2555
  %v2636 = vmul.f32 1.0, %v2635
  %v2637 = vrcp.pop %v2556
  %v2638 = vmul.f32 1.0, %v2637
  %v2639 = vrcp.pop %v2557
  %v2640 = vmul.f32 1.0, %v2639
  %v2641 = vrcp.pop %v2558
  %v2642 = vmul.f32 1.0, %v2641
  %v2643 = vrcp.pop %v2559
  %v2644 = vmul.f32 1.0, %v2643
  %v2645 = vrcp.pop %v2560
  %v2646 = vmul.f32 1.0, %v2645
  %v2647 = vrcp.pop %v2561
  %v2648 = vmul.f32 1.0, %v2647
  %v2649 = vrcp.pop %v2562
  %v2650 = vmul.f32 1.0, %v2649
  %v2651 = vrcp.pop %v2563
  %v2652 = vmul.f32 1.0, %v2651
  %v2653 = vrcp.pop %v2564
  %v2654 = vmul.f32 1.0, %v2653
  %v2655 = vrcp.pop %v2565
  %v2656 = vmul.f32 1.0, %v2655
  %v2657 = vrcp.pop %v2566
  %v2658 = vmul.f32 1.0, %v2657
  %v2659 = vrcp.pop %v2567
  %v2660 = vmul.f32 1.0, %v2659
  %v2661 = vrcp.pop %v2568
  %v2662 = vmul.f32 1.0, %v2661
  %v2663 = vrcp.pop %v2569
  %v2664 = vmul.f32 1.0, %v2663
  %v2665 = vrcp.pop %v2570
  %v2666 = vmul.f32 1.0, %v2665
  %v2667 = vrcp.pop %v2571
  %v2668 = vmul.f32 1.0, %v2667
  %v2669 = vrcp.pop %v2572
  %v2670 = vmul.f32 1.0, %v2669
  %v2671 = vrcp.pop %v2573
  %v2672 = vmul.f32 1.0, %v2671
  %v2673 = vrcp.pop %v2574
  %v2674 = vmul.f32 1.0, %v2673
  %v2675 = vrcp.pop %v2575
  %v2676 = vmul.f32 1.0, %v2675
  %v2677 = vrcp.pop %v2576
  %v2678 = vmul.f32 1.0, %v2677
  %v2679 = vrcp.pop %v2577
  %v2680 = vmul.f32 1.0, %v2679
  %v2681 = vrcp.pop %v2578
  %v2682 = vmul.f32 1.0, %v2681
  %v2683 = vrcp.pop %v2579
  %v2684 = vmul.f32 1.0, %v2683
  %v2685 = vrcp.pop %v2580
  %v2686 = vmul.f32 1.0, %v2685
  %v2687 = vrcp.pop %v2581
  %v2688 = vmul.f32 1.0, %v2687
  %v2689 = vrcp.pop %v2582
  %v2690 = vmul.f32 1.0, %v2689
  %v2691 = vrcp.pop %v2583
  %v2692 = vmul.f32 1.0, %v2691
  %v2693 = vrcp.pop %v2584
  %v2694 = vmul.f32 1.0, %v2693
  %v2695 = vrcp.pop %v2585
  %v2696 = vmul.f32 1.0, %v2695
  %v2697 = vrcp.pop %v2586
  %v2698 = vmul.f32 1.0, %v2697
  %v2699 = vrcp.pop %v2587
  %v2700 = vmul.f32 1.0, %v2699
  %v2701 = vrcp.pop %v2588
  %v2702 = vmul.f32 1.0, %v2701
  %v2703 = vrcp.pop %v2589
  %v2704 = vmul.f32 1.0, %v2703
  %v2705 = vrcp.pop %v2590
  %v2706 = vmul.f32 1.0, %v2705
  %v2707 = vrcp.pop %v2591
  %v2708 = vmul.f32 1.0, %v2707
  %v2709 = vrcp.pop %v2592
  %v2710 = vmul.f32 1.0, %v2709
  %v2711 = vrcp.pop %v2593
  %v2712 = vmul.f32 1.0, %v2711
  %v2713 = vrcp.pop %v2594
  %v2714 = vmul.f32 1.0, %v2713
  %v2715 = vrcp.pop %v2595
  %v2716 = vmul.f32 1.0, %v2715
  %v2717 = vrcp.pop %v2596
  %v2718 = vmul.f32 1.0, %v2717
  %v2719 = vrcp.pop %v2597
  %v2720 = vmul.f32 1.0, %v2719
  %v2721 = vrcp.pop %v2598
  %v2722 = vmul.f32 1.0, %v2721
  %v2723 = vrcp.pop %v2599
  %v2724 = vmul.f32 1.0, %v2723
  %v2725 = vrcp.pop %v2600
  %v2726 = vmul.f32 1.0, %v2725
  %v2727 = vrcp.pop %v2601
  %v2728 = vmul.f32 1.0, %v2727
  %v2729 = vrcp.pop %v2602
  %v2730 = vmul.f32 1.0, %v2729
  %v2731 = vmul.f32 %v2283, %v2604
  %v2732 = vmul.f32 %v2284, %v2606
  %v2733 = vmul.f32 %v2285, %v2608
  %v2734 = vmul.f32 %v2286, %v2610
  %v2735 = vmul.f32 %v2287, %v2612
  %v2736 = vmul.f32 %v2288, %v2614
  %v2737 = vmul.f32 %v2289, %v2616
  %v2738 = vmul.f32 %v2290, %v2618
  %v2739 = vmul.f32 %v2291, %v2620
  %v2740 = vmul.f32 %v2292, %v2622
  %v2741 = vmul.f32 %v2293, %v2624
  %v2742 = vmul.f32 %v2294, %v2626
  %v2743 = vmul.f32 %v2295, %v2628
  %v2744 = vmul.f32 %v2296, %v2630
  %v2745 = vmul.f32 %v2297, %v2632
  %v2746 = vmul.f32 %v2298, %v2634
  %v2747 = vmul.f32 %v2299, %v2636
  %v2748 = vmul.f32 %v2300, %v2638
  %v2749 = vmul.f32 %v2301, %v2640
  %v2750 = vmul.f32 %v2302, %v2642
  %v2751 = vmul.f32 %v2303, %v2644
  %v2752 = vmul.f32 %v2304, %v2646
  %v2753 = vmul.f32 %v2305, %v2648
  %v2754 = vmul.f32 %v2306, %v2650
  %v2755 = vmul.f32 %v2307, %v2652
  %v2756 = vmul.f32 %v2308, %v2654
  %v2757 = vmul.f32 %v2309, %v2656
  %v2758 = vmul.f32 %v2310, %v2658
  %v2759 = vmul.f32 %v2311, %v2660
  %v2760 = vmul.f32 %v2312, %v2662
  %v2761 = vmul.f32 %v2313, %v2664
  %v2762 = vmul.f32 %v2314, %v2666
  %v2763 = vmul.f32 %v2315, %v2668
  %v2764 = vmul.f32 %v2316, %v2670
  %v2765 = vmul.f32 %v2317, %v2672
  %v2766 = vmul.f32 %v2318, %v2674
  %v2767 = vmul.f32 %v2319, %v2676
  %v2768 = vmul.f32 %v2320, %v2678
  %v2769 = vmul.f32 %v2321, %v2680
  %v2770 = vmul.f32 %v2322, %v2682
  %v2771 = vmul.f32 %v2323, %v2684
  %v2772 = vmul.f32 %v2324, %v2686
  %v2773 = vmul.f32 %v2325, %v2688
  %v2774 = vmul.f32 %v2326, %v2690
  %v2775 = vmul.f32 %v2327, %v2692
  %v2776 = vmul.f32 %v2328, %v2694
  %v2777 = vmul.f32 %v2329, %v2696
  %v2778 = vmul.f32 %v2330, %v2698
  %v2779 = vmul.f32 %v2331, %v2700
  %v2780 = vmul.f32 %v2332, %v2702
  %v2781 = vmul.f32 %v2333, %v2704
  %v2782 = vmul.f32 %v2334, %v2706
  %v2783 = vmul.f32 %v2335, %v2708
  %v2784 = vmul.f32 %v2336, %v2710
  %v2785 = vmul.f32 %v2337, %v2712
  %v2786 = vmul.f32 %v2338, %v2714
  %v2787 = vmul.f32 %v2339, %v2716
  %v2788 = vmul.f32 %v2340, %v2718
  %v2789 = vmul.f32 %v2341, %v2720
  %v2790 = vmul.f32 %v2342, %v2722
  %v2791 = vmul.f32 %v2343, %v2724
  %v2792 = vmul.f32 %v2344, %v2726
  %v2793 = vmul.f32 %v2345, %v2728
  %v2794 = vmul.f32 %v2346, %v2730
  %v2795 = vld [vmem:[%s3] sm:$0xff]
  %v2796 = vld [vmem:[%s3 + $0x8] sm:$0xff]
  %v2797 = vld [vmem:[%s3 + $0x10] sm:$0xff]
  %v2798 = vld [vmem:[%s3 + $0x18] sm:$0xff]
  %v2799 = vld [vmem:[%s3 + $0x20] sm:$0xff]
  %v2800 = vld [vmem:[%s3 + $0x28] sm:$0xff]
  %v2801 = vld [vmem:[%s3 + $0x30] sm:$0xff]
  %v2802 = vld [vmem:[%s3 + $0x38] sm:$0xff]
  %v2803 = vld [vmem:[%s3 + $0x40] sm:$0xff]
  %v2804 = vld [vmem:[%s3 + $0x48] sm:$0xff]
  %v2805 = vld [vmem:[%s3 + $0x50] sm:$0xff]
  %v2806 = vld [vmem:[%s3 + $0x58] sm:$0xff]
  %v2807 = vld [vmem:[%s3 + $0x60] sm:$0xff]
  %v2808 = vld [vmem:[%s3 + $0x68] sm:$0xff]
  %v2809 = vld [vmem:[%s3 + $0x70] sm:$0xff]
  %v2810 = vld [vmem:[%s3 + $0x78] sm:$0xff]
  %v2811 = vld [vmem:[%s3 + $0x80] sm:$0xff]
  %v2812 = vld [vmem:[%s3 + $0x88] sm:$0xff]
  %v2813 = vld [vmem:[%s3 + $0x90] sm:$0xff]
  %v2814 = vld [vmem:[%s3 + $0x98] sm:$0xff]
  %v2815 = vld [vmem:[%s3 + $0xa0] sm:$0xff]
  %v2816 = vld [vmem:[%s3 + $0xa8] sm:$0xff]
  %v2817 = vld [vmem:[%s3 + $0xb0] sm:$0xff]
  %v2818 = vld [vmem:[%s3 + $0xb8] sm:$0xff]
  %v2819 = vld [vmem:[%s3 + $0xc0] sm:$0xff]
  %v2820 = vld [vmem:[%s3 + $0xc8] sm:$0xff]
  %v2821 = vld [vmem:[%s3 + $0xd0] sm:$0xff]
  %v2822 = vld [vmem:[%s3 + $0xd8] sm:$0xff]
  %v2823 = vld [vmem:[%s3 + $0xe0] sm:$0xff]
  %v2824 = vld [vmem:[%s3 + $0xe8] sm:$0xff]
  %v2825 = vld [vmem:[%s3 + $0xf0] sm:$0xff]
  %v2826 = vld [vmem:[%s3 + $0xf8] sm:$0xff]
  %v2827 = vld [vmem:[%s3 + $0x100] sm:$0xff]
  %v2828 = vld [vmem:[%s3 + $0x108] sm:$0xff]
  %v2829 = vld [vmem:[%s3 + $0x110] sm:$0xff]
  %v2830 = vld [vmem:[%s3 + $0x118] sm:$0xff]
  %v2831 = vld [vmem:[%s3 + $0x120] sm:$0xff]
  %v2832 = vld [vmem:[%s3 + $0x128] sm:$0xff]
  %v2833 = vld [vmem:[%s3 + $0x130] sm:$0xff]
  %v2834 = vld [vmem:[%s3 + $0x138] sm:$0xff]
  %v2835 = vld [vmem:[%s3 + $0x140] sm:$0xff]
  %v2836 = vld [vmem:[%s3 + $0x148] sm:$0xff]
  %v2837 = vld [vmem:[%s3 + $0x150] sm:$0xff]
  %v2838 = vld [vmem:[%s3 + $0x158] sm:$0xff]
  %v2839 = vld [vmem:[%s3 + $0x160] sm:$0xff]
  %v2840 = vld [vmem:[%s3 + $0x168] sm:$0xff]
  %v2841 = vld [vmem:[%s3 + $0x170] sm:$0xff]
  %v2842 = vld [vmem:[%s3 + $0x178] sm:$0xff]
  %v2843 = vld [vmem:[%s3 + $0x180] sm:$0xff]
  %v2844 = vld [vmem:[%s3 + $0x188] sm:$0xff]
  %v2845 = vld [vmem:[%s3 + $0x190] sm:$0xff]
  %v2846 = vld [vmem:[%s3 + $0x198] sm:$0xff]
  %v2847 = vld [vmem:[%s3 + $0x1a0] sm:$0xff]
  %v2848 = vld [vmem:[%s3 + $0x1a8] sm:$0xff]
  %v2849 = vld [vmem:[%s3 + $0x1b0] sm:$0xff]
  %v2850 = vld [vmem:[%s3 + $0x1b8] sm:$0xff]
  %v2851 = vld [vmem:[%s3 + $0x1c0] sm:$0xff]
  %v2852 = vld [vmem:[%s3 + $0x1c8] sm:$0xff]
  %v2853 = vld [vmem:[%s3 + $0x1d0] sm:$0xff]
  %v2854 = vld [vmem:[%s3 + $0x1d8] sm:$0xff]
  %v2855 = vld [vmem:[%s3 + $0x1e0] sm:$0xff]
  %v2856 = vld [vmem:[%s3 + $0x1e8] sm:$0xff]
  %v2857 = vld [vmem:[%s3 + $0x1f0] sm:$0xff]
  %v2858 = vld [vmem:[%s3 + $0x1f8] sm:$0xff]
  %v2859 = vld [vmem:[%s3 + $0x200] sm:$0xff]
  %v2860 = vld [vmem:[%s3 + $0x208] sm:$0xff]
  %v2861 = vld [vmem:[%s3 + $0x210] sm:$0xff]
  %v2862 = vld [vmem:[%s3 + $0x218] sm:$0xff]
  %v2863 = vld [vmem:[%s3 + $0x220] sm:$0xff]
  %v2864 = vld [vmem:[%s3 + $0x228] sm:$0xff]
  %v2865 = vld [vmem:[%s3 + $0x230] sm:$0xff]
  %v2866 = vld [vmem:[%s3 + $0x238] sm:$0xff]
  %v2867 = vld [vmem:[%s3 + $0x240] sm:$0xff]
  %v2868 = vld [vmem:[%s3 + $0x248] sm:$0xff]
  %v2869 = vld [vmem:[%s3 + $0x250] sm:$0xff]
  %v2870 = vld [vmem:[%s3 + $0x258] sm:$0xff]
  %v2871 = vld [vmem:[%s3 + $0x260] sm:$0xff]
  %v2872 = vld [vmem:[%s3 + $0x268] sm:$0xff]
  %v2873 = vld [vmem:[%s3 + $0x270] sm:$0xff]
  %v2874 = vld [vmem:[%s3 + $0x278] sm:$0xff]
  %v2875 = vld [vmem:[%s3 + $0x280] sm:$0xff]
  %v2876 = vld [vmem:[%s3 + $0x288] sm:$0xff]
  %v2877 = vld [vmem:[%s3 + $0x290] sm:$0xff]
  %v2878 = vld [vmem:[%s3 + $0x298] sm:$0xff]
  %v2879 = vld [vmem:[%s3 + $0x2a0] sm:$0xff]
  %v2880 = vld [vmem:[%s3 + $0x2a8] sm:$0xff]
  %v2881 = vld [vmem:[%s3 + $0x2b0] sm:$0xff]
  %v2882 = vld [vmem:[%s3 + $0x2b8] sm:$0xff]
  %v2883 = vld [vmem:[%s3 + $0x2c0] sm:$0xff]
  %v2884 = vld [vmem:[%s3 + $0x2c8] sm:$0xff]
  %v2885 = vld [vmem:[%s3 + $0x2d0] sm:$0xff]
  %v2886 = vld [vmem:[%s3 + $0x2d8] sm:$0xff]
  %v2887 = vld [vmem:[%s3 + $0x2e0] sm:$0xff]
  %v2888 = vld [vmem:[%s3 + $0x2e8] sm:$0xff]
  %v2889 = vld [vmem:[%s3 + $0x2f0] sm:$0xff]
  %v2890 = vld [vmem:[%s3 + $0x2f8] sm:$0xff]
  %v2891 = vld [vmem:[%s3 + $0x300] sm:$0xff]
  %v2892 = vld [vmem:[%s3 + $0x308] sm:$0xff]
  %v2893 = vld [vmem:[%s3 + $0x310] sm:$0xff]
  %v2894 = vld [vmem:[%s3 + $0x318] sm:$0xff]
  %2895 = vmatprep.subr.mxu0 %v2732
  %2896 = vmatpush1.msra.mxu0 %v2731
  %2897 = vmatprep.subr.mxu0 %v2734
  %2898 = vmatpush1.msra.mxu0 %v2733
  %2899 = vmatprep.subr.mxu0 %v2736
  %2900 = vmatpush1.msra.mxu0 %v2735
  %2901 = vmatprep.subr.mxu0 %v2738
  %2902 = vmatpush1.msra.mxu0 %v2737
  %2903 = vmatprep.subr.mxu0 %v2740
  %2904 = vmatpush1.msra.mxu0 %v2739
  %2905 = vmatprep.subr.mxu0 %v2742
  %2906 = vmatpush1.msra.mxu0 %v2741
  %2907 = vmatprep.subr.mxu0 %v2744
  %2908 = vmatpush1.msra.mxu0 %v2743
  %2909 = vmatprep.subr.mxu0 %v2746
  %2910 = vmatpush1.msra.mxu0 %v2745
  %2911 = vmatprep.subr.mxu0 %v2748
  %2912 = vmatpush1.msra.mxu0 %v2747
  %2913 = vmatprep.subr.mxu0 %v2750
  %2914 = vmatpush1.msra.mxu0 %v2749
  %2915 = vmatprep.subr.mxu0 %v2752
  %2916 = vmatpush1.msra.mxu0 %v2751
  %2917 = vmatprep.subr.mxu0 %v2754
  %2918 = vmatpush1.msra.mxu0 %v2753
  %2919 = vmatprep.subr.mxu0 %v2756
  %2920 = vmatpush1.msra.mxu0 %v2755
  %2921 = vmatprep.subr.mxu0 %v2758
  %2922 = vmatpush1.msra.mxu0 %v2757
  %2923 = vmatprep.subr.mxu0 %v2760
  %2924 = vmatpush1.msra.mxu0 %v2759
  %2925 = vmatprep.subr.mxu0 %v2762
  %2926 = vmatpush1.msra.mxu0 %v2761
  %2927 = vmatprep.subr.mxu0 %v2764
  %2928 = vmatpush1.msra.mxu0 %v2763
  %2929 = vmatprep.subr.mxu0 %v2766
  %2930 = vmatpush1.msra.mxu0 %v2765
  %2931 = vmatprep.subr.mxu0 %v2768
  %2932 = vmatpush1.msra.mxu0 %v2767
  %2933 = vmatprep.subr.mxu0 %v2770
  %2934 = vmatpush1.msra.mxu0 %v2769
  %2935 = vmatprep.subr.mxu0 %v2772
  %2936 = vmatpush1.msra.mxu0 %v2771
  %2937 = vmatprep.subr.mxu0 %v2774
  %2938 = vmatpush1.msra.mxu0 %v2773
  %2939 = vmatprep.subr.mxu0 %v2776
  %2940 = vmatpush1.msra.mxu0 %v2775
  %2941 = vmatprep.subr.mxu0 %v2778
  %2942 = vmatpush1.msra.mxu0 %v2777
  %2943 = vmatprep.subr.mxu0 %v2780
  %2944 = vmatpush1.msra.mxu0 %v2779
  %2945 = vmatprep.subr.mxu0 %v2782
  %2946 = vmatpush1.msra.mxu0 %v2781
  %2947 = vmatprep.subr.mxu0 %v2784
  %2948 = vmatpush1.msra.mxu0 %v2783
  %2949 = vmatprep.subr.mxu0 %v2786
  %2950 = vmatpush1.msra.mxu0 %v2785
  %2951 = vmatprep.subr.mxu0 %v2788
  %2952 = vmatpush1.msra.mxu0 %v2787
  %2953 = vmatprep.subr.mxu0 %v2790
  %2954 = vmatpush1.msra.mxu0 %v2789
  %2955 = vmatprep.subr.mxu0 %v2792
  %2956 = vmatpush1.msra.mxu0 %v2791
  %2957 = vmatprep.subr.mxu0 %v2794
  %2958 = vmatpush1.msra.mxu0 %v2793
  %2959 = vmatprep.mubr.f32.mxu0 %v2796
  %2960 = vmatmul.mubr.f32.gmra.mrb[0].mxu0 %v2795
  %v2961 = vpop.f32.mrb[0].mxu0
  %v2962 = vadd.f32 0.0, %v2961
  %v2963 = vpop.f32.mrb[0].mxu0
  %v2964 = vadd.f32 0.0, %v2963
  %2965 = vmatprep.mubr.f32.mxu0 %v2798
  %2966 = vmatmul.mubr.f32.gmra.mrb[0].mxu0 %v2797
  %v2967 = vpop.f32.mrb[0].mxu0
  %v2968 = vadd.f32 0.0, %v2967
  %v2969 = vpop.f32.mrb[0].mxu0
  %v2970 = vadd.f32 0.0, %v2969
  %2971 = vmatprep.mubr.f32.mxu0 %v2800
  %2972 = vmatmul.mubr.f32.gmra.mrb[0].mxu0 %v2799
  %v2973 = vpop.f32.mrb[0].mxu0
  %v2974 = vadd.f32 0.0, %v2973
  %v2975 = vpop.f32.mrb[0].mxu0
  %v2976 = vadd.f32 0.0, %v2975
  %2977 = vmatprep.mubr.f32.mxu0 %v2802
  %2978 = vmatmul.mubr.f32.gmra.mrb[0].mxu0 %v2801
  %v2979 = vpop.f32.mrb[0].mxu0
  %v2980 = vadd.f32 0.0, %v2979
  %v2981 = vpop.f32.mrb[0].mxu0
  %v2982 = vadd.f32 0.0, %v2981
  %2983 = vmatprep.mubr.f32.mxu0 %v2804
  %2984 = vmatmul.mubr.f32.gmra.mrb[0].mxu0 %v2803
  %v2985 = vpop.f32.mrb[0].mxu0
  %v2986 = vadd.f32 0.0, %v2985
  %v2987 = vpop.f32.mrb[0].mxu0
  %v2988 = vadd.f32 0.0, %v2987
  %2989 = vmatprep.mubr.f32.mxu0 %v2806
  %2990 = vmatmul.mubr.f32.gmra.mrb[0].mxu0 %v2805
  %v2991 = vpop.f32.mrb[0].mxu0
  %v2992 = vadd.f32 0.0, %v2991
  %v2993 = vpop.f32.mrb[0].mxu0
  %v2994 = vadd.f32 0.0, %v2993
  %2995 = vmatprep.mubr.f32.mxu0 %v2808
  %2996 = vmatmul.mubr.f32.gmra.mrb[0].mxu0 %v2807
  %v2997 = vpop.f32.mrb[0].mxu0
  %v2998 = vadd.f32 0.0, %v2997
  %v2999 = vpop.f32.mrb[0].mxu0
  %v3000 = vadd.f32 0.0, %v2999
  %3001 = vmatprep.mubr.f32.mxu0 %v2810
  %3002 = vmatmul.mubr.f32.gmra.mrb[0].mxu0 %v2809
  %v3003 = vpop.f32.mrb[0].mxu0
  %v3004 = vadd.f32 0.0, %v3003
  %v3005 = vpop.f32.mrb[0].mxu0
  %v3006 = vadd.f32 0.0, %v3005
  %3007 = vmatprep.mubr.f32.mxu0 %v2812
  %3008 = vmatmul.mubr.f32.gmra.mrb[0].mxu0 %v2811
  %v3009 = vpop.f32.mrb[0].mxu0
  %v3010 = vadd.f32 0.0, %v3009
  %v3011 = vpop.f32.mrb[0].mxu0
  %v3012 = vadd.f32 0.0, %v3011
  %3013 = vmatprep.mubr.f32.mxu0 %v2814
  %3014 = vmatmul.mubr.f32.gmra.mrb[0].mxu0 %v2813
  %v3015 = vpop.f32.mrb[0].mxu0
  %v3016 = vadd.f32 0.0, %v3015
  %v3017 = vpop.f32.mrb[0].mxu0
  %v3018 = vadd.f32 0.0, %v3017
  %3019 = vmatprep.mubr.f32.mxu0 %v2816
  %3020 = vmatmul.mubr.f32.gmra.mrb[0].mxu0 %v2815
  %v3021 = vpop.f32.mrb[0].mxu0
  %v3022 = vadd.f32 0.0, %v3021
  %v3023 = vpop.f32.mrb[0].mxu0
  %v3024 = vadd.f32 0.0, %v3023
  %3025 = vmatprep.mubr.f32.mxu0 %v2818
  %3026 = vmatmul.mubr.f32.gmra.mrb[0].mxu0 %v2817
  %v3027 = vpop.f32.mrb[0].mxu0
  %v3028 = vadd.f32 0.0, %v3027
  %v3029 = vpop.f32.mrb[0].mxu0
  %v3030 = vadd.f32 0.0, %v3029
  %3031 = vmatprep.mubr.f32.mxu0 %v2820
  %3032 = vmatmul.mubr.f32.gmra.mrb[0].mxu0 %v2819
  %v3033 = vpop.f32.mrb[0].mxu0
  %v3034 = vadd.f32 0.0, %v3033
  %v3035 = vpop.f32.mrb[0].mxu0
  %v3036 = vadd.f32 0.0, %v3035
  %3037 = vmatprep.mubr.f32.mxu0 %v2822
  %3038 = vmatmul.mubr.f32.gmra.mrb[0].mxu0 %v2821
  %v3039 = vpop.f32.mrb[0].mxu0
  %v3040 = vadd.f32 0.0, %v3039
  %v3041 = vpop.f32.mrb[0].mxu0
  %v3042 = vadd.f32 0.0, %v3041
  %3043 = vmatprep.mubr.f32.mxu0 %v2824
  %3044 = vmatmul.mubr.f32.gmra.mrb[0].mxu0 %v2823
  %v3045 = vpop.f32.mrb[0].mxu0
  %v3046 = vadd.f32 0.0, %v3045
  %v3047 = vpop.f32.mrb[0].mxu0
  %v3048 = vadd.f32 0.0, %v3047
  %3049 = vmatprep.mubr.f32.mxu0 %v2826
  %3050 = vmatmul.mubr.f32.gmra.mrb[0].mxu0 %v2825
  %v3051 = vpop.f32.mrb[0].mxu0
  %v3052 = vadd.f32 0.0, %v3051
  %v3053 = vpop.f32.mrb[0].mxu0
  %v3054 = vadd.f32 0.0, %v3053
  %3055 = vmatprep.mubr.f32.mxu0 %v2828
  %3056 = vmatmul.mubr.f32.gmra.mrb[0].mxu0 %v2827
  %v3057 = vpop.f32.mrb[0].mxu0
  %v3058 = vadd.f32 0.0, %v3057
  %v3059 = vpop.f32.mrb[0].mxu0
  %v3060 = vadd.f32 0.0, %v3059
  %3061 = vmatprep.mubr.f32.mxu0 %v2830
  %3062 = vmatmul.mubr.f32.gmra.mrb[0].mxu0 %v2829
  %v3063 = vpop.f32.mrb[0].mxu0
  %v3064 = vadd.f32 0.0, %v3063
  %v3065 = vpop.f32.mrb[0].mxu0
  %v3066 = vadd.f32 0.0, %v3065
  %3067 = vmatprep.mubr.f32.mxu0 %v2832
  %3068 = vmatmul.mubr.f32.gmra.mrb[0].mxu0 %v2831
  %v3069 = vpop.f32.mrb[0].mxu0
  %v3070 = vadd.f32 0.0, %v3069
  %v3071 = vpop.f32.mrb[0].mxu0
  %v3072 = vadd.f32 0.0, %v3071
  %3073 = vmatprep.mubr.f32.mxu0 %v2834
  %3074 = vmatmul.mubr.f32.gmra.mrb[0].mxu0 %v2833
  %v3075 = vpop.f32.mrb[0].mxu0
  %v3076 = vadd.f32 0.0, %v3075
  %v3077 = vpop.f32.mrb[0].mxu0
  %v3078 = vadd.f32 0.0, %v3077
  %3079 = vmatprep.mubr.f32.mxu0 %v2836
  %3080 = vmatmul.mubr.f32.gmra.mrb[0].mxu0 %v2835
  %v3081 = vpop.f32.mrb[0].mxu0
  %v3082 = vadd.f32 0.0, %v3081
  %v3083 = vpop.f32.mrb[0].mxu0
  %v3084 = vadd.f32 0.0, %v3083
  %3085 = vmatprep.mubr.f32.mxu0 %v2838
  %3086 = vmatmul.mubr.f32.gmra.mrb[0].mxu0 %v2837
  %v3087 = vpop.f32.mrb[0].mxu0
  %v3088 = vadd.f32 0.0, %v3087
  %v3089 = vpop.f32.mrb[0].mxu0
  %v3090 = vadd.f32 0.0, %v3089
  %3091 = vmatprep.mubr.f32.mxu0 %v2840
  %3092 = vmatmul.mubr.f32.gmra.mrb[0].mxu0 %v2839
  %v3093 = vpop.f32.mrb[0].mxu0
  %v3094 = vadd.f32 0.0, %v3093
  %v3095 = vpop.f32.mrb[0].mxu0
  %v3096 = vadd.f32 0.0, %v3095
  %3097 = vmatprep.mubr.f32.mxu0 %v2842
  %3098 = vmatmul.mubr.f32.gmra.mrb[0].mxu0 %v2841
  %v3099 = vpop.f32.mrb[0].mxu0
  %v3100 = vadd.f32 0.0, %v3099
  %v3101 = vpop.f32.mrb[0].mxu0
  %v3102 = vadd.f32 0.0, %v3101
  %3103 = vmatprep.mubr.f32.mxu0 %v2844
  %3104 = vmatmul.mubr.f32.gmra.mrb[0].mxu0 %v2843
  %v3105 = vpop.f32.mrb[0].mxu0
  %v3106 = vadd.f32 0.0, %v3105
  %v3107 = vpop.f32.mrb[0].mxu0
  %v3108 = vadd.f32 0.0, %v3107
  %3109 = vmatprep.mubr.f32.mxu0 %v2846
  %3110 = vmatmul.mubr.f32.gmra.mrb[0].mxu0 %v2845
  %v3111 = vpop.f32.mrb[0].mxu0
  %v3112 = vadd.f32 0.0, %v3111
  %v3113 = vpop.f32.mrb[0].mxu0
  %v3114 = vadd.f32 0.0, %v3113
  %3115 = vmatprep.mubr.f32.mxu0 %v2848
  %3116 = vmatmul.mubr.f32.gmra.mrb[0].mxu0 %v2847
  %v3117 = vpop.f32.mrb[0].mxu0
  %v3118 = vadd.f32 0.0, %v3117
  %v3119 = vpop.f32.mrb[0].mxu0
  %v3120 = vadd.f32 0.0, %v3119
  %3121 = vmatprep.mubr.f32.mxu0 %v2850
  %3122 = vmatmul.mubr.f32.gmra.mrb[0].mxu0 %v2849
  %v3123 = vpop.f32.mrb[0].mxu0
  %v3124 = vadd.f32 0.0, %v3123
  %v3125 = vpop.f32.mrb[0].mxu0
  %v3126 = vadd.f32 0.0, %v3125
  %3127 = vmatprep.mubr.f32.mxu0 %v2852
  %3128 = vmatmul.mubr.f32.gmra.mrb[0].mxu0 %v2851
  %v3129 = vpop.f32.mrb[0].mxu0
  %v3130 = vadd.f32 0.0, %v3129
  %v3131 = vpop.f32.mrb[0].mxu0
  %v3132 = vadd.f32 0.0, %v3131
  %3133 = vmatprep.mubr.f32.mxu0 %v2854
  %3134 = vmatmul.mubr.f32.gmra.mrb[0].mxu0 %v2853
  %v3135 = vpop.f32.mrb[0].mxu0
  %v3136 = vadd.f32 0.0, %v3135
  %v3137 = vpop.f32.mrb[0].mxu0
  %v3138 = vadd.f32 0.0, %v3137
  %3139 = vmatprep.mubr.f32.mxu0 %v2856
  %3140 = vmatmul.mubr.f32.gmra.mrb[0].mxu0 %v2855
  %v3141 = vpop.f32.mrb[0].mxu0
  %v3142 = vadd.f32 0.0, %v3141
  %v3143 = vpop.f32.mrb[0].mxu0
  %v3144 = vadd.f32 0.0, %v3143
  %3145 = vmatprep.mubr.f32.mxu0 %v2858
  %3146 = vmatmul.mubr.f32.gmra.mrb[0].mxu0 %v2857
  %v3147 = vpop.f32.mrb[0].mxu0
  %v3148 = vadd.f32 0.0, %v3147
  %v3149 = vpop.f32.mrb[0].mxu0
  %v3150 = vadd.f32 0.0, %v3149
  %3151 = vmatprep.mubr.f32.mxu0 %v2860
  %3152 = vmatmul.mubr.f32.gmra.mrb[0].mxu0 %v2859
  %v3153 = vpop.f32.mrb[0].mxu0
  %v3154 = vadd.f32 0.0, %v3153
  %v3155 = vpop.f32.mrb[0].mxu0
  %v3156 = vadd.f32 0.0, %v3155
  %3157 = vmatprep.mubr.f32.mxu0 %v2862
  %3158 = vmatmul.mubr.f32.gmra.mrb[0].mxu0 %v2861
  %v3159 = vpop.f32.mrb[0].mxu0
  %v3160 = vadd.f32 0.0, %v3159
  %v3161 = vpop.f32.mrb[0].mxu0
  %v3162 = vadd.f32 0.0, %v3161
  %3163 = vmatprep.mubr.f32.mxu0 %v2864
  %3164 = vmatmul.mubr.f32.gmra.mrb[0].mxu0 %v2863
  %v3165 = vpop.f32.mrb[0].mxu0
  %v3166 = vadd.f32 0.0, %v3165
  %v3167 = vpop.f32.mrb[0].mxu0
  %v3168 = vadd.f32 0.0, %v3167
  %3169 = vmatprep.mubr.f32.mxu0 %v2866
  %3170 = vmatmul.mubr.f32.gmra.mrb[0].mxu0 %v2865
  %v3171 = vpop.f32.mrb[0].mxu0
  %v3172 = vadd.f32 0.0, %v3171
  %v3173 = vpop.f32.mrb[0].mxu0
  %v3174 = vadd.f32 0.0, %v3173
  %3175 = vmatprep.mubr.f32.mxu0 %v2868
  %3176 = vmatmul.mubr.f32.gmra.mrb[0].mxu0 %v2867
  %v3177 = vpop.f32.mrb[0].mxu0
  %v3178 = vadd.f32 0.0, %v3177
  %v3179 = vpop.f32.mrb[0].mxu0
  %v3180 = vadd.f32 0.0, %v3179
  %3181 = vmatprep.mubr.f32.mxu0 %v2870
  %3182 = vmatmul.mubr.f32.gmra.mrb[0].mxu0 %v2869
  %v3183 = vpop.f32.mrb[0].mxu0
  %v3184 = vadd.f32 0.0, %v3183
  %v3185 = vpop.f32.mrb[0].mxu0
  %v3186 = vadd.f32 0.0, %v3185
  %3187 = vmatprep.mubr.f32.mxu0 %v2872
  %3188 = vmatmul.mubr.f32.gmra.mrb[0].mxu0 %v2871
  %v3189 = vpop.f32.mrb[0].mxu0
  %v3190 = vadd.f32 0.0, %v3189
  %v3191 = vpop.f32.mrb[0].mxu0
  %v3192 = vadd.f32 0.0, %v3191
  %3193 = vmatprep.mubr.f32.mxu0 %v2874
  %3194 = vmatmul.mubr.f32.gmra.mrb[0].mxu0 %v2873
  %v3195 = vpop.f32.mrb[0].mxu0
  %v3196 = vadd.f32 0.0, %v3195
  %v3197 = vpop.f32.mrb[0].mxu0
  %v3198 = vadd.f32 0.0, %v3197
  %3199 = vmatprep.mubr.f32.mxu0 %v2876
  %3200 = vmatmul.mubr.f32.gmra.mrb[0].mxu0 %v2875
  %v3201 = vpop.f32.mrb[0].mxu0
  %v3202 = vadd.f32 0.0, %v3201
  %v3203 = vpop.f32.mrb[0].mxu0
  %v3204 = vadd.f32 0.0, %v3203
  %3205 = vmatprep.mubr.f32.mxu0 %v2878
  %3206 = vmatmul.mubr.f32.gmra.mrb[0].mxu0 %v2877
  %v3207 = vpop.f32.mrb[0].mxu0
  %v3208 = vadd.f32 0.0, %v3207
  %v3209 = vpop.f32.mrb[0].mxu0
  %v3210 = vadd.f32 0.0, %v3209
  %3211 = vmatprep.mubr.f32.mxu0 %v2880
  %3212 = vmatmul.mubr.f32.gmra.mrb[0].mxu0 %v2879
  %v3213 = vpop.f32.mrb[0].mxu0
  %v3214 = vadd.f32 0.0, %v3213
  %v3215 = vpop.f32.mrb[0].mxu0
  %v3216 = vadd.f32 0.0, %v3215
  %3217 = vmatprep.mubr.f32.mxu0 %v2882
  %3218 = vmatmul.mubr.f32.gmra.mrb[0].mxu0 %v2881
  %v3219 = vpop.f32.mrb[0].mxu0
  %v3220 = vadd.f32 0.0, %v3219
  %v3221 = vpop.f32.mrb[0].mxu0
  %v3222 = vadd.f32 0.0, %v3221
  %3223 = vmatprep.mubr.f32.mxu0 %v2884
  %3224 = vmatmul.mubr.f32.gmra.mrb[0].mxu0 %v2883
  %v3225 = vpop.f32.mrb[0].mxu0
  %v3226 = vadd.f32 0.0, %v3225
  %v3227 = vpop.f32.mrb[0].mxu0
  %v3228 = vadd.f32 0.0, %v3227
  %3229 = vmatprep.mubr.f32.mxu0 %v2886
  %3230 = vmatmul.mubr.f32.gmra.mrb[0].mxu0 %v2885
  %v3231 = vpop.f32.mrb[0].mxu0
  %v3232 = vadd.f32 0.0, %v3231
  %v3233 = vpop.f32.mrb[0].mxu0
  %v3234 = vadd.f32 0.0, %v3233
  %3235 = vmatprep.mubr.f32.mxu0 %v2888
  %3236 = vmatmul.mubr.f32.gmra.mrb[0].mxu0 %v2887
  %v3237 = vpop.f32.mrb[0].mxu0
  %v3238 = vadd.f32 0.0, %v3237
  %v3239 = vpop.f32.mrb[0].mxu0
  %v3240 = vadd.f32 0.0, %v3239
  %3241 = vmatprep.mubr.f32.mxu0 %v2890
  %3242 = vmatmul.mubr.f32.gmra.mrb[0].mxu0 %v2889
  %v3243 = vpop.f32.mrb[0].mxu0
  %v3244 = vadd.f32 0.0, %v3243
  %v3245 = vpop.f32.mrb[0].mxu0
  %v3246 = vadd.f32 0.0, %v3245
  %3247 = vmatprep.mubr.f32.mxu0 %v2892
  %3248 = vmatmul.mubr.f32.gmra.mrb[0].mxu0 %v2891
  %v3249 = vpop.f32.mrb[0].mxu0
  %v3250 = vadd.f32 0.0, %v3249
  %v3251 = vpop.f32.mrb[0].mxu0
  %v3252 = vadd.f32 0.0, %v3251
  %3253 = vmatprep.mubr.f32.mxu0 %v2894
  %3254 = vmatmul.mubr.f32.gmra.mrb[0].mxu0 %v2893
  %v3255 = vpop.f32.mrb[0].mxu0
  %v3256 = vadd.f32 0.0, %v3255
  %v3257 = vpop.f32.mrb[0].mxu0
  %v3258 = vadd.f32 0.0, %v3257
  %3259 = vdwg.mxu0
  %v3260 = vld [vmem:[%s5] sm:$0x3]
  %v3261 = vld [vmem:[%s4] sm:$0xff]
  %v3262 = vld [vmem:[%s4 + $0x8] sm:$0xff]
  %v3263 = vld [vmem:[%s4 + $0x10] sm:$0xff]
  %v3264 = vld [vmem:[%s4 + $0x18] sm:$0xff]
  %v3265 = vld [vmem:[%s4 + $0x20] sm:$0xff]
  %v3266 = vld [vmem:[%s4 + $0x28] sm:$0xff]
  %v3267 = vld [vmem:[%s4 + $0x30] sm:$0xff]
  %v3268 = vld [vmem:[%s4 + $0x38] sm:$0xff]
  %v3269 = vld [vmem:[%s4 + $0x40] sm:$0xff]
  %v3270 = vld [vmem:[%s4 + $0x48] sm:$0xff]
  %v3271 = vld [vmem:[%s4 + $0x50] sm:$0xff]
  %v3272 = vld [vmem:[%s4 + $0x58] sm:$0xff]
  %v3273 = vld [vmem:[%s4 + $0x60] sm:$0xff]
  %v3274 = vld [vmem:[%s4 + $0x68] sm:$0xff]
  %v3275 = vld [vmem:[%s4 + $0x70] sm:$0xff]
  %v3276 = vld [vmem:[%s4 + $0x78] sm:$0xff]
  %v3277 = vld [vmem:[%s4 + $0x80] sm:$0xff]
  %v3278 = vld [vmem:[%s4 + $0x88] sm:$0xff]
  %v3279 = vld [vmem:[%s4 + $0x90] sm:$0xff]
  %v3280 = vld [vmem:[%s4 + $0x98] sm:$0xff]
  %v3281 = vld [vmem:[%s4 + $0xa0] sm:$0xff]
  %v3282 = vld [vmem:[%s4 + $0xa8] sm:$0xff]
  %v3283 = vld [vmem:[%s4 + $0xb0] sm:$0xff]
  %v3284 = vld [vmem:[%s4 + $0xb8] sm:$0xff]
  %v3285 = vld [vmem:[%s4 + $0xc0] sm:$0xff]
  %v3286 = vld [vmem:[%s4 + $0xc8] sm:$0xff]
  %v3287 = vld [vmem:[%s4 + $0xd0] sm:$0xff]
  %v3288 = vld [vmem:[%s4 + $0xd8] sm:$0xff]
  %v3289 = vld [vmem:[%s4 + $0xe0] sm:$0xff]
  %v3290 = vld [vmem:[%s4 + $0xe8] sm:$0xff]
  %v3291 = vld [vmem:[%s4 + $0xf0] sm:$0xff]
  %v3292 = vld [vmem:[%s4 + $0xf8] sm:$0xff]
  %v3293 = vld [vmem:[%s4 + $0x100] sm:$0xff]
  %v3294 = vld [vmem:[%s4 + $0x108] sm:$0xff]
  %v3295 = vld [vmem:[%s4 + $0x110] sm:$0xff]
  %v3296 = vld [vmem:[%s4 + $0x118] sm:$0xff]
  %v3297 = vld [vmem:[%s4 + $0x120] sm:$0xff]
  %v3298 = vld [vmem:[%s4 + $0x128] sm:$0xff]
  %v3299 = vld [vmem:[%s4 + $0x130] sm:$0xff]
  %v3300 = vld [vmem:[%s4 + $0x138] sm:$0xff]
  %v3301 = vld [vmem:[%s4 + $0x140] sm:$0xff]
  %v3302 = vld [vmem:[%s4 + $0x148] sm:$0xff]
  %vm3303 = vcmask 326656
  %v3305 = vsel %vm3303, %v2964, 0
  %v3308 = vsel %vm3303, %v2970, 0
  %v3311 = vsel %vm3303, %v2976, 0
  %v3314 = vsel %vm3303, %v2982, 0
  %v3317 = vsel %vm3303, %v2988, 0
  %v3320 = vsel %vm3303, %v2994, 0
  %v3323 = vsel %vm3303, %v3000, 0
  %v3326 = vsel %vm3303, %v3006, 0
  %v3329 = vsel %vm3303, %v3012, 0
  %v3332 = vsel %vm3303, %v3018, 0
  %3334 = vmatprep.subr.mxu0 %v3262
  %3335 = vmatpush1.msra.mxu0 %v3261
  %3336 = vmatprep.subr.mxu0 %v3264
  %3337 = vmatpush1.msra.mxu0 %v3263
  %3338 = vmatprep.subr.mxu0 %v3266
  %3339 = vmatpush1.msra.mxu0 %v3265
  %3340 = vmatprep.subr.mxu0 %v3268
  %3341 = vmatpush1.msra.mxu0 %v3267
  %3342 = vmatprep.subr.mxu0 %v3270
  %3343 = vmatpush1.msra.mxu0 %v3269
  %3344 = vmatprep.subr.mxu0 %v3272
  %3345 = vmatpush1.msra.mxu0 %v3271
  %3346 = vmatprep.subr.mxu0 %v3274
  %3347 = vmatpush1.msra.mxu0 %v3273
  %3348 = vmatprep.subr.mxu0 %v3276
  %3349 = vmatpush1.msra.mxu0 %v3275
  %3350 = vmatprep.subr.mxu0 %v3278
  %3351 = vmatpush1.msra.mxu0 %v3277
  %3352 = vmatprep.subr.mxu0 %v3280
  %3353 = vmatpush1.msra.mxu0 %v3279
  %3354 = vmatprep.subr.mxu0 %v3282
  %3355 = vmatpush1.msra.mxu0 %v3281
  %3356 = vmatprep.subr.mxu0 %v3284
  %3357 = vmatpush1.msra.mxu0 %v3283
  %3358 = vmatprep.subr.mxu0 %v3286
  %3359 = vmatpush1.msra.mxu0 %v3285
  %3360 = vmatprep.subr.mxu0 %v3288
  %3361 = vmatpush1.msra.mxu0 %v3287
  %3362 = vmatprep.subr.mxu0 %v3290
  %3363 = vmatpush1.msra.mxu0 %v3289
  %3364 = vmatprep.subr.mxu0 %v3292
  %3365 = vmatpush1.msra.mxu0 %v3291
  %3366 = vmatprep.subr.mxu0 %v3294
  %3367 = vmatpush1.msra.mxu0 %v3293
  %3368 = vmatprep.subr.mxu0 %v3296
  %3369 = vmatpush1.msra.mxu0 %v3295
  %3370 = vmatprep.subr.mxu0 %v3298
  %3371 = vmatpush1.msra.mxu0 %v3297
  %3372 = vmatprep.subr.mxu0 %v3300
  %3373 = vmatpush1.msra.mxu0 %v3299
  %3374 = vmatprep.subr.mxu0 %v3302
  %3375 = vmatpush1.msra.mxu0 %v3301
  %3376 = vmatprep.subr.mxu0 0.0
  %3377 = vmatpush1.msra.mxu0 0.0
  %3378 = vmatprep.subr.mxu0 0.0
  %3379 = vmatpush1.msra.mxu0 0.0
  %3380 = vmatprep.subr.mxu0 0.0
  %3381 = vmatpush1.msra.mxu0 0.0
  %3382 = vmatprep.subr.mxu0 0.0
  %3383 = vmatpush1.msra.mxu0 0.0
  %3384 = vmatprep.subr.mxu0 0.0
  %3385 = vmatpush1.msra.mxu0 0.0
  %3386 = vmatprep.subr.mxu0 0.0
  %3387 = vmatpush1.msra.mxu0 0.0
  %3388 = vmatprep.subr.mxu0 0.0
  %3389 = vmatpush1.msra.mxu0 0.0
  %3390 = vmatprep.subr.mxu0 0.0
  %3391 = vmatpush1.msra.mxu0 0.0
  %3392 = vmatprep.subr.mxu0 0.0
  %3393 = vmatpush1.msra.mxu0 0.0
  %3394 = vmatprep.subr.mxu0 0.0
  %3395 = vmatpush1.msra.mxu0 0.0
  %3396 = vmatprep.subr.mxu0 0.0
  %3397 = vmatpush1.msra.mxu0 0.0
  %3398 = vmatprep.mubr.f32.mxu0 %v3305
  %3399 = vmatmul.mubr.f32.gmra.mrb[0].mxu0 %v2962
  %v3400 = vpop.f32.mrb[0].mxu0
  %v3401 = vadd.f32 0.0, %v3400
  %v3402 = vpop.f32.mrb[0].mxu0
  %v3403 = vadd.f32 0.0, %v3402
  %3404 = vmatprep.mubr.f32.mxu0 %v3308
  %3405 = vmatmul.mubr.f32.gmra.mrb[0].mxu0 %v2968
  %v3406 = vpop.f32.mrb[0].mxu0
  %v3407 = vadd.f32 0.0, %v3406
  %v3408 = vpop.f32.mrb[0].mxu0
  %v3409 = vadd.f32 0.0, %v3408
  %3410 = vmatprep.mubr.f32.mxu0 %v3311
  %3411 = vmatmul.mubr.f32.gmra.mrb[0].mxu0 %v2974
  %v3412 = vpop.f32.mrb[0].mxu0
  %v3413 = vadd.f32 0.0, %v3412
  %v3414 = vpop.f32.mrb[0].mxu0
  %v3415 = vadd.f32 0.0, %v3414
  %3416 = vmatprep.mubr.f32.mxu0 %v3314
  %3417 = vmatmul.mubr.f32.gmra.mrb[0].mxu0 %v2980
  %v3418 = vpop.f32.mrb[0].mxu0
  %v3419 = vadd.f32 0.0, %v3418
  %v3420 = vpop.f32.mrb[0].mxu0
  %v3421 = vadd.f32 0.0, %v3420
  %3422 = vmatprep.mubr.f32.mxu0 %v3317
  %3423 = vmatmul.mubr.f32.gmra.mrb[0].mxu0 %v2986
  %v3424 = vpop.f32.mrb[0].mxu0
  %v3425 = vadd.f32 0.0, %v3424
  %v3426 = vpop.f32.mrb[0].mxu0
  %v3427 = vadd.f32 0.0, %v3426
  %3428 = vmatprep.mubr.f32.mxu0 %v3320
  %3429 = vmatmul.mubr.f32.gmra.mrb[0].mxu0 %v2992
  %v3430 = vpop.f32.mrb[0].mxu0
  %v3431 = vadd.f32 0.0, %v3430
  %v3432 = vpop.f32.mrb[0].mxu0
  %v3433 = vadd.f32 0.0, %v3432
  %3434 = vmatprep.mubr.f32.mxu0 %v3323
  %3435 = vmatmul.mubr.f32.gmra.mrb[0].mxu0 %v2998
  %v3436 = vpop.f32.mrb[0].mxu0
  %v3437 = vadd.f32 0.0, %v3436
  %v3438 = vpop.f32.mrb[0].mxu0
  %v3439 = vadd.f32 0.0, %v3438
  %3440 = vmatprep.mubr.f32.mxu0 %v3326
  %3441 = vmatmul.mubr.f32.gmra.mrb[0].mxu0 %v3004
  %v3442 = vpop.f32.mrb[0].mxu0
  %v3443 = vadd.f32 0.0, %v3442
  %v3444 = vpop.f32.mrb[0].mxu0
  %v3445 = vadd.f32 0.0, %v3444
  %3446 = vmatprep.mubr.f32.mxu0 %v3329
  %3447 = vmatmul.mubr.f32.gmra.mrb[0].mxu0 %v3010
  %v3448 = vpop.f32.mrb[0].mxu0
  %v3449 = vadd.f32 0.0, %v3448
  %v3450 = vpop.f32.mrb[0].mxu0
  %v3451 = vadd.f32 0.0, %v3450
  %3452 = vmatprep.mubr.f32.mxu0 %v3332
  %3453 = vmatmul.mubr.f32.gmra.mrb[0].mxu0 %v3016
  %v3454 = vpop.f32.mrb[0].mxu0
  %v3455 = vadd.f32 0.0, %v3454
  %v3456 = vpop.f32.mrb[0].mxu0
  %v3457 = vadd.f32 0.0, %v3456
  %3458 = vdwg.mxu0
  %v3460 = vlaneseq
  %v3461 = vshrl.u32 %v3460, 7
  %v3462 = vsub.s32 0, %v3461
  %v3463 = vrot.slane %v3260, %v3462
  %v3464 = vlaneseq
  %v3465 = vshrl.u32 %v3464, 7
  %v3466 = vsub.s32 1, %v3465
  %v3467 = vrot.slane %v3260, %v3466
  %v3470 = vadd.f32 %v3463, %v3401
  %v3471 = vadd.f32 %v3467, %v3403
  %v3472 = vadd.f32 %v3463, %v3407
  %v3473 = vadd.f32 %v3467, %v3409
  %v3474 = vadd.f32 %v3463, %v3413
  %v3475 = vadd.f32 %v3467, %v3415
  %v3476 = vadd.f32 %v3463, %v3419
  %v3477 = vadd.f32 %v3467, %v3421
  %v3478 = vadd.f32 %v3463, %v3425
  %v3479 = vadd.f32 %v3467, %v3427
  %v3480 = vadd.f32 %v3463, %v3431
  %v3481 = vadd.f32 %v3467, %v3433
  %v3482 = vadd.f32 %v3463, %v3437
  %v3483 = vadd.f32 %v3467, %v3439
  %v3484 = vadd.f32 %v3463, %v3443
  %v3485 = vadd.f32 %v3467, %v3445
  %v3486 = vadd.f32 %v3463, %v3449
  %v3487 = vadd.f32 %v3467, %v3451
  %v3488 = vadd.f32 %v3463, %v3455
  %v3489 = vadd.f32 %v3467, %v3457
  %v3490 = vld [vmem:[%s4 + $0x150] sm:$0xff]
  %v3491 = vld [vmem:[%s4 + $0x158] sm:$0xff]
  %v3492 = vld [vmem:[%s4 + $0x160] sm:$0xff]
  %v3493 = vld [vmem:[%s4 + $0x168] sm:$0xff]
  %v3494 = vld [vmem:[%s4 + $0x170] sm:$0xff]
  %v3495 = vld [vmem:[%s4 + $0x178] sm:$0xff]
  %v3496 = vld [vmem:[%s4 + $0x180] sm:$0xff]
  %v3497 = vld [vmem:[%s4 + $0x188] sm:$0xff]
  %v3498 = vld [vmem:[%s4 + $0x190] sm:$0xff]
  %v3499 = vld [vmem:[%s4 + $0x198] sm:$0xff]
  %v3500 = vld [vmem:[%s4 + $0x1a0] sm:$0xff]
  %v3501 = vld [vmem:[%s4 + $0x1a8] sm:$0xff]
  %v3502 = vld [vmem:[%s4 + $0x1b0] sm:$0xff]
  %v3503 = vld [vmem:[%s4 + $0x1b8] sm:$0xff]
  %v3504 = vld [vmem:[%s4 + $0x1c0] sm:$0xff]
  %v3505 = vld [vmem:[%s4 + $0x1c8] sm:$0xff]
  %v3506 = vld [vmem:[%s4 + $0x1d0] sm:$0xff]
  %v3507 = vld [vmem:[%s4 + $0x1d8] sm:$0xff]
  %v3508 = vld [vmem:[%s4 + $0x1e0] sm:$0xff]
  %v3509 = vld [vmem:[%s4 + $0x1e8] sm:$0xff]
  %v3510 = vld [vmem:[%s4 + $0x1f0] sm:$0xff]
  %v3511 = vld [vmem:[%s4 + $0x1f8] sm:$0xff]
  %v3512 = vld [vmem:[%s4 + $0x200] sm:$0xff]
  %v3513 = vld [vmem:[%s4 + $0x208] sm:$0xff]
  %v3514 = vld [vmem:[%s4 + $0x210] sm:$0xff]
  %v3515 = vld [vmem:[%s4 + $0x218] sm:$0xff]
  %v3516 = vld [vmem:[%s4 + $0x220] sm:$0xff]
  %v3517 = vld [vmem:[%s4 + $0x228] sm:$0xff]
  %v3518 = vld [vmem:[%s4 + $0x230] sm:$0xff]
  %v3519 = vld [vmem:[%s4 + $0x238] sm:$0xff]
  %v3520 = vld [vmem:[%s4 + $0x240] sm:$0xff]
  %v3521 = vld [vmem:[%s4 + $0x248] sm:$0xff]
  %v3522 = vld [vmem:[%s4 + $0x250] sm:$0xff]
  %v3523 = vld [vmem:[%s4 + $0x258] sm:$0xff]
  %v3524 = vld [vmem:[%s4 + $0x260] sm:$0xff]
  %v3525 = vld [vmem:[%s4 + $0x268] sm:$0xff]
  %v3526 = vld [vmem:[%s4 + $0x270] sm:$0xff]
  %v3527 = vld [vmem:[%s4 + $0x278] sm:$0xff]
  %v3528 = vld [vmem:[%s4 + $0x280] sm:$0xff]
  %v3529 = vld [vmem:[%s4 + $0x288] sm:$0xff]
  %v3530 = vld [vmem:[%s4 + $0x290] sm:$0xff]
  %v3531 = vld [vmem:[%s4 + $0x298] sm:$0xff]
  %v3533 = vsel %vm3303, %v3024, 0
  %v3536 = vsel %vm3303, %v3030, 0
  %v3539 = vsel %vm3303, %v3036, 0
  %v3542 = vsel %vm3303, %v3042, 0
  %v3545 = vsel %vm3303, %v3048, 0
  %v3548 = vsel %vm3303, %v3054, 0
  %v3551 = vsel %vm3303, %v3060, 0
  %v3554 = vsel %vm3303, %v3066, 0
  %v3557 = vsel %vm3303, %v3072, 0
  %v3560 = vsel %vm3303, %v3078, 0
  %3562 = vmatprep.subr.mxu0 %v3491
  %3563 = vmatpush1.msra.mxu0 %v3490
  %3564 = vmatprep.subr.mxu0 %v3493
  %3565 = vmatpush1.msra.mxu0 %v3492
  %3566 = vmatprep.subr.mxu0 %v3495
  %3567 = vmatpush1.msra.mxu0 %v3494
  %3568 = vmatprep.subr.mxu0 %v3497
  %3569 = vmatpush1.msra.mxu0 %v3496
  %3570 = vmatprep.subr.mxu0 %v3499
  %3571 = vmatpush1.msra.mxu0 %v3498
  %3572 = vmatprep.subr.mxu0 %v3501
  %3573 = vmatpush1.msra.mxu0 %v3500
  %3574 = vmatprep.subr.mxu0 %v3503
  %3575 = vmatpush1.msra.mxu0 %v3502
  %3576 = vmatprep.subr.mxu0 %v3505
  %3577 = vmatpush1.msra.mxu0 %v3504
  %3578 = vmatprep.subr.mxu0 %v3507
  %3579 = vmatpush1.msra.mxu0 %v3506
  %3580 = vmatprep.subr.mxu0 %v3509
  %3581 = vmatpush1.msra.mxu0 %v3508
  %3582 = vmatprep.subr.mxu0 %v3511
  %3583 = vmatpush1.msra.mxu0 %v3510
  %3584 = vmatprep.subr.mxu0 %v3513
  %3585 = vmatpush1.msra.mxu0 %v3512
  %3586 = vmatprep.subr.mxu0 %v3515
  %3587 = vmatpush1.msra.mxu0 %v3514
  %3588 = vmatprep.subr.mxu0 %v3517
  %3589 = vmatpush1.msra.mxu0 %v3516
  %3590 = vmatprep.subr.mxu0 %v3519
  %3591 = vmatpush1.msra.mxu0 %v3518
  %3592 = vmatprep.subr.mxu0 %v3521
  %3593 = vmatpush1.msra.mxu0 %v3520
  %3594 = vmatprep.subr.mxu0 %v3523
  %3595 = vmatpush1.msra.mxu0 %v3522
  %3596 = vmatprep.subr.mxu0 %v3525
  %3597 = vmatpush1.msra.mxu0 %v3524
  %3598 = vmatprep.subr.mxu0 %v3527
  %3599 = vmatpush1.msra.mxu0 %v3526
  %3600 = vmatprep.subr.mxu0 %v3529
  %3601 = vmatpush1.msra.mxu0 %v3528
  %3602 = vmatprep.subr.mxu0 %v3531
  %3603 = vmatpush1.msra.mxu0 %v3530
  %3604 = vmatprep.subr.mxu0 0.0
  %3605 = vmatpush1.msra.mxu0 0.0
  %3606 = vmatprep.subr.mxu0 0.0
  %3607 = vmatpush1.msra.mxu0 0.0
  %3608 = vmatprep.subr.mxu0 0.0
  %3609 = vmatpush1.msra.mxu0 0.0
  %3610 = vmatprep.subr.mxu0 0.0
  %3611 = vmatpush1.msra.mxu0 0.0
  %3612 = vmatprep.subr.mxu0 0.0
  %3613 = vmatpush1.msra.mxu0 0.0
  %3614 = vmatprep.subr.mxu0 0.0
  %3615 = vmatpush1.msra.mxu0 0.0
  %3616 = vmatprep.subr.mxu0 0.0
  %3617 = vmatpush1.msra.mxu0 0.0
  %3618 = vmatprep.subr.mxu0 0.0
  %3619 = vmatpush1.msra.mxu0 0.0
  %3620 = vmatprep.subr.mxu0 0.0
  %3621 = vmatpush1.msra.mxu0 0.0
  %3622 = vmatprep.subr.mxu0 0.0
  %3623 = vmatpush1.msra.mxu0 0.0
  %3624 = vmatprep.subr.mxu0 0.0
  %3625 = vmatpush1.msra.mxu0 0.0
  %3626 = vmatprep.mubr.f32.mxu0 %v3533
  %3627 = vmatmul.mubr.f32.gmra.mrb[0].mxu0 %v3022
  %v3628 = vpop.f32.mrb[0].mxu0
  %v3629 = vadd.f32 0.0, %v3628
  %v3630 = vpop.f32.mrb[0].mxu0
  %v3631 = vadd.f32 0.0, %v3630
  %3632 = vmatprep.mubr.f32.mxu0 %v3536
  %3633 = vmatmul.mubr.f32.gmra.mrb[0].mxu0 %v3028
  %v3634 = vpop.f32.mrb[0].mxu0
  %v3635 = vadd.f32 0.0, %v3634
  %v3636 = vpop.f32.mrb[0].mxu0
  %v3637 = vadd.f32 0.0, %v3636
  %3638 = vmatprep.mubr.f32.mxu0 %v3539
  %3639 = vmatmul.mubr.f32.gmra.mrb[0].mxu0 %v3034
  %v3640 = vpop.f32.mrb[0].mxu0
  %v3641 = vadd.f32 0.0, %v3640
  %v3642 = vpop.f32.mrb[0].mxu0
  %v3643 = vadd.f32 0.0, %v3642
  %3644 = vmatprep.mubr.f32.mxu0 %v3542
  %3645 = vmatmul.mubr.f32.gmra.mrb[0].mxu0 %v3040
  %v3646 = vpop.f32.mrb[0].mxu0
  %v3647 = vadd.f32 0.0, %v3646
  %v3648 = vpop.f32.mrb[0].mxu0
  %v3649 = vadd.f32 0.0, %v3648
  %3650 = vmatprep.mubr.f32.mxu0 %v3545
  %3651 = vmatmul.mubr.f32.gmra.mrb[0].mxu0 %v3046
  %v3652 = vpop.f32.mrb[0].mxu0
  %v3653 = vadd.f32 0.0, %v3652
  %v3654 = vpop.f32.mrb[0].mxu0
  %v3655 = vadd.f32 0.0, %v3654
  %3656 = vmatprep.mubr.f32.mxu0 %v3548
  %3657 = vmatmul.mubr.f32.gmra.mrb[0].mxu0 %v3052
  %v3658 = vpop.f32.mrb[0].mxu0
  %v3659 = vadd.f32 0.0, %v3658
  %v3660 = vpop.f32.mrb[0].mxu0
  %v3661 = vadd.f32 0.0, %v3660
  %3662 = vmatprep.mubr.f32.mxu0 %v3551
  %3663 = vmatmul.mubr.f32.gmra.mrb[0].mxu0 %v3058
  %v3664 = vpop.f32.mrb[0].mxu0
  %v3665 = vadd.f32 0.0, %v3664
  %v3666 = vpop.f32.mrb[0].mxu0
  %v3667 = vadd.f32 0.0, %v3666
  %3668 = vmatprep.mubr.f32.mxu0 %v3554
  %3669 = vmatmul.mubr.f32.gmra.mrb[0].mxu0 %v3064
  %v3670 = vpop.f32.mrb[0].mxu0
  %v3671 = vadd.f32 0.0, %v3670
  %v3672 = vpop.f32.mrb[0].mxu0
  %v3673 = vadd.f32 0.0, %v3672
  %3674 = vmatprep.mubr.f32.mxu0 %v3557
  %3675 = vmatmul.mubr.f32.gmra.mrb[0].mxu0 %v3070
  %v3676 = vpop.f32.mrb[0].mxu0
  %v3677 = vadd.f32 0.0, %v3676
  %v3678 = vpop.f32.mrb[0].mxu0
  %v3679 = vadd.f32 0.0, %v3678
  %3680 = vmatprep.mubr.f32.mxu0 %v3560
  %3681 = vmatmul.mubr.f32.gmra.mrb[0].mxu0 %v3076
  %v3682 = vpop.f32.mrb[0].mxu0
  %v3683 = vadd.f32 0.0, %v3682
  %v3684 = vpop.f32.mrb[0].mxu0
  %v3685 = vadd.f32 0.0, %v3684
  %3686 = vdwg.mxu0
  %v3687 = vadd.f32 %v3470, %v3629
  %v3688 = vadd.f32 %v3471, %v3631
  %v3689 = vadd.f32 %v3472, %v3635
  %v3690 = vadd.f32 %v3473, %v3637
  %v3691 = vadd.f32 %v3474, %v3641
  %v3692 = vadd.f32 %v3475, %v3643
  %v3693 = vadd.f32 %v3476, %v3647
  %v3694 = vadd.f32 %v3477, %v3649
  %v3695 = vadd.f32 %v3478, %v3653
  %v3696 = vadd.f32 %v3479, %v3655
  %v3697 = vadd.f32 %v3480, %v3659
  %v3698 = vadd.f32 %v3481, %v3661
  %v3699 = vadd.f32 %v3482, %v3665
  %v3700 = vadd.f32 %v3483, %v3667
  %v3701 = vadd.f32 %v3484, %v3671
  %v3702 = vadd.f32 %v3485, %v3673
  %v3703 = vadd.f32 %v3486, %v3677
  %v3704 = vadd.f32 %v3487, %v3679
  %v3705 = vadd.f32 %v3488, %v3683
  %v3706 = vadd.f32 %v3489, %v3685
  %v3707 = vld [vmem:[%s4 + $0x2a0] sm:$0xff]
  %v3708 = vld [vmem:[%s4 + $0x2a8] sm:$0xff]
  %v3709 = vld [vmem:[%s4 + $0x2b0] sm:$0xff]
  %v3710 = vld [vmem:[%s4 + $0x2b8] sm:$0xff]
  %v3711 = vld [vmem:[%s4 + $0x2c0] sm:$0xff]
  %v3712 = vld [vmem:[%s4 + $0x2c8] sm:$0xff]
  %v3713 = vld [vmem:[%s4 + $0x2d0] sm:$0xff]
  %v3714 = vld [vmem:[%s4 + $0x2d8] sm:$0xff]
  %v3715 = vld [vmem:[%s4 + $0x2e0] sm:$0xff]
  %v3716 = vld [vmem:[%s4 + $0x2e8] sm:$0xff]
  %v3717 = vld [vmem:[%s4 + $0x2f0] sm:$0xff]
  %v3718 = vld [vmem:[%s4 + $0x2f8] sm:$0xff]
  %v3719 = vld [vmem:[%s4 + $0x300] sm:$0xff]
  %v3720 = vld [vmem:[%s4 + $0x308] sm:$0xff]
  %v3721 = vld [vmem:[%s4 + $0x310] sm:$0xff]
  %v3722 = vld [vmem:[%s4 + $0x318] sm:$0xff]
  %v3723 = vld [vmem:[%s4 + $0x320] sm:$0xff]
  %v3724 = vld [vmem:[%s4 + $0x328] sm:$0xff]
  %v3725 = vld [vmem:[%s4 + $0x330] sm:$0xff]
  %v3726 = vld [vmem:[%s4 + $0x338] sm:$0xff]
  %v3727 = vld [vmem:[%s4 + $0x340] sm:$0xff]
  %v3728 = vld [vmem:[%s4 + $0x348] sm:$0xff]
  %v3729 = vld [vmem:[%s4 + $0x350] sm:$0xff]
  %v3730 = vld [vmem:[%s4 + $0x358] sm:$0xff]
  %v3731 = vld [vmem:[%s4 + $0x360] sm:$0xff]
  %v3732 = vld [vmem:[%s4 + $0x368] sm:$0xff]
  %v3733 = vld [vmem:[%s4 + $0x370] sm:$0xff]
  %v3734 = vld [vmem:[%s4 + $0x378] sm:$0xff]
  %v3735 = vld [vmem:[%s4 + $0x380] sm:$0xff]
  %v3736 = vld [vmem:[%s4 + $0x388] sm:$0xff]
  %v3737 = vld [vmem:[%s4 + $0x390] sm:$0xff]
  %v3738 = vld [vmem:[%s4 + $0x398] sm:$0xff]
  %v3739 = vld [vmem:[%s4 + $0x3a0] sm:$0xff]
  %v3740 = vld [vmem:[%s4 + $0x3a8] sm:$0xff]
  %v3741 = vld [vmem:[%s4 + $0x3b0] sm:$0xff]
  %v3742 = vld [vmem:[%s4 + $0x3b8] sm:$0xff]
  %v3743 = vld [vmem:[%s4 + $0x3c0] sm:$0xff]
  %v3744 = vld [vmem:[%s4 + $0x3c8] sm:$0xff]
  %v3745 = vld [vmem:[%s4 + $0x3d0] sm:$0xff]
  %v3746 = vld [vmem:[%s4 + $0x3d8] sm:$0xff]
  %v3747 = vld [vmem:[%s4 + $0x3e0] sm:$0xff]
  %v3748 = vld [vmem:[%s4 + $0x3e8] sm:$0xff]
  %v3750 = vsel %vm3303, %v3084, 0
  %v3753 = vsel %vm3303, %v3090, 0
  %v3756 = vsel %vm3303, %v3096, 0
  %v3759 = vsel %vm3303, %v3102, 0
  %v3762 = vsel %vm3303, %v3108, 0
  %v3765 = vsel %vm3303, %v3114, 0
  %v3768 = vsel %vm3303, %v3120, 0
  %v3771 = vsel %vm3303, %v3126, 0
  %v3774 = vsel %vm3303, %v3132, 0
  %v3777 = vsel %vm3303, %v3138, 0
  %3779 = vmatprep.subr.mxu0 %v3708
  %3780 = vmatpush1.msra.mxu0 %v3707
  %3781 = vmatprep.subr.mxu0 %v3710
  %3782 = vmatpush1.msra.mxu0 %v3709
  %3783 = vmatprep.subr.mxu0 %v3712
  %3784 = vmatpush1.msra.mxu0 %v3711
  %3785 = vmatprep.subr.mxu0 %v3714
  %3786 = vmatpush1.msra.mxu0 %v3713
  %3787 = vmatprep.subr.mxu0 %v3716
  %3788 = vmatpush1.msra.mxu0 %v3715
  %3789 = vmatprep.subr.mxu0 %v3718
  %3790 = vmatpush1.msra.mxu0 %v3717
  %3791 = vmatprep.subr.mxu0 %v3720
  %3792 = vmatpush1.msra.mxu0 %v3719
  %3793 = vmatprep.subr.mxu0 %v3722
  %3794 = vmatpush1.msra.mxu0 %v3721
  %3795 = vmatprep.subr.mxu0 %v3724
  %3796 = vmatpush1.msra.mxu0 %v3723
  %3797 = vmatprep.subr.mxu0 %v3726
  %3798 = vmatpush1.msra.mxu0 %v3725
  %3799 = vmatprep.subr.mxu0 %v3728
  %3800 = vmatpush1.msra.mxu0 %v3727
  %3801 = vmatprep.subr.mxu0 %v3730
  %3802 = vmatpush1.msra.mxu0 %v3729
  %3803 = vmatprep.subr.mxu0 %v3732
  %3804 = vmatpush1.msra.mxu0 %v3731
  %3805 = vmatprep.subr.mxu0 %v3734
  %3806 = vmatpush1.msra.mxu0 %v3733
  %3807 = vmatprep.subr.mxu0 %v3736
  %3808 = vmatpush1.msra.mxu0 %v3735
  %3809 = vmatprep.subr.mxu0 %v3738
  %3810 = vmatpush1.msra.mxu0 %v3737
  %3811 = vmatprep.subr.mxu0 %v3740
  %3812 = vmatpush1.msra.mxu0 %v3739
  %3813 = vmatprep.subr.mxu0 %v3742
  %3814 = vmatpush1.msra.mxu0 %v3741
  %3815 = vmatprep.subr.mxu0 %v3744
  %3816 = vmatpush1.msra.mxu0 %v3743
  %3817 = vmatprep.subr.mxu0 %v3746
  %3818 = vmatpush1.msra.mxu0 %v3745
  %3819 = vmatprep.subr.mxu0 %v3748
  %3820 = vmatpush1.msra.mxu0 %v3747
  %3821 = vmatprep.subr.mxu0 0.0
  %3822 = vmatpush1.msra.mxu0 0.0
  %3823 = vmatprep.subr.mxu0 0.0
  %3824 = vmatpush1.msra.mxu0 0.0
  %3825 = vmatprep.subr.mxu0 0.0
  %3826 = vmatpush1.msra.mxu0 0.0
  %3827 = vmatprep.subr.mxu0 0.0
  %3828 = vmatpush1.msra.mxu0 0.0
  %3829 = vmatprep.subr.mxu0 0.0
  %3830 = vmatpush1.msra.mxu0 0.0
  %3831 = vmatprep.subr.mxu0 0.0
  %3832 = vmatpush1.msra.mxu0 0.0
  %3833 = vmatprep.subr.mxu0 0.0
  %3834 = vmatpush1.msra.mxu0 0.0
  %3835 = vmatprep.subr.mxu0 0.0
  %3836 = vmatpush1.msra.mxu0 0.0
  %3837 = vmatprep.subr.mxu0 0.0
  %3838 = vmatpush1.msra.mxu0 0.0
  %3839 = vmatprep.subr.mxu0 0.0
  %3840 = vmatpush1.msra.mxu0 0.0
  %3841 = vmatprep.subr.mxu0 0.0
  %3842 = vmatpush1.msra.mxu0 0.0
  %3843 = vmatprep.mubr.f32.mxu0 %v3750
  %3844 = vmatmul.mubr.f32.gmra.mrb[0].mxu0 %v3082
  %v3845 = vpop.f32.mrb[0].mxu0
  %v3846 = vadd.f32 0.0, %v3845
  %v3847 = vpop.f32.mrb[0].mxu0
  %v3848 = vadd.f32 0.0, %v3847
  %3849 = vmatprep.mubr.f32.mxu0 %v3753
  %3850 = vmatmul.mubr.f32.gmra.mrb[0].mxu0 %v3088
  %v3851 = vpop.f32.mrb[0].mxu0
  %v3852 = vadd.f32 0.0, %v3851
  %v3853 = vpop.f32.mrb[0].mxu0
  %v3854 = vadd.f32 0.0, %v3853
  %3855 = vmatprep.mubr.f32.mxu0 %v3756
  %3856 = vmatmul.mubr.f32.gmra.mrb[0].mxu0 %v3094
  %v3857 = vpop.f32.mrb[0].mxu0
  %v3858 = vadd.f32 0.0, %v3857
  %v3859 = vpop.f32.mrb[0].mxu0
  %v3860 = vadd.f32 0.0, %v3859
  %3861 = vmatprep.mubr.f32.mxu0 %v3759
  %3862 = vmatmul.mubr.f32.gmra.mrb[0].mxu0 %v3100
  %v3863 = vpop.f32.mrb[0].mxu0
  %v3864 = vadd.f32 0.0, %v3863
  %v3865 = vpop.f32.mrb[0].mxu0
  %v3866 = vadd.f32 0.0, %v3865
  %3867 = vmatprep.mubr.f32.mxu0 %v3762
  %3868 = vmatmul.mubr.f32.gmra.mrb[0].mxu0 %v3106
  %v3869 = vpop.f32.mrb[0].mxu0
  %v3870 = vadd.f32 0.0, %v3869
  %v3871 = vpop.f32.mrb[0].mxu0
  %v3872 = vadd.f32 0.0, %v3871
  %3873 = vmatprep.mubr.f32.mxu0 %v3765
  %3874 = vmatmul.mubr.f32.gmra.mrb[0].mxu0 %v3112
  %v3875 = vpop.f32.mrb[0].mxu0
  %v3876 = vadd.f32 0.0, %v3875
  %v3877 = vpop.f32.mrb[0].mxu0
  %v3878 = vadd.f32 0.0, %v3877
  %3879 = vmatprep.mubr.f32.mxu0 %v3768
  %3880 = vmatmul.mubr.f32.gmra.mrb[0].mxu0 %v3118
  %v3881 = vpop.f32.mrb[0].mxu0
  %v3882 = vadd.f32 0.0, %v3881
  %v3883 = vpop.f32.mrb[0].mxu0
  %v3884 = vadd.f32 0.0, %v3883
  %3885 = vmatprep.mubr.f32.mxu0 %v3771
  %3886 = vmatmul.mubr.f32.gmra.mrb[0].mxu0 %v3124
  %v3887 = vpop.f32.mrb[0].mxu0
  %v3888 = vadd.f32 0.0, %v3887
  %v3889 = vpop.f32.mrb[0].mxu0
  %v3890 = vadd.f32 0.0, %v3889
  %3891 = vmatprep.mubr.f32.mxu0 %v3774
  %3892 = vmatmul.mubr.f32.gmra.mrb[0].mxu0 %v3130
  %v3893 = vpop.f32.mrb[0].mxu0
  %v3894 = vadd.f32 0.0, %v3893
  %v3895 = vpop.f32.mrb[0].mxu0
  %v3896 = vadd.f32 0.0, %v3895
  %3897 = vmatprep.mubr.f32.mxu0 %v3777
  %3898 = vmatmul.mubr.f32.gmra.mrb[0].mxu0 %v3136
  %v3899 = vpop.f32.mrb[0].mxu0
  %v3900 = vadd.f32 0.0, %v3899
  %v3901 = vpop.f32.mrb[0].mxu0
  %v3902 = vadd.f32 0.0, %v3901
  %3903 = vdwg.mxu0
  %v3904 = vadd.f32 %v3687, %v3846
  %v3905 = vadd.f32 %v3688, %v3848
  %v3906 = vadd.f32 %v3689, %v3852
  %v3907 = vadd.f32 %v3690, %v3854
  %v3908 = vadd.f32 %v3691, %v3858
  %v3909 = vadd.f32 %v3692, %v3860
  %v3910 = vadd.f32 %v3693, %v3864
  %v3911 = vadd.f32 %v3694, %v3866
  %v3912 = vadd.f32 %v3695, %v3870
  %v3913 = vadd.f32 %v3696, %v3872
  %v3914 = vadd.f32 %v3697, %v3876
  %v3915 = vadd.f32 %v3698, %v3878
  %v3916 = vadd.f32 %v3699, %v3882
  %v3917 = vadd.f32 %v3700, %v3884
  %v3918 = vadd.f32 %v3701, %v3888
  %v3919 = vadd.f32 %v3702, %v3890
  %v3920 = vadd.f32 %v3703, %v3894
  %v3921 = vadd.f32 %v3704, %v3896
  %v3922 = vadd.f32 %v3705, %v3900
  %v3923 = vadd.f32 %v3706, %v3902
  %v3924 = vld [vmem:[%s4 + $0x3f0] sm:$0xff]
  %v3925 = vld [vmem:[%s4 + $0x3f8] sm:$0xff]
  %v3926 = vld [vmem:[%s4 + $0x400] sm:$0xff]
  %v3927 = vld [vmem:[%s4 + $0x408] sm:$0xff]
  %v3928 = vld [vmem:[%s4 + $0x410] sm:$0xff]
  %v3929 = vld [vmem:[%s4 + $0x418] sm:$0xff]
  %v3930 = vld [vmem:[%s4 + $0x420] sm:$0xff]
  %v3931 = vld [vmem:[%s4 + $0x428] sm:$0xff]
  %v3932 = vld [vmem:[%s4 + $0x430] sm:$0xff]
  %v3933 = vld [vmem:[%s4 + $0x438] sm:$0xff]
  %v3934 = vld [vmem:[%s4 + $0x440] sm:$0xff]
  %v3935 = vld [vmem:[%s4 + $0x448] sm:$0xff]
  %v3936 = vld [vmem:[%s4 + $0x450] sm:$0xff]
  %v3937 = vld [vmem:[%s4 + $0x458] sm:$0xff]
  %v3938 = vld [vmem:[%s4 + $0x460] sm:$0xff]
  %v3939 = vld [vmem:[%s4 + $0x468] sm:$0xff]
  %v3940 = vld [vmem:[%s4 + $0x470] sm:$0xff]
  %v3941 = vld [vmem:[%s4 + $0x478] sm:$0xff]
  %v3942 = vld [vmem:[%s4 + $0x480] sm:$0xff]
  %v3943 = vld [vmem:[%s4 + $0x488] sm:$0xff]
  %v3944 = vld [vmem:[%s4 + $0x490] sm:$0xff]
  %v3945 = vld [vmem:[%s4 + $0x498] sm:$0xff]
  %v3946 = vld [vmem:[%s4 + $0x4a0] sm:$0xff]
  %v3947 = vld [vmem:[%s4 + $0x4a8] sm:$0xff]
  %v3948 = vld [vmem:[%s4 + $0x4b0] sm:$0xff]
  %v3949 = vld [vmem:[%s4 + $0x4b8] sm:$0xff]
  %v3950 = vld [vmem:[%s4 + $0x4c0] sm:$0xff]
  %v3951 = vld [vmem:[%s4 + $0x4c8] sm:$0xff]
  %v3952 = vld [vmem:[%s4 + $0x4d0] sm:$0xff]
  %v3953 = vld [vmem:[%s4 + $0x4d8] sm:$0xff]
  %v3954 = vld [vmem:[%s4 + $0x4e0] sm:$0xff]
  %v3955 = vld [vmem:[%s4 + $0x4e8] sm:$0xff]
  %v3956 = vld [vmem:[%s4 + $0x4f0] sm:$0xff]
  %v3957 = vld [vmem:[%s4 + $0x4f8] sm:$0xff]
  %v3958 = vld [vmem:[%s4 + $0x500] sm:$0xff]
  %v3959 = vld [vmem:[%s4 + $0x508] sm:$0xff]
  %v3960 = vld [vmem:[%s4 + $0x510] sm:$0xff]
  %v3961 = vld [vmem:[%s4 + $0x518] sm:$0xff]
  %v3962 = vld [vmem:[%s4 + $0x520] sm:$0xff]
  %v3963 = vld [vmem:[%s4 + $0x528] sm:$0xff]
  %v3964 = vld [vmem:[%s4 + $0x530] sm:$0xff]
  %v3965 = vld [vmem:[%s4 + $0x538] sm:$0xff]
  %v3967 = vsel %vm3303, %v3144, 0
  %v3970 = vsel %vm3303, %v3150, 0
  %v3973 = vsel %vm3303, %v3156, 0
  %v3976 = vsel %vm3303, %v3162, 0
  %v3979 = vsel %vm3303, %v3168, 0
  %v3982 = vsel %vm3303, %v3174, 0
  %v3985 = vsel %vm3303, %v3180, 0
  %v3988 = vsel %vm3303, %v3186, 0
  %v3991 = vsel %vm3303, %v3192, 0
  %v3994 = vsel %vm3303, %v3198, 0
  %3996 = vmatprep.subr.mxu0 %v3925
  %3997 = vmatpush1.msra.mxu0 %v3924
  %3998 = vmatprep.subr.mxu0 %v3927
  %3999 = vmatpush1.msra.mxu0 %v3926
  %4000 = vmatprep.subr.mxu0 %v3929
  %4001 = vmatpush1.msra.mxu0 %v3928
  %4002 = vmatprep.subr.mxu0 %v3931
  %4003 = vmatpush1.msra.mxu0 %v3930
  %4004 = vmatprep.subr.mxu0 %v3933
  %4005 = vmatpush1.msra.mxu0 %v3932
  %4006 = vmatprep.subr.mxu0 %v3935
  %4007 = vmatpush1.msra.mxu0 %v3934
  %4008 = vmatprep.subr.mxu0 %v3937
  %4009 = vmatpush1.msra.mxu0 %v3936
  %4010 = vmatprep.subr.mxu0 %v3939
  %4011 = vmatpush1.msra.mxu0 %v3938
  %4012 = vmatprep.subr.mxu0 %v3941
  %4013 = vmatpush1.msra.mxu0 %v3940
  %4014 = vmatprep.subr.mxu0 %v3943
  %4015 = vmatpush1.msra.mxu0 %v3942
  %4016 = vmatprep.subr.mxu0 %v3945
  %4017 = vmatpush1.msra.mxu0 %v3944
  %4018 = vmatprep.subr.mxu0 %v3947
  %4019 = vmatpush1.msra.mxu0 %v3946
  %4020 = vmatprep.subr.mxu0 %v3949
  %4021 = vmatpush1.msra.mxu0 %v3948
  %4022 = vmatprep.subr.mxu0 %v3951
  %4023 = vmatpush1.msra.mxu0 %v3950
  %4024 = vmatprep.subr.mxu0 %v3953
  %4025 = vmatpush1.msra.mxu0 %v3952
  %4026 = vmatprep.subr.mxu0 %v3955
  %4027 = vmatpush1.msra.mxu0 %v3954
  %4028 = vmatprep.subr.mxu0 %v3957
  %4029 = vmatpush1.msra.mxu0 %v3956
  %4030 = vmatprep.subr.mxu0 %v3959
  %4031 = vmatpush1.msra.mxu0 %v3958
  %4032 = vmatprep.subr.mxu0 %v3961
  %4033 = vmatpush1.msra.mxu0 %v3960
  %4034 = vmatprep.subr.mxu0 %v3963
  %4035 = vmatpush1.msra.mxu0 %v3962
  %4036 = vmatprep.subr.mxu0 %v3965
  %4037 = vmatpush1.msra.mxu0 %v3964
  %4038 = vmatprep.subr.mxu0 0.0
  %4039 = vmatpush1.msra.mxu0 0.0
  %4040 = vmatprep.subr.mxu0 0.0
  %4041 = vmatpush1.msra.mxu0 0.0
  %4042 = vmatprep.subr.mxu0 0.0
  %4043 = vmatpush1.msra.mxu0 0.0
  %4044 = vmatprep.subr.mxu0 0.0
  %4045 = vmatpush1.msra.mxu0 0.0
  %4046 = vmatprep.subr.mxu0 0.0
  %4047 = vmatpush1.msra.mxu0 0.0
  %4048 = vmatprep.subr.mxu0 0.0
  %4049 = vmatpush1.msra.mxu0 0.0
  %4050 = vmatprep.subr.mxu0 0.0
  %4051 = vmatpush1.msra.mxu0 0.0
  %4052 = vmatprep.subr.mxu0 0.0
  %4053 = vmatpush1.msra.mxu0 0.0
  %4054 = vmatprep.subr.mxu0 0.0
  %4055 = vmatpush1.msra.mxu0 0.0
  %4056 = vmatprep.subr.mxu0 0.0
  %4057 = vmatpush1.msra.mxu0 0.0
  %4058 = vmatprep.subr.mxu0 0.0
  %4059 = vmatpush1.msra.mxu0 0.0
  %4060 = vmatprep.mubr.f32.mxu0 %v3967
  %4061 = vmatmul.mubr.f32.gmra.mrb[0].mxu0 %v3142
  %v4062 = vpop.f32.mrb[0].mxu0
  %v4063 = vadd.f32 0.0, %v4062
  %v4064 = vpop.f32.mrb[0].mxu0
  %v4065 = vadd.f32 0.0, %v4064
  %4066 = vmatprep.mubr.f32.mxu0 %v3970
  %4067 = vmatmul.mubr.f32.gmra.mrb[0].mxu0 %v3148
  %v4068 = vpop.f32.mrb[0].mxu0
  %v4069 = vadd.f32 0.0, %v4068
  %v4070 = vpop.f32.mrb[0].mxu0
  %v4071 = vadd.f32 0.0, %v4070
  %4072 = vmatprep.mubr.f32.mxu0 %v3973
  %4073 = vmatmul.mubr.f32.gmra.mrb[0].mxu0 %v3154
  %v4074 = vpop.f32.mrb[0].mxu0
  %v4075 = vadd.f32 0.0, %v4074
  %v4076 = vpop.f32.mrb[0].mxu0
  %v4077 = vadd.f32 0.0, %v4076
  %4078 = vmatprep.mubr.f32.mxu0 %v3976
  %4079 = vmatmul.mubr.f32.gmra.mrb[0].mxu0 %v3160
  %v4080 = vpop.f32.mrb[0].mxu0
  %v4081 = vadd.f32 0.0, %v4080
  %v4082 = vpop.f32.mrb[0].mxu0
  %v4083 = vadd.f32 0.0, %v4082
  %4084 = vmatprep.mubr.f32.mxu0 %v3979
  %4085 = vmatmul.mubr.f32.gmra.mrb[0].mxu0 %v3166
  %v4086 = vpop.f32.mrb[0].mxu0
  %v4087 = vadd.f32 0.0, %v4086
  %v4088 = vpop.f32.mrb[0].mxu0
  %v4089 = vadd.f32 0.0, %v4088
  %4090 = vmatprep.mubr.f32.mxu0 %v3982
  %4091 = vmatmul.mubr.f32.gmra.mrb[0].mxu0 %v3172
  %v4092 = vpop.f32.mrb[0].mxu0
  %v4093 = vadd.f32 0.0, %v4092
  %v4094 = vpop.f32.mrb[0].mxu0
  %v4095 = vadd.f32 0.0, %v4094
  %4096 = vmatprep.mubr.f32.mxu0 %v3985
  %4097 = vmatmul.mubr.f32.gmra.mrb[0].mxu0 %v3178
  %v4098 = vpop.f32.mrb[0].mxu0
  %v4099 = vadd.f32 0.0, %v4098
  %v4100 = vpop.f32.mrb[0].mxu0
  %v4101 = vadd.f32 0.0, %v4100
  %4102 = vmatprep.mubr.f32.mxu0 %v3988
  %4103 = vmatmul.mubr.f32.gmra.mrb[0].mxu0 %v3184
  %v4104 = vpop.f32.mrb[0].mxu0
  %v4105 = vadd.f32 0.0, %v4104
  %v4106 = vpop.f32.mrb[0].mxu0
  %v4107 = vadd.f32 0.0, %v4106
  %4108 = vmatprep.mubr.f32.mxu0 %v3991
  %4109 = vmatmul.mubr.f32.gmra.mrb[0].mxu0 %v3190
  %v4110 = vpop.f32.mrb[0].mxu0
  %v4111 = vadd.f32 0.0, %v4110
  %v4112 = vpop.f32.mrb[0].mxu0
  %v4113 = vadd.f32 0.0, %v4112
  %4114 = vmatprep.mubr.f32.mxu0 %v3994
  %4115 = vmatmul.mubr.f32.gmra.mrb[0].mxu0 %v3196
  %v4116 = vpop.f32.mrb[0].mxu0
  %v4117 = vadd.f32 0.0, %v4116
  %v4118 = vpop.f32.mrb[0].mxu0
  %v4119 = vadd.f32 0.0, %v4118
  %4120 = vdwg.mxu0
  %v4121 = vadd.f32 %v3904, %v4063
  %v4122 = vadd.f32 %v3905, %v4065
  %v4123 = vadd.f32 %v3906, %v4069
  %v4124 = vadd.f32 %v3907, %v4071
  %v4125 = vadd.f32 %v3908, %v4075
  %v4126 = vadd.f32 %v3909, %v4077
  %v4127 = vadd.f32 %v3910, %v4081
  %v4128 = vadd.f32 %v3911, %v4083
  %v4129 = vadd.f32 %v3912, %v4087
  %v4130 = vadd.f32 %v3913, %v4089
  %v4131 = vadd.f32 %v3914, %v4093
  %v4132 = vadd.f32 %v3915, %v4095
  %v4133 = vadd.f32 %v3916, %v4099
  %v4134 = vadd.f32 %v3917, %v4101
  %v4135 = vadd.f32 %v3918, %v4105
  %v4136 = vadd.f32 %v3919, %v4107
  %v4137 = vadd.f32 %v3920, %v4111
  %v4138 = vadd.f32 %v3921, %v4113
  %v4139 = vadd.f32 %v3922, %v4117
  %v4140 = vadd.f32 %v3923, %v4119
  %v4141 = vld [vmem:[%s4 + $0x540] sm:$0xff]
  %v4142 = vld [vmem:[%s4 + $0x548] sm:$0xff]
  %v4143 = vld [vmem:[%s4 + $0x550] sm:$0xff]
  %v4144 = vld [vmem:[%s4 + $0x558] sm:$0xff]
  %v4145 = vld [vmem:[%s4 + $0x560] sm:$0xff]
  %v4146 = vld [vmem:[%s4 + $0x568] sm:$0xff]
  %v4147 = vld [vmem:[%s4 + $0x570] sm:$0xff]
  %v4148 = vld [vmem:[%s4 + $0x578] sm:$0xff]
  %v4149 = vld [vmem:[%s4 + $0x580] sm:$0xff]
  %v4150 = vld [vmem:[%s4 + $0x588] sm:$0xff]
  %v4151 = vld [vmem:[%s4 + $0x590] sm:$0xff]
  %v4152 = vld [vmem:[%s4 + $0x598] sm:$0xff]
  %v4153 = vld [vmem:[%s4 + $0x5a0] sm:$0xff]
  %v4154 = vld [vmem:[%s4 + $0x5a8] sm:$0xff]
  %v4155 = vld [vmem:[%s4 + $0x5b0] sm:$0xff]
  %v4156 = vld [vmem:[%s4 + $0x5b8] sm:$0xff]
  %v4157 = vld [vmem:[%s4 + $0x5c0] sm:$0xff]
  %v4158 = vld [vmem:[%s4 + $0x5c8] sm:$0xff]
  %v4159 = vld [vmem:[%s4 + $0x5d0] sm:$0xff]
  %v4160 = vld [vmem:[%s4 + $0x5d8] sm:$0xff]
  %v4161 = vld [vmem:[%s4 + $0x5e0] sm:$0xff]
  %v4162 = vld [vmem:[%s4 + $0x5e8] sm:$0xff]
  %v4163 = vld [vmem:[%s4 + $0x5f0] sm:$0xff]
  %v4164 = vld [vmem:[%s4 + $0x5f8] sm:$0xff]
  %v4165 = vld [vmem:[%s4 + $0x600] sm:$0xff]
  %v4166 = vld [vmem:[%s4 + $0x608] sm:$0xff]
  %v4167 = vld [vmem:[%s4 + $0x610] sm:$0xff]
  %v4168 = vld [vmem:[%s4 + $0x618] sm:$0xff]
  %v4169 = vld [vmem:[%s4 + $0x620] sm:$0xff]
  %v4170 = vld [vmem:[%s4 + $0x628] sm:$0xff]
  %v4171 = vld [vmem:[%s4 + $0x630] sm:$0xff]
  %v4172 = vld [vmem:[%s4 + $0x638] sm:$0xff]
  %v4173 = vld [vmem:[%s4 + $0x640] sm:$0xff]
  %v4174 = vld [vmem:[%s4 + $0x648] sm:$0xff]
  %v4175 = vld [vmem:[%s4 + $0x650] sm:$0xff]
  %v4176 = vld [vmem:[%s4 + $0x658] sm:$0xff]
  %v4177 = vld [vmem:[%s4 + $0x660] sm:$0xff]
  %v4178 = vld [vmem:[%s4 + $0x668] sm:$0xff]
  %v4179 = vld [vmem:[%s4 + $0x670] sm:$0xff]
  %v4180 = vld [vmem:[%s4 + $0x678] sm:$0xff]
  %v4181 = vld [vmem:[%s4 + $0x680] sm:$0xff]
  %v4182 = vld [vmem:[%s4 + $0x688] sm:$0xff]
  %v4184 = vsel %vm3303, %v3204, 0
  %v4187 = vsel %vm3303, %v3210, 0
  %v4190 = vsel %vm3303, %v3216, 0
  %v4193 = vsel %vm3303, %v3222, 0
  %v4196 = vsel %vm3303, %v3228, 0
  %v4199 = vsel %vm3303, %v3234, 0
  %v4202 = vsel %vm3303, %v3240, 0
  %v4205 = vsel %vm3303, %v3246, 0
  %v4208 = vsel %vm3303, %v3252, 0
  %v4211 = vsel %vm3303, %v3258, 0
  %4213 = vmatprep.subr.mxu0 %v4142
  %4214 = vmatpush1.msra.mxu0 %v4141
  %4215 = vmatprep.subr.mxu0 %v4144
  %4216 = vmatpush1.msra.mxu0 %v4143
  %4217 = vmatprep.subr.mxu0 %v4146
  %4218 = vmatpush1.msra.mxu0 %v4145
  %4219 = vmatprep.subr.mxu0 %v4148
  %4220 = vmatpush1.msra.mxu0 %v4147
  %4221 = vmatprep.subr.mxu0 %v4150
  %4222 = vmatpush1.msra.mxu0 %v4149
  %4223 = vmatprep.subr.mxu0 %v4152
  %4224 = vmatpush1.msra.mxu0 %v4151
  %4225 = vmatprep.subr.mxu0 %v4154
  %4226 = vmatpush1.msra.mxu0 %v4153
  %4227 = vmatprep.subr.mxu0 %v4156
  %4228 = vmatpush1.msra.mxu0 %v4155
  %4229 = vmatprep.subr.mxu0 %v4158
  %4230 = vmatpush1.msra.mxu0 %v4157
  %4231 = vmatprep.subr.mxu0 %v4160
  %4232 = vmatpush1.msra.mxu0 %v4159
  %4233 = vmatprep.subr.mxu0 %v4162
  %4234 = vmatpush1.msra.mxu0 %v4161
  %4235 = vmatprep.subr.mxu0 %v4164
  %4236 = vmatpush1.msra.mxu0 %v4163
  %4237 = vmatprep.subr.mxu0 %v4166
  %4238 = vmatpush1.msra.mxu0 %v4165
  %4239 = vmatprep.subr.mxu0 %v4168
  %4240 = vmatpush1.msra.mxu0 %v4167
  %4241 = vmatprep.subr.mxu0 %v4170
  %4242 = vmatpush1.msra.mxu0 %v4169
  %4243 = vmatprep.subr.mxu0 %v4172
  %4244 = vmatpush1.msra.mxu0 %v4171
  %4245 = vmatprep.subr.mxu0 %v4174
  %4246 = vmatpush1.msra.mxu0 %v4173
  %4247 = vmatprep.subr.mxu0 %v4176
  %4248 = vmatpush1.msra.mxu0 %v4175
  %4249 = vmatprep.subr.mxu0 %v4178
  %4250 = vmatpush1.msra.mxu0 %v4177
  %4251 = vmatprep.subr.mxu0 %v4180
  %4252 = vmatpush1.msra.mxu0 %v4179
  %4253 = vmatprep.subr.mxu0 %v4182
  %4254 = vmatpush1.msra.mxu0 %v4181
  %4255 = vmatprep.subr.mxu0 0.0
  %4256 = vmatpush1.msra.mxu0 0.0
  %4257 = vmatprep.subr.mxu0 0.0
  %4258 = vmatpush1.msra.mxu0 0.0
  %4259 = vmatprep.subr.mxu0 0.0
  %4260 = vmatpush1.msra.mxu0 0.0
  %4261 = vmatprep.subr.mxu0 0.0
  %4262 = vmatpush1.msra.mxu0 0.0
  %4263 = vmatprep.subr.mxu0 0.0
  %4264 = vmatpush1.msra.mxu0 0.0
  %4265 = vmatprep.subr.mxu0 0.0
  %4266 = vmatpush1.msra.mxu0 0.0
  %4267 = vmatprep.subr.mxu0 0.0
  %4268 = vmatpush1.msra.mxu0 0.0
  %4269 = vmatprep.subr.mxu0 0.0
  %4270 = vmatpush1.msra.mxu0 0.0
  %4271 = vmatprep.subr.mxu0 0.0
  %4272 = vmatpush1.msra.mxu0 0.0
  %4273 = vmatprep.subr.mxu0 0.0
  %4274 = vmatpush1.msra.mxu0 0.0
  %4275 = vmatprep.subr.mxu0 0.0
  %4276 = vmatpush1.msra.mxu0 0.0
  %4277 = vmatprep.mubr.f32.mxu0 %v4184
  %4278 = vmatmul.mubr.f32.gmra.mrb[0].mxu0 %v3202
  %v4279 = vpop.f32.mrb[0].mxu0
  %v4280 = vadd.f32 0.0, %v4279
  %v4281 = vpop.f32.mrb[0].mxu0
  %v4282 = vadd.f32 0.0, %v4281
  %4283 = vmatprep.mubr.f32.mxu0 %v4187
  %4284 = vmatmul.mubr.f32.gmra.mrb[0].mxu0 %v3208
  %v4285 = vpop.f32.mrb[0].mxu0
  %v4286 = vadd.f32 0.0, %v4285
  %v4287 = vpop.f32.mrb[0].mxu0
  %v4288 = vadd.f32 0.0, %v4287
  %4289 = vmatprep.mubr.f32.mxu0 %v4190
  %4290 = vmatmul.mubr.f32.gmra.mrb[0].mxu0 %v3214
  %v4291 = vpop.f32.mrb[0].mxu0
  %v4292 = vadd.f32 0.0, %v4291
  %v4293 = vpop.f32.mrb[0].mxu0
  %v4294 = vadd.f32 0.0, %v4293
  %4295 = vmatprep.mubr.f32.mxu0 %v4193
  %4296 = vmatmul.mubr.f32.gmra.mrb[0].mxu0 %v3220
  %v4297 = vpop.f32.mrb[0].mxu0
  %v4298 = vadd.f32 0.0, %v4297
  %v4299 = vpop.f32.mrb[0].mxu0
  %v4300 = vadd.f32 0.0, %v4299
  %4301 = vmatprep.mubr.f32.mxu0 %v4196
  %4302 = vmatmul.mubr.f32.gmra.mrb[0].mxu0 %v3226
  %v4303 = vpop.f32.mrb[0].mxu0
  %v4304 = vadd.f32 0.0, %v4303
  %v4305 = vpop.f32.mrb[0].mxu0
  %v4306 = vadd.f32 0.0, %v4305
  %4307 = vmatprep.mubr.f32.mxu0 %v4199
  %4308 = vmatmul.mubr.f32.gmra.mrb[0].mxu0 %v3232
  %v4309 = vpop.f32.mrb[0].mxu0
  %v4310 = vadd.f32 0.0, %v4309
  %v4311 = vpop.f32.mrb[0].mxu0
  %v4312 = vadd.f32 0.0, %v4311
  %4313 = vmatprep.mubr.f32.mxu0 %v4202
  %4314 = vmatmul.mubr.f32.gmra.mrb[0].mxu0 %v3238
  %v4315 = vpop.f32.mrb[0].mxu0
  %v4316 = vadd.f32 0.0, %v4315
  %v4317 = vpop.f32.mrb[0].mxu0
  %v4318 = vadd.f32 0.0, %v4317
  %4319 = vmatprep.mubr.f32.mxu0 %v4205
  %4320 = vmatmul.mubr.f32.gmra.mrb[0].mxu0 %v3244
  %v4321 = vpop.f32.mrb[0].mxu0
  %v4322 = vadd.f32 0.0, %v4321
  %v4323 = vpop.f32.mrb[0].mxu0
  %v4324 = vadd.f32 0.0, %v4323
  %4325 = vmatprep.mubr.f32.mxu0 %v4208
  %4326 = vmatmul.mubr.f32.gmra.mrb[0].mxu0 %v3250
  %v4327 = vpop.f32.mrb[0].mxu0
  %v4328 = vadd.f32 0.0, %v4327
  %v4329 = vpop.f32.mrb[0].mxu0
  %v4330 = vadd.f32 0.0, %v4329
  %4331 = vmatprep.mubr.f32.mxu0 %v4211
  %4332 = vmatmul.mubr.f32.gmra.mrb[0].mxu0 %v3256
  %v4333 = vpop.f32.mrb[0].mxu0
  %v4334 = vadd.f32 0.0, %v4333
  %v4335 = vpop.f32.mrb[0].mxu0
  %v4336 = vadd.f32 0.0, %v4335
  %4337 = vdwg.mxu0
  %v4338 = vadd.f32 %v4121, %v4280
  %v4339 = vadd.f32 %v4122, %v4282
  %v4340 = vadd.f32 %v4123, %v4286
  %v4341 = vadd.f32 %v4124, %v4288
  %v4342 = vadd.f32 %v4125, %v4292
  %v4343 = vadd.f32 %v4126, %v4294
  %v4344 = vadd.f32 %v4127, %v4298
  %v4345 = vadd.f32 %v4128, %v4300
  %v4346 = vadd.f32 %v4129, %v4304
  %v4347 = vadd.f32 %v4130, %v4306
  %v4348 = vadd.f32 %v4131, %v4310
  %v4349 = vadd.f32 %v4132, %v4312
  %v4350 = vadd.f32 %v4133, %v4316
  %v4351 = vadd.f32 %v4134, %v4318
  %v4352 = vadd.f32 %v4135, %v4322
  %v4353 = vadd.f32 %v4136, %v4324
  %v4354 = vadd.f32 %v4137, %v4328
  %v4355 = vadd.f32 %v4138, %v4330
  %v4356 = vadd.f32 %v4139, %v4334
  %v4357 = vadd.f32 %v4140, %v4336
  %v4358 = vxor.u32 %v4338, 2147483648
  %v4359 = vxor.u32 %v4339, 2147483648
  %v4360 = vxor.u32 %v4340, 2147483648
  %v4361 = vxor.u32 %v4341, 2147483648
  %v4362 = vxor.u32 %v4342, 2147483648
  %v4363 = vxor.u32 %v4343, 2147483648
  %v4364 = vxor.u32 %v4344, 2147483648
  %v4365 = vxor.u32 %v4345, 2147483648
  %v4366 = vxor.u32 %v4346, 2147483648
  %v4367 = vxor.u32 %v4347, 2147483648
  %v4368 = vxor.u32 %v4348, 2147483648
  %v4369 = vxor.u32 %v4349, 2147483648
  %v4370 = vxor.u32 %v4350, 2147483648
  %v4371 = vxor.u32 %v4351, 2147483648
  %v4372 = vxor.u32 %v4352, 2147483648
  %v4373 = vxor.u32 %v4353, 2147483648
  %v4374 = vxor.u32 %v4354, 2147483648
  %v4375 = vxor.u32 %v4355, 2147483648
  %v4376 = vxor.u32 %v4356, 2147483648
  %v4377 = vxor.u32 %v4357, 2147483648
  %v4378 = vmul.f32 %v4358, 1.442695
  %v4379 = vpow.pop %v4378
  %v4380 = vmul.f32 %v4359, 1.442695
  %v4381 = vpow.pop %v4380
  %v4382 = vmul.f32 %v4360, 1.442695
  %v4383 = vpow.pop %v4382
  %v4384 = vmul.f32 %v4361, 1.442695
  %v4385 = vpow.pop %v4384
  %v4386 = vmul.f32 %v4362, 1.442695
  %v4387 = vpow.pop %v4386
  %v4388 = vmul.f32 %v4363, 1.442695
  %v4389 = vpow.pop %v4388
  %v4390 = vmul.f32 %v4364, 1.442695
  %v4391 = vpow.pop %v4390
  %v4392 = vmul.f32 %v4365, 1.442695
  %v4393 = vpow.pop %v4392
  %v4394 = vmul.f32 %v4366, 1.442695
  %v4395 = vpow.pop %v4394
  %v4396 = vmul.f32 %v4367, 1.442695
  %v4397 = vpow.pop %v4396
  %v4398 = vmul.f32 %v4368, 1.442695
  %v4399 = vpow.pop %v4398
  %v4400 = vmul.f32 %v4369, 1.442695
  %v4401 = vpow.pop %v4400
  %v4402 = vmul.f32 %v4370, 1.442695
  %v4403 = vpow.pop %v4402
  %v4404 = vmul.f32 %v4371, 1.442695
  %v4405 = vpow.pop %v4404
  %v4406 = vmul.f32 %v4372, 1.442695
  %v4407 = vpow.pop %v4406
  %v4408 = vmul.f32 %v4373, 1.442695
  %v4409 = vpow.pop %v4408
  %v4410 = vmul.f32 %v4374, 1.442695
  %v4411 = vpow.pop %v4410
  %v4412 = vmul.f32 %v4375, 1.442695
  %v4413 = vpow.pop %v4412
  %v4414 = vmul.f32 %v4376, 1.442695
  %v4415 = vpow.pop %v4414
  %v4416 = vmul.f32 %v4377, 1.442695
  %v4417 = vpow.pop %v4416
  %v4418 = vadd.f32 %v4379, 1.0
  %v4419 = vadd.f32 %v4381, 1.0
  %v4420 = vadd.f32 %v4383, 1.0
  %v4421 = vadd.f32 %v4385, 1.0
  %v4422 = vadd.f32 %v4387, 1.0
  %v4423 = vadd.f32 %v4389, 1.0
  %v4424 = vadd.f32 %v4391, 1.0
  %v4425 = vadd.f32 %v4393, 1.0
  %v4426 = vadd.f32 %v4395, 1.0
  %v4427 = vadd.f32 %v4397, 1.0
  %v4428 = vadd.f32 %v4399, 1.0
  %v4429 = vadd.f32 %v4401, 1.0
  %v4430 = vadd.f32 %v4403, 1.0
  %v4431 = vadd.f32 %v4405, 1.0
  %v4432 = vadd.f32 %v4407, 1.0
  %v4433 = vadd.f32 %v4409, 1.0
  %v4434 = vadd.f32 %v4411, 1.0
  %v4435 = vadd.f32 %v4413, 1.0
  %v4436 = vadd.f32 %v4415, 1.0
  %v4437 = vadd.f32 %v4417, 1.0
  %v4438 = vrcp.pop %v4418
  %v4439 = vmul.f32 1.0, %v4438
  %v4440 = vrcp.pop %v4419
  %v4441 = vmul.f32 1.0, %v4440
  %v4442 = vrcp.pop %v4420
  %v4443 = vmul.f32 1.0, %v4442
  %v4444 = vrcp.pop %v4421
  %v4445 = vmul.f32 1.0, %v4444
  %v4446 = vrcp.pop %v4422
  %v4447 = vmul.f32 1.0, %v4446
  %v4448 = vrcp.pop %v4423
  %v4449 = vmul.f32 1.0, %v4448
  %v4450 = vrcp.pop %v4424
  %v4451 = vmul.f32 1.0, %v4450
  %v4452 = vrcp.pop %v4425
  %v4453 = vmul.f32 1.0, %v4452
  %v4454 = vrcp.pop %v4426
  %v4455 = vmul.f32 1.0, %v4454
  %v4456 = vrcp.pop %v4427
  %v4457 = vmul.f32 1.0, %v4456
  %v4458 = vrcp.pop %v4428
  %v4459 = vmul.f32 1.0, %v4458
  %v4460 = vrcp.pop %v4429
  %v4461 = vmul.f32 1.0, %v4460
  %v4462 = vrcp.pop %v4430
  %v4463 = vmul.f32 1.0, %v4462
  %v4464 = vrcp.pop %v4431
  %v4465 = vmul.f32 1.0, %v4464
  %v4466 = vrcp.pop %v4432
  %v4467 = vmul.f32 1.0, %v4466
  %v4468 = vrcp.pop %v4433
  %v4469 = vmul.f32 1.0, %v4468
  %v4470 = vrcp.pop %v4434
  %v4471 = vmul.f32 1.0, %v4470
  %v4472 = vrcp.pop %v4435
  %v4473 = vmul.f32 1.0, %v4472
  %v4474 = vrcp.pop %v4436
  %v4475 = vmul.f32 1.0, %v4474
  %v4476 = vrcp.pop %v4437
  %v4477 = vmul.f32 1.0, %v4476
  %v4478 = vmul.f32 %v4338, %v4439
  %v4479 = vmul.f32 %v4339, %v4441
  %v4480 = vmul.f32 %v4340, %v4443
  %v4481 = vmul.f32 %v4341, %v4445
  %v4482 = vmul.f32 %v4342, %v4447
  %v4483 = vmul.f32 %v4343, %v4449
  %v4484 = vmul.f32 %v4344, %v4451
  %v4485 = vmul.f32 %v4345, %v4453
  %v4486 = vmul.f32 %v4346, %v4455
  %v4487 = vmul.f32 %v4347, %v4457
  %v4488 = vmul.f32 %v4348, %v4459
  %v4489 = vmul.f32 %v4349, %v4461
  %v4490 = vmul.f32 %v4350, %v4463
  %v4491 = vmul.f32 %v4351, %v4465
  %v4492 = vmul.f32 %v4352, %v4467
  %v4493 = vmul.f32 %v4353, %v4469
  %v4494 = vmul.f32 %v4354, %v4471
  %v4495 = vmul.f32 %v4355, %v4473
  %v4496 = vmul.f32 %v4356, %v4475
  %v4497 = vmul.f32 %v4357, %v4477
  %v4498 = vld [vmem:[%s6] sm:$0xff]
  %v4499 = vld [vmem:[%s6 + $0x8] sm:$0xff]
  %v4500 = vld [vmem:[%s6 + $0x10] sm:$0xff]
  %v4501 = vld [vmem:[%s6 + $0x18] sm:$0xff]
  %v4502 = vld [vmem:[%s6 + $0x20] sm:$0xff]
  %vm4503 = vcmask 654336
  %v4505 = vsel %vm4503, %v4498, 0
  %v4508 = vsel %vm4503, %v4499, 0
  %v4511 = vsel %vm4503, %v4500, 0
  %v4514 = vsel %vm4503, %v4501, 0
  %v4517 = vsel %vm4503, %v4502, 0
  %4519 = vmatprep.subr.mxu0 %v4479
  %4520 = vmatpush1.msra.mxu0 %v4478
  %4521 = vmatprep.subr.mxu0 %v4481
  %4522 = vmatpush1.msra.mxu0 %v4480
  %4523 = vmatprep.subr.mxu0 %v4483
  %4524 = vmatpush1.msra.mxu0 %v4482
  %4525 = vmatprep.subr.mxu0 %v4485
  %4526 = vmatpush1.msra.mxu0 %v4484
  %4527 = vmatprep.subr.mxu0 %v4487
  %4528 = vmatpush1.msra.mxu0 %v4486
  %4529 = vmatprep.subr.mxu0 %v4489
  %4530 = vmatpush1.msra.mxu0 %v4488
  %4531 = vmatprep.subr.mxu0 %v4491
  %4532 = vmatpush1.msra.mxu0 %v4490
  %4533 = vmatprep.subr.mxu0 %v4493
  %4534 = vmatpush1.msra.mxu0 %v4492
  %4535 = vmatprep.subr.mxu0 %v4495
  %4536 = vmatpush1.msra.mxu0 %v4494
  %4537 = vmatprep.subr.mxu0 %v4497
  %4538 = vmatpush1.msra.mxu0 %v4496
  %4539 = vmatprep.subr.mxu0 0.0
  %4540 = vmatpush1.msra.mxu0 0.0
  %4541 = vmatprep.subr.mxu0 0.0
  %4542 = vmatpush1.msra.mxu0 0.0
  %4543 = vmatprep.subr.mxu0 0.0
  %4544 = vmatpush1.msra.mxu0 0.0
  %4545 = vmatprep.subr.mxu0 0.0
  %4546 = vmatpush1.msra.mxu0 0.0
  %4547 = vmatprep.subr.mxu0 0.0
  %4548 = vmatpush1.msra.mxu0 0.0
  %4549 = vmatprep.subr.mxu0 0.0
  %4550 = vmatpush1.msra.mxu0 0.0
  %4551 = vmatprep.subr.mxu0 0.0
  %4552 = vmatpush1.msra.mxu0 0.0
  %4553 = vmatprep.subr.mxu0 0.0
  %4554 = vmatpush1.msra.mxu0 0.0
  %4555 = vmatprep.subr.mxu0 0.0
  %4556 = vmatpush1.msra.mxu0 0.0
  %4557 = vmatprep.subr.mxu0 0.0
  %4558 = vmatpush1.msra.mxu0 0.0
  %4559 = vmatprep.subr.mxu0 0.0
  %4560 = vmatpush1.msra.mxu0 0.0
  %4561 = vmatprep.subr.mxu0 0.0
  %4562 = vmatpush1.msra.mxu0 0.0
  %4563 = vmatprep.subr.mxu0 0.0
  %4564 = vmatpush1.msra.mxu0 0.0
  %4565 = vmatprep.subr.mxu0 0.0
  %4566 = vmatpush1.msra.mxu0 0.0
  %4567 = vmatprep.subr.mxu0 0.0
  %4568 = vmatpush1.msra.mxu0 0.0
  %4569 = vmatprep.subr.mxu0 0.0
  %4570 = vmatpush1.msra.mxu0 0.0
  %4571 = vmatprep.subr.mxu0 0.0
  %4572 = vmatpush1.msra.mxu0 0.0
  %4573 = vmatprep.subr.mxu0 0.0
  %4574 = vmatpush1.msra.mxu0 0.0
  %4575 = vmatprep.subr.mxu0 0.0
  %4576 = vmatpush1.msra.mxu0 0.0
  %4577 = vmatprep.subr.mxu0 0.0
  %4578 = vmatpush1.msra.mxu0 0.0
  %4579 = vmatprep.subr.mxu0 0.0
  %4580 = vmatpush1.msra.mxu0 0.0
  %4581 = vmatprep.subr.mxu0 0.0
  %4582 = vmatpush1.msra.mxu0 0.0
  %4583 = vmatprep.mubr.f32.mxu0 0.0
  %4584 = vmatmul.mubr.f32.gmra.mrb[0].mxu0 %v4505
  %v4585 = vpop.f32.mrb[0].mxu0
  %v4586 = vadd.f32 0.0, %v4585
  %v4587 = vpop.f32.mrb[0].mxu0
  %v4588 = vadd.f32 0.0, %v4587
  %4589 = vmatprep.mubr.f32.mxu0 0.0
  %4590 = vmatmul.mubr.f32.gmra.mrb[0].mxu0 %v4508
  %v4591 = vpop.f32.mrb[0].mxu0
  %v4592 = vadd.f32 0.0, %v4591
  %v4593 = vpop.f32.mrb[0].mxu0
  %v4594 = vadd.f32 0.0, %v4593
  %4595 = vmatprep.mubr.f32.mxu0 0.0
  %4596 = vmatmul.mubr.f32.gmra.mrb[0].mxu0 %v4511
  %v4597 = vpop.f32.mrb[0].mxu0
  %v4598 = vadd.f32 0.0, %v4597
  %v4599 = vpop.f32.mrb[0].mxu0
  %v4600 = vadd.f32 0.0, %v4599
  %4601 = vmatprep.mubr.f32.mxu0 0.0
  %4602 = vmatmul.mubr.f32.gmra.mrb[0].mxu0 %v4514
  %v4603 = vpop.f32.mrb[0].mxu0
  %v4604 = vadd.f32 0.0, %v4603
  %v4605 = vpop.f32.mrb[0].mxu0
  %v4606 = vadd.f32 0.0, %v4605
  %4607 = vmatprep.mubr.f32.mxu0 0.0
  %4608 = vmatmul.mubr.f32.gmra.mrb[0].mxu0 %v4517
  %v4609 = vpop.f32.mrb[0].mxu0
  %v4610 = vadd.f32 0.0, %v4609
  %v4611 = vpop.f32.mrb[0].mxu0
  %v4612 = vadd.f32 0.0, %v4611
  %4613 = vdwg.mxu0
  %v4614 = vld [vmem:[%s8] sm:$0x1]
  %v4615 = vld [vmem:[%s7] sm:$0xff]
  %v4616 = vld [vmem:[%s7 + $0x8] sm:$0xff]
  %v4617 = vld [vmem:[%s7 + $0x10] sm:$0xff]
  %v4618 = vld [vmem:[%s7 + $0x18] sm:$0xff]
  %v4619 = vld [vmem:[%s7 + $0x20] sm:$0xff]
  %v4620 = vld [vmem:[%s7 + $0x28] sm:$0xff]
  %v4621 = vld [vmem:[%s7 + $0x30] sm:$0xff]
  %v4622 = vld [vmem:[%s7 + $0x38] sm:$0xff]
  %v4623 = vld [vmem:[%s7 + $0x40] sm:$0xff]
  %v4624 = vld [vmem:[%s7 + $0x48] sm:$0xff]
  %v4625 = vld [vmem:[%s7 + $0x50] sm:$0xff]
  %v4626 = vld [vmem:[%s7 + $0x58] sm:$0xff]
  %v4627 = vld [vmem:[%s7 + $0x60] sm:$0xff]
  %v4628 = vld [vmem:[%s7 + $0x68] sm:$0xff]
  %v4629 = vld [vmem:[%s7 + $0x70] sm:$0xff]
  %v4630 = vld [vmem:[%s7 + $0x78] sm:$0xff]
  %v4631 = vld [vmem:[%s7 + $0x80] sm:$0xff]
  %v4632 = vld [vmem:[%s7 + $0x88] sm:$0xff]
  %v4633 = vld [vmem:[%s7 + $0x90] sm:$0xff]
  %v4634 = vld [vmem:[%s7 + $0x98] sm:$0xff]
  %v4636 = vsel %vm81, %v4588, 0
  %4638 = vmatprep.subr.mxu0 0.0
  %4639 = vmatpush1.msra.mxu0 %v4615
  %4640 = vmatprep.subr.mxu0 0.0
  %4641 = vmatpush1.msra.mxu0 %v4616
  %4642 = vmatprep.subr.mxu0 0.0
  %4643 = vmatpush1.msra.mxu0 %v4617
  %4644 = vmatprep.subr.mxu0 0.0
  %4645 = vmatpush1.msra.mxu0 %v4618
  %4646 = vmatprep.subr.mxu0 0.0
  %4647 = vmatpush1.msra.mxu0 %v4619
  %4648 = vmatprep.subr.mxu0 0.0
  %4649 = vmatpush1.msra.mxu0 %v4620
  %4650 = vmatprep.subr.mxu0 0.0
  %4651 = vmatpush1.msra.mxu0 %v4621
  %4652 = vmatprep.subr.mxu0 0.0
  %4653 = vmatpush1.msra.mxu0 %v4622
  %4654 = vmatprep.subr.mxu0 0.0
  %4655 = vmatpush1.msra.mxu0 %v4623
  %4656 = vmatprep.subr.mxu0 0.0
  %4657 = vmatpush1.msra.mxu0 %v4624
  %4658 = vmatprep.subr.mxu0 0.0
  %4659 = vmatpush1.msra.mxu0 %v4625
  %4660 = vmatprep.subr.mxu0 0.0
  %4661 = vmatpush1.msra.mxu0 %v4626
  %4662 = vmatprep.subr.mxu0 0.0
  %4663 = vmatpush1.msra.mxu0 %v4627
  %4664 = vmatprep.subr.mxu0 0.0
  %4665 = vmatpush1.msra.mxu0 %v4628
  %4666 = vmatprep.subr.mxu0 0.0
  %4667 = vmatpush1.msra.mxu0 %v4629
  %4668 = vmatprep.subr.mxu0 0.0
  %4669 = vmatpush1.msra.mxu0 %v4630
  %4670 = vmatprep.subr.mxu0 0.0
  %4671 = vmatpush1.msra.mxu0 %v4631
  %4672 = vmatprep.subr.mxu0 0.0
  %4673 = vmatpush1.msra.mxu0 %v4632
  %4674 = vmatprep.subr.mxu0 0.0
  %4675 = vmatpush1.msra.mxu0 %v4633
  %4676 = vmatprep.subr.mxu0 0.0
  %4677 = vmatpush1.msra.mxu0 %v4634
  %4678 = vmatprep.subr.mxu0 0.0
  %4679 = vmatpush1.msra.mxu0 0.0
  %4680 = vmatprep.subr.mxu0 0.0
  %4681 = vmatpush1.msra.mxu0 0.0
  %4682 = vmatprep.subr.mxu0 0.0
  %4683 = vmatpush1.msra.mxu0 0.0
  %4684 = vmatprep.subr.mxu0 0.0
  %4685 = vmatpush1.msra.mxu0 0.0
  %4686 = vmatprep.subr.mxu0 0.0
  %4687 = vmatpush1.msra.mxu0 0.0
  %4688 = vmatprep.subr.mxu0 0.0
  %4689 = vmatpush1.msra.mxu0 0.0
  %4690 = vmatprep.subr.mxu0 0.0
  %4691 = vmatpush1.msra.mxu0 0.0
  %4692 = vmatprep.subr.mxu0 0.0
  %4693 = vmatpush1.msra.mxu0 0.0
  %4694 = vmatprep.subr.mxu0 0.0
  %4695 = vmatpush1.msra.mxu0 0.0
  %4696 = vmatprep.subr.mxu0 0.0
  %4697 = vmatpush1.msra.mxu0 0.0
  %4698 = vmatprep.subr.mxu0 0.0
  %4699 = vmatpush1.msra.mxu0 0.0
  %4700 = vmatprep.subr.mxu0 0.0
  %4701 = vmatpush1.msra.mxu0 0.0
  %4702 = vmatprep.mubr.f32.mxu0 %v4636
  %4703 = vmatmul.mubr.f32.gmra.mrb[0].mxu0 %v4586
  %v4704 = vpop.f32.mrb[0].mxu0
  %v4705 = vadd.f32 0.0, %v4704
  %v4706 = vpop.f32.mrb[0].mxu0
  %4707 = vdwg.mxu0
  %v4709 = vlaneseq
  %v4710 = vshrl.u32 %v4709, 7
  %v4711 = vsub.s32 0, %v4710
  %v4712 = vrot.slane %v4614, %v4711
  %v4714 = vadd.f32 %v4712, %v4705
  %v4715 = vld [vmem:[%s7 + $0xa0] sm:$0xff]
  %v4716 = vld [vmem:[%s7 + $0xa8] sm:$0xff]
  %v4717 = vld [vmem:[%s7 + $0xb0] sm:$0xff]
  %v4718 = vld [vmem:[%s7 + $0xb8] sm:$0xff]
  %v4719 = vld [vmem:[%s7 + $0xc0] sm:$0xff]
  %v4720 = vld [vmem:[%s7 + $0xc8] sm:$0xff]
  %v4721 = vld [vmem:[%s7 + $0xd0] sm:$0xff]
  %v4722 = vld [vmem:[%s7 + $0xd8] sm:$0xff]
  %v4723 = vld [vmem:[%s7 + $0xe0] sm:$0xff]
  %v4724 = vld [vmem:[%s7 + $0xe8] sm:$0xff]
  %v4725 = vld [vmem:[%s7 + $0xf0] sm:$0xff]
  %v4726 = vld [vmem:[%s7 + $0xf8] sm:$0xff]
  %v4727 = vld [vmem:[%s7 + $0x100] sm:$0xff]
  %v4728 = vld [vmem:[%s7 + $0x108] sm:$0xff]
  %v4729 = vld [vmem:[%s7 + $0x110] sm:$0xff]
  %v4730 = vld [vmem:[%s7 + $0x118] sm:$0xff]
  %v4731 = vld [vmem:[%s7 + $0x120] sm:$0xff]
  %v4732 = vld [vmem:[%s7 + $0x128] sm:$0xff]
  %v4733 = vld [vmem:[%s7 + $0x130] sm:$0xff]
  %v4734 = vld [vmem:[%s7 + $0x138] sm:$0xff]
  %v4736 = vsel %vm81, %v4594, 0
  %4738 = vmatprep.subr.mxu0 0.0
  %4739 = vmatpush1.msra.mxu0 %v4715
  %4740 = vmatprep.subr.mxu0 0.0
  %4741 = vmatpush1.msra.mxu0 %v4716
  %4742 = vmatprep.subr.mxu0 0.0
  %4743 = vmatpush1.msra.mxu0 %v4717
  %4744 = vmatprep.subr.mxu0 0.0
  %4745 = vmatpush1.msra.mxu0 %v4718
  %4746 = vmatprep.subr.mxu0 0.0
  %4747 = vmatpush1.msra.mxu0 %v4719
  %4748 = vmatprep.subr.mxu0 0.0
  %4749 = vmatpush1.msra.mxu0 %v4720
  %4750 = vmatprep.subr.mxu0 0.0
  %4751 = vmatpush1.msra.mxu0 %v4721
  %4752 = vmatprep.subr.mxu0 0.0
  %4753 = vmatpush1.msra.mxu0 %v4722
  %4754 = vmatprep.subr.mxu0 0.0
  %4755 = vmatpush1.msra.mxu0 %v4723
  %4756 = vmatprep.subr.mxu0 0.0
  %4757 = vmatpush1.msra.mxu0 %v4724
  %4758 = vmatprep.subr.mxu0 0.0
  %4759 = vmatpush1.msra.mxu0 %v4725
  %4760 = vmatprep.subr.mxu0 0.0
  %4761 = vmatpush1.msra.mxu0 %v4726
  %4762 = vmatprep.subr.mxu0 0.0
  %4763 = vmatpush1.msra.mxu0 %v4727
  %4764 = vmatprep.subr.mxu0 0.0
  %4765 = vmatpush1.msra.mxu0 %v4728
  %4766 = vmatprep.subr.mxu0 0.0
  %4767 = vmatpush1.msra.mxu0 %v4729
  %4768 = vmatprep.subr.mxu0 0.0
  %4769 = vmatpush1.msra.mxu0 %v4730
  %4770 = vmatprep.subr.mxu0 0.0
  %4771 = vmatpush1.msra.mxu0 %v4731
  %4772 = vmatprep.subr.mxu0 0.0
  %4773 = vmatpush1.msra.mxu0 %v4732
  %4774 = vmatprep.subr.mxu0 0.0
  %4775 = vmatpush1.msra.mxu0 %v4733
  %4776 = vmatprep.subr.mxu0 0.0
  %4777 = vmatpush1.msra.mxu0 %v4734
  %4778 = vmatprep.subr.mxu0 0.0
  %4779 = vmatpush1.msra.mxu0 0.0
  %4780 = vmatprep.subr.mxu0 0.0
  %4781 = vmatpush1.msra.mxu0 0.0
  %4782 = vmatprep.subr.mxu0 0.0
  %4783 = vmatpush1.msra.mxu0 0.0
  %4784 = vmatprep.subr.mxu0 0.0
  %4785 = vmatpush1.msra.mxu0 0.0
  %4786 = vmatprep.subr.mxu0 0.0
  %4787 = vmatpush1.msra.mxu0 0.0
  %4788 = vmatprep.subr.mxu0 0.0
  %4789 = vmatpush1.msra.mxu0 0.0
  %4790 = vmatprep.subr.mxu0 0.0
  %4791 = vmatpush1.msra.mxu0 0.0
  %4792 = vmatprep.subr.mxu0 0.0
  %4793 = vmatpush1.msra.mxu0 0.0
  %4794 = vmatprep.subr.mxu0 0.0
  %4795 = vmatpush1.msra.mxu0 0.0
  %4796 = vmatprep.subr.mxu0 0.0
  %4797 = vmatpush1.msra.mxu0 0.0
  %4798 = vmatprep.subr.mxu0 0.0
  %4799 = vmatpush1.msra.mxu0 0.0
  %4800 = vmatprep.subr.mxu0 0.0
  %4801 = vmatpush1.msra.mxu0 0.0
  %4802 = vmatprep.mubr.f32.mxu0 %v4736
  %4803 = vmatmul.mubr.f32.gmra.mrb[0].mxu0 %v4592
  %v4804 = vpop.f32.mrb[0].mxu0
  %v4805 = vadd.f32 0.0, %v4804
  %v4806 = vpop.f32.mrb[0].mxu0
  %4807 = vdwg.mxu0
  %v4808 = vadd.f32 %v4714, %v4805
  %v4809 = vld [vmem:[%s7 + $0x140] sm:$0xff]
  %v4810 = vld [vmem:[%s7 + $0x148] sm:$0xff]
  %v4811 = vld [vmem:[%s7 + $0x150] sm:$0xff]
  %v4812 = vld [vmem:[%s7 + $0x158] sm:$0xff]
  %v4813 = vld [vmem:[%s7 + $0x160] sm:$0xff]
  %v4814 = vld [vmem:[%s7 + $0x168] sm:$0xff]
  %v4815 = vld [vmem:[%s7 + $0x170] sm:$0xff]
  %v4816 = vld [vmem:[%s7 + $0x178] sm:$0xff]
  %v4817 = vld [vmem:[%s7 + $0x180] sm:$0xff]
  %v4818 = vld [vmem:[%s7 + $0x188] sm:$0xff]
  %v4819 = vld [vmem:[%s7 + $0x190] sm:$0xff]
  %v4820 = vld [vmem:[%s7 + $0x198] sm:$0xff]
  %v4821 = vld [vmem:[%s7 + $0x1a0] sm:$0xff]
  %v4822 = vld [vmem:[%s7 + $0x1a8] sm:$0xff]
  %v4823 = vld [vmem:[%s7 + $0x1b0] sm:$0xff]
  %v4824 = vld [vmem:[%s7 + $0x1b8] sm:$0xff]
  %v4825 = vld [vmem:[%s7 + $0x1c0] sm:$0xff]
  %v4826 = vld [vmem:[%s7 + $0x1c8] sm:$0xff]
  %v4827 = vld [vmem:[%s7 + $0x1d0] sm:$0xff]
  %v4828 = vld [vmem:[%s7 + $0x1d8] sm:$0xff]
  %v4830 = vsel %vm81, %v4600, 0
  %4832 = vmatprep.subr.mxu0 0.0
  %4833 = vmatpush1.msra.mxu0 %v4809
  %4834 = vmatprep.subr.mxu0 0.0
  %4835 = vmatpush1.msra.mxu0 %v4810
  %4836 = vmatprep.subr.mxu0 0.0
  %4837 = vmatpush1.msra.mxu0 %v4811
  %4838 = vmatprep.subr.mxu0 0.0
  %4839 = vmatpush1.msra.mxu0 %v4812
  %4840 = vmatprep.subr.mxu0 0.0
  %4841 = vmatpush1.msra.mxu0 %v4813
  %4842 = vmatprep.subr.mxu0 0.0
  %4843 = vmatpush1.msra.mxu0 %v4814
  %4844 = vmatprep.subr.mxu0 0.0
  %4845 = vmatpush1.msra.mxu0 %v4815
  %4846 = vmatprep.subr.mxu0 0.0
  %4847 = vmatpush1.msra.mxu0 %v4816
  %4848 = vmatprep.subr.mxu0 0.0
  %4849 = vmatpush1.msra.mxu0 %v4817
  %4850 = vmatprep.subr.mxu0 0.0
  %4851 = vmatpush1.msra.mxu0 %v4818
  %4852 = vmatprep.subr.mxu0 0.0
  %4853 = vmatpush1.msra.mxu0 %v4819
  %4854 = vmatprep.subr.mxu0 0.0
  %4855 = vmatpush1.msra.mxu0 %v4820
  %4856 = vmatprep.subr.mxu0 0.0
  %4857 = vmatpush1.msra.mxu0 %v4821
  %4858 = vmatprep.subr.mxu0 0.0
  %4859 = vmatpush1.msra.mxu0 %v4822
  %4860 = vmatprep.subr.mxu0 0.0
  %4861 = vmatpush1.msra.mxu0 %v4823
  %4862 = vmatprep.subr.mxu0 0.0
  %4863 = vmatpush1.msra.mxu0 %v4824
  %4864 = vmatprep.subr.mxu0 0.0
  %4865 = vmatpush1.msra.mxu0 %v4825
  %4866 = vmatprep.subr.mxu0 0.0
  %4867 = vmatpush1.msra.mxu0 %v4826
  %4868 = vmatprep.subr.mxu0 0.0
  %4869 = vmatpush1.msra.mxu0 %v4827
  %4870 = vmatprep.subr.mxu0 0.0
  %4871 = vmatpush1.msra.mxu0 %v4828
  %4872 = vmatprep.subr.mxu0 0.0
  %4873 = vmatpush1.msra.mxu0 0.0
  %4874 = vmatprep.subr.mxu0 0.0
  %4875 = vmatpush1.msra.mxu0 0.0
  %4876 = vmatprep.subr.mxu0 0.0
  %4877 = vmatpush1.msra.mxu0 0.0
  %4878 = vmatprep.subr.mxu0 0.0
  %4879 = vmatpush1.msra.mxu0 0.0
  %4880 = vmatprep.subr.mxu0 0.0
  %4881 = vmatpush1.msra.mxu0 0.0
  %4882 = vmatprep.subr.mxu0 0.0
  %4883 = vmatpush1.msra.mxu0 0.0
  %4884 = vmatprep.subr.mxu0 0.0
  %4885 = vmatpush1.msra.mxu0 0.0
  %4886 = vmatprep.subr.mxu0 0.0
  %4887 = vmatpush1.msra.mxu0 0.0
  %4888 = vmatprep.subr.mxu0 0.0
  %4889 = vmatpush1.msra.mxu0 0.0
  %4890 = vmatprep.subr.mxu0 0.0
  %4891 = vmatpush1.msra.mxu0 0.0
  %4892 = vmatprep.subr.mxu0 0.0
  %4893 = vmatpush1.msra.mxu0 0.0
  %4894 = vmatprep.subr.mxu0 0.0
  %4895 = vmatpush1.msra.mxu0 0.0
  %4896 = vmatprep.mubr.f32.mxu0 %v4830
  %4897 = vmatmul.mubr.f32.gmra.mrb[0].mxu0 %v4598
  %v4898 = vpop.f32.mrb[0].mxu0
  %v4899 = vadd.f32 0.0, %v4898
  %v4900 = vpop.f32.mrb[0].mxu0
  %4901 = vdwg.mxu0
  %v4902 = vadd.f32 %v4808, %v4899
  %v4903 = vld [vmem:[%s7 + $0x1e0] sm:$0xff]
  %v4904 = vld [vmem:[%s7 + $0x1e8] sm:$0xff]
  %v4905 = vld [vmem:[%s7 + $0x1f0] sm:$0xff]
  %v4906 = vld [vmem:[%s7 + $0x1f8] sm:$0xff]
  %v4907 = vld [vmem:[%s7 + $0x200] sm:$0xff]
  %v4908 = vld [vmem:[%s7 + $0x208] sm:$0xff]
  %v4909 = vld [vmem:[%s7 + $0x210] sm:$0xff]
  %v4910 = vld [vmem:[%s7 + $0x218] sm:$0xff]
  %v4911 = vld [vmem:[%s7 + $0x220] sm:$0xff]
  %v4912 = vld [vmem:[%s7 + $0x228] sm:$0xff]
  %v4913 = vld [vmem:[%s7 + $0x230] sm:$0xff]
  %v4914 = vld [vmem:[%s7 + $0x238] sm:$0xff]
  %v4915 = vld [vmem:[%s7 + $0x240] sm:$0xff]
  %v4916 = vld [vmem:[%s7 + $0x248] sm:$0xff]
  %v4917 = vld [vmem:[%s7 + $0x250] sm:$0xff]
  %v4918 = vld [vmem:[%s7 + $0x258] sm:$0xff]
  %v4919 = vld [vmem:[%s7 + $0x260] sm:$0xff]
  %v4920 = vld [vmem:[%s7 + $0x268] sm:$0xff]
  %v4921 = vld [vmem:[%s7 + $0x270] sm:$0xff]
  %v4922 = vld [vmem:[%s7 + $0x278] sm:$0xff]
  %v4924 = vsel %vm81, %v4606, 0
  %4926 = vmatprep.subr.mxu0 0.0
  %4927 = vmatpush1.msra.mxu0 %v4903
  %4928 = vmatprep.subr.mxu0 0.0
  %4929 = vmatpush1.msra.mxu0 %v4904
  %4930 = vmatprep.subr.mxu0 0.0
  %4931 = vmatpush1.msra.mxu0 %v4905
  %4932 = vmatprep.subr.mxu0 0.0
  %4933 = vmatpush1.msra.mxu0 %v4906
  %4934 = vmatprep.subr.mxu0 0.0
  %4935 = vmatpush1.msra.mxu0 %v4907
  %4936 = vmatprep.subr.mxu0 0.0
  %4937 = vmatpush1.msra.mxu0 %v4908
  %4938 = vmatprep.subr.mxu0 0.0
  %4939 = vmatpush1.msra.mxu0 %v4909
  %4940 = vmatprep.subr.mxu0 0.0
  %4941 = vmatpush1.msra.mxu0 %v4910
  %4942 = vmatprep.subr.mxu0 0.0
  %4943 = vmatpush1.msra.mxu0 %v4911
  %4944 = vmatprep.subr.mxu0 0.0
  %4945 = vmatpush1.msra.mxu0 %v4912
  %4946 = vmatprep.subr.mxu0 0.0
  %4947 = vmatpush1.msra.mxu0 %v4913
  %4948 = vmatprep.subr.mxu0 0.0
  %4949 = vmatpush1.msra.mxu0 %v4914
  %4950 = vmatprep.subr.mxu0 0.0
  %4951 = vmatpush1.msra.mxu0 %v4915
  %4952 = vmatprep.subr.mxu0 0.0
  %4953 = vmatpush1.msra.mxu0 %v4916
  %4954 = vmatprep.subr.mxu0 0.0
  %4955 = vmatpush1.msra.mxu0 %v4917
  %4956 = vmatprep.subr.mxu0 0.0
  %4957 = vmatpush1.msra.mxu0 %v4918
  %4958 = vmatprep.subr.mxu0 0.0
  %4959 = vmatpush1.msra.mxu0 %v4919
  %4960 = vmatprep.subr.mxu0 0.0
  %4961 = vmatpush1.msra.mxu0 %v4920
  %4962 = vmatprep.subr.mxu0 0.0
  %4963 = vmatpush1.msra.mxu0 %v4921
  %4964 = vmatprep.subr.mxu0 0.0
  %4965 = vmatpush1.msra.mxu0 %v4922
  %4966 = vmatprep.subr.mxu0 0.0
  %4967 = vmatpush1.msra.mxu0 0.0
  %4968 = vmatprep.subr.mxu0 0.0
  %4969 = vmatpush1.msra.mxu0 0.0
  %4970 = vmatprep.subr.mxu0 0.0
  %4971 = vmatpush1.msra.mxu0 0.0
  %4972 = vmatprep.subr.mxu0 0.0
  %4973 = vmatpush1.msra.mxu0 0.0
  %4974 = vmatprep.subr.mxu0 0.0
  %4975 = vmatpush1.msra.mxu0 0.0
  %4976 = vmatprep.subr.mxu0 0.0
  %4977 = vmatpush1.msra.mxu0 0.0
  %4978 = vmatprep.subr.mxu0 0.0
  %4979 = vmatpush1.msra.mxu0 0.0
  %4980 = vmatprep.subr.mxu0 0.0
  %4981 = vmatpush1.msra.mxu0 0.0
  %4982 = vmatprep.subr.mxu0 0.0
  %4983 = vmatpush1.msra.mxu0 0.0
  %4984 = vmatprep.subr.mxu0 0.0
  %4985 = vmatpush1.msra.mxu0 0.0
  %4986 = vmatprep.subr.mxu0 0.0
  %4987 = vmatpush1.msra.mxu0 0.0
  %4988 = vmatprep.subr.mxu0 0.0
  %4989 = vmatpush1.msra.mxu0 0.0
  %4990 = vmatprep.mubr.f32.mxu0 %v4924
  %4991 = vmatmul.mubr.f32.gmra.mrb[0].mxu0 %v4604
  %v4992 = vpop.f32.mrb[0].mxu0
  %v4993 = vadd.f32 0.0, %v4992
  %v4994 = vpop.f32.mrb[0].mxu0
  %4995 = vdwg.mxu0
  %v4996 = vadd.f32 %v4902, %v4993
  %v4997 = vld [vmem:[%s7 + $0x280] sm:$0xff]
  %v4998 = vld [vmem:[%s7 + $0x288] sm:$0xff]
  %v4999 = vld [vmem:[%s7 + $0x290] sm:$0xff]
  %v5000 = vld [vmem:[%s7 + $0x298] sm:$0xff]
  %v5001 = vld [vmem:[%s7 + $0x2a0] sm:$0xff]
  %v5002 = vld [vmem:[%s7 + $0x2a8] sm:$0xff]
  %v5003 = vld [vmem:[%s7 + $0x2b0] sm:$0xff]
  %v5004 = vld [vmem:[%s7 + $0x2b8] sm:$0xff]
  %v5005 = vld [vmem:[%s7 + $0x2c0] sm:$0xff]
  %v5006 = vld [vmem:[%s7 + $0x2c8] sm:$0xff]
  %v5007 = vld [vmem:[%s7 + $0x2d0] sm:$0xff]
  %v5008 = vld [vmem:[%s7 + $0x2d8] sm:$0xff]
  %v5009 = vld [vmem:[%s7 + $0x2e0] sm:$0xff]
  %v5010 = vld [vmem:[%s7 + $0x2e8] sm:$0xff]
  %v5011 = vld [vmem:[%s7 + $0x2f0] sm:$0xff]
  %v5012 = vld [vmem:[%s7 + $0x2f8] sm:$0xff]
  %v5013 = vld [vmem:[%s7 + $0x300] sm:$0xff]
  %v5014 = vld [vmem:[%s7 + $0x308] sm:$0xff]
  %v5015 = vld [vmem:[%s7 + $0x310] sm:$0xff]
  %v5016 = vld [vmem:[%s7 + $0x318] sm:$0xff]
  %v5018 = vsel %vm81, %v4612, 0
  %5020 = vmatprep.subr.mxu0 0.0
  %5021 = vmatpush1.msra.mxu0 %v4997
  %5022 = vmatprep.subr.mxu0 0.0
  %5023 = vmatpush1.msra.mxu0 %v4998
  %5024 = vmatprep.subr.mxu0 0.0
  %5025 = vmatpush1.msra.mxu0 %v4999
  %5026 = vmatprep.subr.mxu0 0.0
  %5027 = vmatpush1.msra.mxu0 %v5000
  %5028 = vmatprep.subr.mxu0 0.0
  %5029 = vmatpush1.msra.mxu0 %v5001
  %5030 = vmatprep.subr.mxu0 0.0
  %5031 = vmatpush1.msra.mxu0 %v5002
  %5032 = vmatprep.subr.mxu0 0.0
  %5033 = vmatpush1.msra.mxu0 %v5003
  %5034 = vmatprep.subr.mxu0 0.0
  %5035 = vmatpush1.msra.mxu0 %v5004
  %5036 = vmatprep.subr.mxu0 0.0
  %5037 = vmatpush1.msra.mxu0 %v5005
  %5038 = vmatprep.subr.mxu0 0.0
  %5039 = vmatpush1.msra.mxu0 %v5006
  %5040 = vmatprep.subr.mxu0 0.0
  %5041 = vmatpush1.msra.mxu0 %v5007
  %5042 = vmatprep.subr.mxu0 0.0
  %5043 = vmatpush1.msra.mxu0 %v5008
  %5044 = vmatprep.subr.mxu0 0.0
  %5045 = vmatpush1.msra.mxu0 %v5009
  %5046 = vmatprep.subr.mxu0 0.0
  %5047 = vmatpush1.msra.mxu0 %v5010
  %5048 = vmatprep.subr.mxu0 0.0
  %5049 = vmatpush1.msra.mxu0 %v5011
  %5050 = vmatprep.subr.mxu0 0.0
  %5051 = vmatpush1.msra.mxu0 %v5012
  %5052 = vmatprep.subr.mxu0 0.0
  %5053 = vmatpush1.msra.mxu0 %v5013
  %5054 = vmatprep.subr.mxu0 0.0
  %5055 = vmatpush1.msra.mxu0 %v5014
  %5056 = vmatprep.subr.mxu0 0.0
  %5057 = vmatpush1.msra.mxu0 %v5015
  %5058 = vmatprep.subr.mxu0 0.0
  %5059 = vmatpush1.msra.mxu0 %v5016
  %5060 = vmatprep.subr.mxu0 0.0
  %5061 = vmatpush1.msra.mxu0 0.0
  %5062 = vmatprep.subr.mxu0 0.0
  %5063 = vmatpush1.msra.mxu0 0.0
  %5064 = vmatprep.subr.mxu0 0.0
  %5065 = vmatpush1.msra.mxu0 0.0
  %5066 = vmatprep.subr.mxu0 0.0
  %5067 = vmatpush1.msra.mxu0 0.0
  %5068 = vmatprep.subr.mxu0 0.0
  %5069 = vmatpush1.msra.mxu0 0.0
  %5070 = vmatprep.subr.mxu0 0.0
  %5071 = vmatpush1.msra.mxu0 0.0
  %5072 = vmatprep.subr.mxu0 0.0
  %5073 = vmatpush1.msra.mxu0 0.0
  %5074 = vmatprep.subr.mxu0 0.0
  %5075 = vmatpush1.msra.mxu0 0.0
  %5076 = vmatprep.subr.mxu0 0.0
  %5077 = vmatpush1.msra.mxu0 0.0
  %5078 = vmatprep.subr.mxu0 0.0
  %5079 = vmatpush1.msra.mxu0 0.0
  %5080 = vmatprep.subr.mxu0 0.0
  %5081 = vmatpush1.msra.mxu0 0.0
  %5082 = vmatprep.subr.mxu0 0.0
  %5083 = vmatpush1.msra.mxu0 0.0
  %5084 = vmatprep.mubr.f32.mxu0 %v5018
  %5085 = vmatmul.mubr.f32.gmra.mrb[0].mxu0 %v4610
  %v5086 = vpop.f32.mrb[0].mxu0
  %v5087 = vadd.f32 0.0, %v5086
  %v5088 = vpop.f32.mrb[0].mxu0
  %5089 = vdwg.mxu0
  %v5090 = vadd.f32 %v4996, %v5087
  %v5091 = vxor.u32 %v5090, 2147483648
  %v5092 = vmul.f32 %v5091, 1.442695
  %v5093 = vpow.pop %v5092
  %v5094 = vadd.f32 %v5093, 1.0
  %v5095 = vrcp.pop %v5094
  %v5096 = vmul.f32 1.0, %v5095
  %v5097 = vmul.f32 %v5090, %v5096
  %v5098 = vld [vmem:[%s9] sm:$0xff]
  %v5099 = vld [vmem:[%s9 + $0x8] sm:$0xff]
  %v5100 = vld [vmem:[%s9 + $0x10] sm:$0xff]
  %v5101 = vld [vmem:[%s9 + $0x18] sm:$0xff]
  %v5102 = vld [vmem:[%s9 + $0x20] sm:$0xff]
  %v5103 = vld [vmem:[%s9 + $0x28] sm:$0xff]
  %v5104 = vld [vmem:[%s9 + $0x30] sm:$0xff]
  %v5105 = vld [vmem:[%s9 + $0x38] sm:$0xff]
  %v5106 = vld [vmem:[#allocation2] sm:$0x1]
  %v5108 = vlaneseq
  %v5109 = vshrl.u32 %v5108, 7
  %v5110 = vsub.s32 0, %v5109
  %v5111 = vrot.slane %v5106, %v5110
  %vm5113 = vcmask 523264
  %v5115 = vsel %vm5113, %v5097, 0
  %5117 = vmatprep.subr.mxu0 0.0
  %5118 = vmatpush1.msra.mxu0 %v5098
  %5119 = vmatprep.subr.mxu0 0.0
  %5120 = vmatpush1.msra.mxu0 %v5099
  %5121 = vmatprep.subr.mxu0 0.0
  %5122 = vmatpush1.msra.mxu0 %v5100
  %5123 = vmatprep.subr.mxu0 0.0
  %5124 = vmatpush1.msra.mxu0 %v5101
  %5125 = vmatprep.subr.mxu0 0.0
  %5126 = vmatpush1.msra.mxu0 %v5102
  %5127 = vmatprep.subr.mxu0 0.0
  %5128 = vmatpush1.msra.mxu0 %v5103
  %5129 = vmatprep.subr.mxu0 0.0
  %5130 = vmatpush1.msra.mxu0 %v5104
  %5131 = vmatprep.subr.mxu0 0.0
  %5132 = vmatpush1.msra.mxu0 %v5105
  %5133 = vmatprep.subr.mxu0 0.0
  %5134 = vmatpush1.msra.mxu0 0.0
  %5135 = vmatprep.subr.mxu0 0.0
  %5136 = vmatpush1.msra.mxu0 0.0
  %5137 = vmatprep.subr.mxu0 0.0
  %5138 = vmatpush1.msra.mxu0 0.0
  %5139 = vmatprep.subr.mxu0 0.0
  %5140 = vmatpush1.msra.mxu0 0.0
  %5141 = vmatprep.subr.mxu0 0.0
  %5142 = vmatpush1.msra.mxu0 0.0
  %5143 = vmatprep.subr.mxu0 0.0
  %5144 = vmatpush1.msra.mxu0 0.0
  %5145 = vmatprep.subr.mxu0 0.0
  %5146 = vmatpush1.msra.mxu0 0.0
  %5147 = vmatprep.subr.mxu0 0.0
  %5148 = vmatpush1.msra.mxu0 0.0
  %5149 = vmatprep.subr.mxu0 0.0
  %5150 = vmatpush1.msra.mxu0 0.0
  %5151 = vmatprep.subr.mxu0 0.0
  %5152 = vmatpush1.msra.mxu0 0.0
  %5153 = vmatprep.subr.mxu0 0.0
  %5154 = vmatpush1.msra.mxu0 0.0
  %5155 = vmatprep.subr.mxu0 0.0
  %5156 = vmatpush1.msra.mxu0 0.0
  %5157 = vmatprep.subr.mxu0 0.0
  %5158 = vmatpush1.msra.mxu0 0.0
  %5159 = vmatprep.subr.mxu0 0.0
  %5160 = vmatpush1.msra.mxu0 0.0
  %5161 = vmatprep.subr.mxu0 0.0
  %5162 = vmatpush1.msra.mxu0 0.0
  %5163 = vmatprep.subr.mxu0 0.0
  %5164 = vmatpush1.msra.mxu0 0.0
  %5165 = vmatprep.subr.mxu0 0.0
  %5166 = vmatpush1.msra.mxu0 0.0
  %5167 = vmatprep.subr.mxu0 0.0
  %5168 = vmatpush1.msra.mxu0 0.0
  %5169 = vmatprep.subr.mxu0 0.0
  %5170 = vmatpush1.msra.mxu0 0.0
  %5171 = vmatprep.subr.mxu0 0.0
  %5172 = vmatpush1.msra.mxu0 0.0
  %5173 = vmatprep.subr.mxu0 0.0
  %5174 = vmatpush1.msra.mxu0 0.0
  %5175 = vmatprep.subr.mxu0 0.0
  %5176 = vmatpush1.msra.mxu0 0.0
  %5177 = vmatprep.subr.mxu0 0.0
  %5178 = vmatpush1.msra.mxu0 0.0
  %5179 = vmatprep.subr.mxu0 0.0
  %5180 = vmatpush1.msra.mxu0 0.0
  %5181 = vmatprep.mubr.f32.mxu0 0.0
  %5182 = vmatmul.mubr.f32.gmra.mrb[0].mxu0 %v5115
  %v5183 = vpop.f32.mrb[0].mxu0
  %v5184 = vadd.f32 %v5111, %v5183
  %v5185 = vpop.f32.mrb[0].mxu0
  %5186 = vdwg.mxu0
  %v5187 = vmul.f32 %v5184, 0.5
  %v5188 = vmul.f32 %v5187, %v5184
  %vm5189 = vcmask 7168
  %5190 = vst.msk [vmem:[%s11] sm:$0xff] %vm5189, %v5188
  // Predicated region
  $region46: #{lenet_forward.1} parent=0 // pred_check
    _
  $region47: #{lenet_forward.1} parent=0 // pred_check_branch
    %5192 = sbr.rel (0) target = $region49
  $region48: #{lenet_forward.1} parent=0 // pred_region
    _
  $region49: #{lenet_forward.1} parent=0 // pred_fallthru
    _
  // Predicated region
  $region50: #{lenet_forward.1} parent=0 // pred_check
    _
  $region51: #{lenet_forward.1} parent=0 // pred_check_branch
    %5194 = sbr.rel (0) target = $region53
  $region52: #{lenet_forward.1} parent=0 // pred_region
    _
  $region53: #{lenet_forward.1} parent=0 // pred_fallthru
    _

</llo_original>
